<compile_context>
chip_gen: v5e
topology: v5e:2x2
jax: 0.10.0
libtpu: 0.0.40
codegen_flags: <defaults>
</compile_context>

<pallas_src>
import functools

import numpy as np

import jax
import jax.numpy as jnp
from jax import lax
from jax.experimental import pallas as pl
from jax.experimental.pallas import tpu as pltpu

BN_EPS = 1e-3
# Worst-case per-kernel VMEM use at real InceptionC shapes (768 ch, c7=192,
# 17x17 -> Lp=384) is ~14 MB, so this cap never binds; it stays under v7x's
# 64 MiB physical VMEM while giving v5e/v6e headroom over their scoped defaults.
_VMEM_LIMIT = 48 * 1024 * 1024


def _round_up(x, m):
    return ((x + m - 1) // m) * m


# ---------------------------------------------------------------------------
# Trace-time helpers: BN folding, stacked-K weight layout, validity masks.
# ---------------------------------------------------------------------------
def _fold_bn(p):
    scale = p["gamma"] * lax.rsqrt(p["var"] + BN_EPS)
    bias = p["beta"] - p["mean"] * scale
    return scale, bias


def _pw_weight(p):
    """1x1 conv + BN -> BN-scaled (C_out, C_in) weight and (C_out,) bias."""
    scale, bias = _fold_bn(p)
    return p["w"][:, :, 0, 0] * scale[:, None], bias


def _tap_weight(p, axis):
    """1x7 / 7x1 conv + BN -> (C_out, 7*C_in) stacked-K weight and (C_out,) bias.

    Column k*C_in + c multiplies input channel c shifted by (k - 3) along
    `axis`, matching the tap order used when kernels build the stacked operand.
    """
    scale, bias = _fold_bn(p)
    w = p["w"][:, :, 0, :] if axis == "w" else p["w"][:, :, :, 0]  # (Co,Ci,7)
    w = jnp.transpose(w, (0, 2, 1)) * scale[:, None, None]         # (Co,7,Ci)
    return w.reshape(w.shape[0], -1), bias


def _offset_masks(h, w, lp, offsets):
    """(len(offsets), lp) f32 masks: 1 where flattened position l shifted by
    (dh, dw) stays inside the HxW image (and l itself is a real pixel)."""
    l = np.arange(lp)
    hh, ww = l // w, l % w
    valid = l < h * w
    rows = [valid & (hh + dh >= 0) & (hh + dh < h) & (ww + dw >= 0) & (ww + dw < w)
            for dh, dw in offsets]
    return jnp.asarray(np.stack(rows).astype(np.float32))


# ---------------------------------------------------------------------------
# Kernel A: the three 1x1 convs consuming x, fused into a single matmul.
# Output rows are stacked as [branch7x7_1 ; branch7x7dbl_1 ; branch1x1] so the
# two c7-wide heads land in one output array (consumed by kernels B/C) and the
# 192-wide branch1x1 result in the other.
# ---------------------------------------------------------------------------
def _heads_kernel(w_ref, b_ref, x_ref, oh_ref, ob_ref, *, c_heads):
    y = jnp.dot(w_ref[...], x_ref[0], preferred_element_type=jnp.float32)
    y = jnp.maximum(y + b_ref[...], 0.0)
    oh_ref[0] = y[:c_heads].astype(oh_ref.dtype)
    ob_ref[0] = y[c_heads:].astype(ob_ref.dtype)


# ---------------------------------------------------------------------------
# Shared stage: one 7-tap conv along a flattened spatial axis as a single
# stacked-K MXU matmul fed by XLU rolls + validity masks.
# ---------------------------------------------------------------------------
def _conv7_stage(src_ref, xs_ref, w_ref, b_ref, m_ref, unit, lp):
    """src_ref: (C_in, lp) VMEM ref with the input feature map.
    xs_ref : (7*C_in, lp) VMEM scratch for the stacked shifted/masked operand.
    w_ref  : (C_out, 7*C_in) BN-folded weights, b_ref: (C_out, 1) bias.
    m_ref  : (7, lp) per-tap validity masks (implements the conv zero-padding).
    unit   : flattened-index stride of one tap step (1 for 1x7, W for 7x1).
    Returns ReLU(W @ stacked + b) as a (C_out, lp) f32 value."""
    c_in = src_ref.shape[0]
    for k in range(7):
        shift = ((3 - k) * unit) % lp       # rolled[l] == src[(l + (k-3)*unit) % lp]
        x = src_ref[...]
        shifted = pltpu.roll(x, shift=shift, axis=1) if shift else x
        xs_ref[k * c_in:(k + 1) * c_in, :] = shifted * m_ref[k:k + 1, :]
    y = jnp.dot(w_ref[...], xs_ref[...], preferred_element_type=jnp.float32)
    return jnp.maximum(y + b_ref[...], 0.0)


# Kernel B: branch7x7 tail (1x7 -> 7x1), intermediate kept in VMEM.
def _branch7x7_kernel(mw_ref, mh_ref, w2_ref, b2_ref, w3_ref, b3_ref,
                      hin_ref, o_ref, xs_ref, h_ref, *, w_stride, lp):
    h_ref[...] = hin_ref[0]
    h_ref[...] = _conv7_stage(h_ref, xs_ref, w2_ref, b2_ref, mw_ref, 1, lp)
    o_ref[0] = _conv7_stage(h_ref, xs_ref, w3_ref, b3_ref, mh_ref,
                            w_stride, lp).astype(o_ref.dtype)


# Kernel C: branch7x7dbl tail (7x1 -> 1x7 -> 7x1 -> 1x7), intermediates in VMEM.
def _branch_dbl_kernel(mw_ref, mh_ref, w2_ref, b2_ref, w3_ref, b3_ref,
                       w4_ref, b4_ref, w5_ref, b5_ref,
                       hin_ref, o_ref, xs_ref, h_ref, *, w_stride, lp):
    h_ref[...] = hin_ref[0]
    h_ref[...] = _conv7_stage(h_ref, xs_ref, w2_ref, b2_ref, mh_ref, w_stride, lp)
    h_ref[...] = _conv7_stage(h_ref, xs_ref, w3_ref, b3_ref, mw_ref, 1, lp)
    h_ref[...] = _conv7_stage(h_ref, xs_ref, w4_ref, b4_ref, mh_ref, w_stride, lp)
    o_ref[0] = _conv7_stage(h_ref, xs_ref, w5_ref, b5_ref, mw_ref,
                            1, lp).astype(o_ref.dtype)


# Kernel D: 3x3 avg-pool (stride 1, pad 1, count_include_pad) fused with the
# branch_pool 1x1 conv.  1/9 and BN scale are pre-folded into w_ref.
def _pool_conv_kernel(m_ref, w_ref, b_ref, x_ref, o_ref, pool_ref, *, w_stride, lp):
    x = x_ref[0]
    idx = 0
    for dh in (-1, 0, 1):
        for dw in (-1, 0, 1):
            shift = (-(dh * w_stride + dw)) % lp
            shifted = pltpu.roll(x, shift=shift, axis=1) if shift else x
            term = shifted * m_ref[idx:idx + 1, :]
            if idx == 0:
                pool_ref[...] = term
            else:
                pool_ref[...] += term
            idx += 1
    y = jnp.dot(w_ref[...], pool_ref[...], preferred_element_type=jnp.float32)
    o_ref[0] = jnp.maximum(y + b_ref[...], 0.0).astype(o_ref.dtype)


# ---------------------------------------------------------------------------
# InceptionC forward
# ---------------------------------------------------------------------------
@jax.jit
def inception_c_forward(x, params):
    n, c_in, h, w = x.shape
    c7 = params["branch7x7_1"]["w"].shape[0]
    l = h * w
    lp = _round_up(l, 128)               # lane-dense flattened spatial extent
    f32 = jnp.float32

    # Single layout pass over x: flatten (H, W) and zero-pad lanes to Lp.
    xf = jnp.pad(x.reshape(n, c_in, l), ((0, 0), (0, 0), (0, lp - l)))

    # Per-tap validity masks (conv/pool zero-padding in the flattened layout;
    # also zero out the lane-padding region so garbage never propagates).
    mask_w = _offset_masks(h, w, lp, [(0, k - 3) for k in range(7)])
    mask_h = _offset_masks(h, w, lp, [(k - 3, 0) for k in range(7)])
    mask_p = _offset_masks(h, w, lp, [(dh, dw) for dh in (-1, 0, 1)
                                      for dw in (-1, 0, 1)])

    # ---- Kernel A: fused 1x1 heads --------------------------------------
    w_h7, b_h7 = _pw_weight(params["branch7x7_1"])
    w_hd, b_hd = _pw_weight(params["branch7x7dbl_1"])
    w_b1, b_b1 = _pw_weight(params["branch1x1"])
    w_stack = jnp.concatenate([w_h7, w_hd, w_b1], axis=0)      # (2*c7+192, C_in)
    b_stack = jnp.concatenate([b_h7, b_hd, b_b1], axis=0)[:, None]
    m_tot = w_stack.shape[0]
    c_heads = 2 * c7

    # Lane-dense spatial tile: whole image when small, else largest /128 tile.
    if lp <= 1024:
        t = lp
    else:
        t = max(tt for tt in (1024, 512, 256, 128) if lp % tt == 0)

    heads, b1 = pl.pallas_call(
        functools.partial(_heads_kernel, c_heads=c_heads),
        out_shape=(jax.ShapeDtypeStruct((n, c_heads, lp), x.dtype),
                   jax.ShapeDtypeStruct((n, 192, lp), x.dtype)),
        grid=(n, lp // t),
        in_specs=[
            pl.BlockSpec((m_tot, c_in), lambda i, j: (0, 0)),
            pl.BlockSpec((m_tot, 1), lambda i, j: (0, 0)),
            pl.BlockSpec((1, c_in, t), lambda i, j: (i, 0, j)),
        ],
        out_specs=(pl.BlockSpec((1, c_heads, t), lambda i, j: (i, 0, j)),
                   pl.BlockSpec((1, 192, t), lambda i, j: (i, 0, j))),
        compiler_params=pltpu.CompilerParams(
            dimension_semantics=("parallel", "parallel"),
            vmem_limit_bytes=_VMEM_LIMIT),
    )(w_stack, b_stack, xf)

    # ---- Kernel B: branch7x7 tail (1x7 -> 7x1) ---------------------------
    w2, b2 = _tap_weight(params["branch7x7_2"], "w")
    w3, b3 = _tap_weight(params["branch7x7_3"], "h")
    b7 = pl.pallas_call(
        functools.partial(_branch7x7_kernel, w_stride=w, lp=lp),
        out_shape=jax.ShapeDtypeStruct((n, 192, lp), x.dtype),
        grid=(n,),
        in_specs=[
            pl.BlockSpec((7, lp), lambda i: (0, 0)),
            pl.BlockSpec((7, lp), lambda i: (0, 0)),
            pl.BlockSpec((c7, 7 * c7), lambda i: (0, 0)),
            pl.BlockSpec((c7, 1), lambda i: (0, 0)),
            pl.BlockSpec((192, 7 * c7), lambda i: (0, 0)),
            pl.BlockSpec((192, 1), lambda i: (0, 0)),
            pl.BlockSpec((1, c7, lp), lambda i: (i, 0, 0)),
        ],
        out_specs=pl.BlockSpec((1, 192, lp), lambda i: (i, 0, 0)),
        scratch_shapes=[pltpu.VMEM((7 * c7, lp), f32),
                        pltpu.VMEM((c7, lp), f32)],
        compiler_params=pltpu.CompilerParams(
            dimension_semantics=("parallel",),
            vmem_limit_bytes=_VMEM_LIMIT),
    )(mask_w, mask_h, w2, b2[:, None], w3, b3[:, None], heads)

    # ---- Kernel C: branch7x7dbl tail (7x1 -> 1x7 -> 7x1 -> 1x7) ----------
    wd2, bd2 = _tap_weight(params["branch7x7dbl_2"], "h")
    wd3, bd3 = _tap_weight(params["branch7x7dbl_3"], "w")
    wd4, bd4 = _tap_weight(params["branch7x7dbl_4"], "h")
    wd5, bd5 = _tap_weight(params["branch7x7dbl_5"], "w")
    bd = pl.pallas_call(
        functools.partial(_branch_dbl_kernel, w_stride=w, lp=lp),
        out_shape=jax.ShapeDtypeStruct((n, 192, lp), x.dtype),
        grid=(n,),
        in_specs=[
            pl.BlockSpec((7, lp), lambda i: (0, 0)),
            pl.BlockSpec((7, lp), lambda i: (0, 0)),
            pl.BlockSpec((c7, 7 * c7), lambda i: (0, 0)),
            pl.BlockSpec((c7, 1), lambda i: (0, 0)),
            pl.BlockSpec((c7, 7 * c7), lambda i: (0, 0)),
            pl.BlockSpec((c7, 1), lambda i: (0, 0)),
            pl.BlockSpec((c7, 7 * c7), lambda i: (0, 0)),
            pl.BlockSpec((c7, 1), lambda i: (0, 0)),
            pl.BlockSpec((192, 7 * c7), lambda i: (0, 0)),
            pl.BlockSpec((192, 1), lambda i: (0, 0)),
            pl.BlockSpec((1, c7, lp), lambda i: (i, 1, 0)),   # second head block
        ],
        out_specs=pl.BlockSpec((1, 192, lp), lambda i: (i, 0, 0)),
        scratch_shapes=[pltpu.VMEM((7 * c7, lp), f32),
                        pltpu.VMEM((c7, lp), f32)],
        compiler_params=pltpu.CompilerParams(
            dimension_semantics=("parallel",),
            vmem_limit_bytes=_VMEM_LIMIT),
    )(mask_w, mask_h, wd2, bd2[:, None], wd3, bd3[:, None],
      wd4, bd4[:, None], wd5, bd5[:, None], heads)

    # ---- Kernel D: 3x3 avg-pool + branch_pool 1x1 fused ------------------
    scale_p, bias_p = _fold_bn(params["branch_pool"])
    w_pool = params["branch_pool"]["w"][:, :, 0, 0] * (scale_p[:, None] / 9.0)
    bp = pl.pallas_call(
        functools.partial(_pool_conv_kernel, w_stride=w, lp=lp),
        out_shape=jax.ShapeDtypeStruct((n, 192, lp), x.dtype),
        grid=(n,),
        in_specs=[
            pl.BlockSpec((9, lp), lambda i: (0, 0)),
            pl.BlockSpec((192, c_in), lambda i: (0, 0)),
            pl.BlockSpec((192, 1), lambda i: (0, 0)),
            pl.BlockSpec((1, c_in, lp), lambda i: (i, 0, 0)),
        ],
        out_specs=pl.BlockSpec((1, 192, lp), lambda i: (i, 0, 0)),
        scratch_shapes=[pltpu.VMEM((c_in, lp), f32)],
        compiler_params=pltpu.CompilerParams(
            dimension_semantics=("parallel",),
            vmem_limit_bytes=_VMEM_LIMIT),
    )(mask_p, w_pool, bias_p[:, None], xf)

    # Channel concat + single NCHW materialization (pure layout plumbing).
    out = jnp.concatenate([b1, b7, bd, bp], axis=1)
    return out[:, :, :l].reshape(n, 4 * 192, h, w)


# ---------------------------------------------------------------------------
# Parameter init (matches torch module structure) + pure-JAX reference
# ---------------------------------------------------------------------------
def _init_basic_conv(key, c_in, c_out, kh, kw):
    kw_, kg, kb, km, kv = jax.random.split(key, 5)
    fan_in = c_in * kh * kw
    return {
        "w": jax.random.normal(kw_, (c_out, c_in, kh, kw), jnp.float32)
             * (fan_in ** -0.5),
        "gamma": 0.5 + jax.random.uniform(kg, (c_out,), jnp.float32),
        "beta": 0.1 * jax.random.normal(kb, (c_out,), jnp.float32),
        "mean": 0.1 * jax.random.normal(km, (c_out,), jnp.float32),
        "var": 0.5 + jax.random.uniform(kv, (c_out,), jnp.float32),
    }


def init_inception_c(key, in_channels, channels_7x7):
    c7 = channels_7x7
    specs = {
        "branch1x1":      (in_channels, 192, 1, 1),
        "branch7x7_1":    (in_channels, c7, 1, 1),
        "branch7x7_2":    (c7, c7, 1, 7),
        "branch7x7_3":    (c7, 192, 7, 1),
        "branch7x7dbl_1": (in_channels, c7, 1, 1),
        "branch7x7dbl_2": (c7, c7, 7, 1),
        "branch7x7dbl_3": (c7, c7, 1, 7),
        "branch7x7dbl_4": (c7, c7, 7, 1),
        "branch7x7dbl_5": (c7, 192, 1, 7),
        "branch_pool":    (in_channels, 192, 1, 1),
    }
    keys = jax.random.split(key, len(specs))
    return {name: _init_basic_conv(k, *spec)
            for k, (name, spec) in zip(keys, specs.items())}


def _ref_basic_conv(x, p, padding):
    y = lax.conv_general_dilated(
        x, p["w"], window_strides=(1, 1), padding=padding,
        dimension_numbers=("NCHW", "OIHW", "NCHW"),
        precision=lax.Precision.HIGHEST)
    scale = p["gamma"] / jnp.sqrt(p["var"] + BN_EPS)
    bias = p["beta"] - p["mean"] * scale
    y = y * scale[None, :, None, None] + bias[None, :, None, None]
    return jnp.maximum(y, 0.0)


def inception_c_reference(x, params):
    p = params
    b1 = _ref_basic_conv(x, p["branch1x1"], ((0, 0), (0, 0)))
    b7 = _ref_basic_conv(x, p["branch7x7_1"], ((0, 0), (0, 0)))
    b7 = _ref_basic_conv(b7, p["branch7x7_2"], ((0, 0), (3, 3)))
    b7 = _ref_basic_conv(b7, p["branch7x7_3"], ((3, 3), (0, 0)))
    bd = _ref_basic_conv(x, p["branch7x7dbl_1"], ((0, 0), (0, 0)))
    bd = _ref_basic_conv(bd, p["branch7x7dbl_2"], ((3, 3), (0, 0)))
    bd = _ref_basic_conv(bd, p["branch7x7dbl_3"], ((0, 0), (3, 3)))
    bd = _ref_basic_conv(bd, p["branch7x7dbl_4"], ((3, 3), (0, 0)))
    bd = _ref_basic_conv(bd, p["branch7x7dbl_5"], ((0, 0), (3, 3)))
    bp = lax.reduce_window(x, 0.0, lax.add, (1, 1, 3, 3), (1, 1, 1, 1),
                           ((0, 0), (0, 0), (1, 1), (1, 1))) / 9.0
    bp = _ref_basic_conv(bp, p["branch_pool"], ((0, 0), (0, 0)))
    return jnp.concatenate([b1, b7, bd, bp], axis=1)


if __name__ == "__main__":
    key = jax.random.PRNGKey(0)
    kx, kp = jax.random.split(key)

    n, in_channels, c7, h, w = 2, 16, 8, 8, 8
    x = jax.random.normal(kx, (n, in_channels, h, w), jnp.float32)
    params = init_inception_c(kp, in_channels, c7)

    y = inception_c_forward(x, params)
    y = jax.block_until_ready(y)

    ref = inception_c_reference(x, params)
    assert y.shape == (n, 4 * 192, h, w) and y.dtype == x.dtype
    err = float(jnp.max(jnp.abs(y - ref)))
    assert err < 5e-3, f"max abs err {err}"

    print("KERNEL_OK")
</pallas_src>

<mosaic_0001>
module attributes {stable_mosaic.version = 11 : i64} {
  func.func @_pool_conv_kernel(%arg0: i32, %arg1: memref<9x128xf32, #tpu.memory_space<vmem>>, %arg2: memref<192x16xf32, #tpu.memory_space<vmem>>, %arg3: memref<192x1xf32, #tpu.memory_space<vmem>>, %arg4: memref<1x16x128xf32, #tpu.memory_space<vmem>>, %arg5: memref<1x192x128xf32, #tpu.memory_space<vmem>>, %arg6: memref<16x128xf32, #tpu.memory_space<vmem>>) attributes {dimension_semantics = [#tpu.dimension_semantics<parallel>], iteration_bounds = array<i64: 2>, scalar_prefetch = 0 : i64, scratch_operands = 1 : i64, tpu.core_type = #tpu.core_type<tc>, window_params = [{pipeline_mode = #tpu.pipeline_mode<synchronous>, transform_indices = @transform_0, window_bounds = array<i64: 9, 128>}, {pipeline_mode = #tpu.pipeline_mode<synchronous>, transform_indices = @transform_1, window_bounds = array<i64: 192, 16>}, {pipeline_mode = #tpu.pipeline_mode<synchronous>, transform_indices = @transform_2, window_bounds = array<i64: 192, 1>}, {transform_indices = @transform_3, window_bounds = array<i64: 1, 16, 128>}, {transform_indices = @transform_4, window_bounds = array<i64: 1, 192, 128>}]} {
    %c0 = arith.constant 0 : index
    %c0_0 = arith.constant 0 : index
    %c0_1 = arith.constant 0 : index
    %0 = vector.load %arg4[%c0, %c0_0, %c0_1] : memref<1x16x128xf32, #tpu.memory_space<vmem>>, vector<1x16x128xf32>
    %1 = vector.shape_cast %0 : vector<1x16x128xf32> to vector<16x128xf32>
    %c9_i32 = arith.constant 9 : i32
    %2 = tpu.dynamic_rotate %1 by %c9_i32 dim 1 : vector<16x128xf32>, i32 -> vector<16x128xf32>
    %c0_2 = arith.constant 0 : index
    %c0_3 = arith.constant 0 : index
    %3 = vector.load %arg1[%c0_2, %c0_3] : memref<9x128xf32, #tpu.memory_space<vmem>>, vector<1x128xf32>
    %4 = vector.broadcast %3 : vector<1x128xf32> to vector<16x128xf32>
    %5 = arith.mulf %2, %4 : vector<16x128xf32>
    %c0_4 = arith.constant 0 : index
    %c0_5 = arith.constant 0 : index
    %6 = vector.load %arg6[%c0_4, %c0_5] : memref<16x128xf32, #tpu.memory_space<vmem>>, vector<16x128xf32>
    tpu.vector_store %arg6[%c0_4, %c0_5], %5 {strides = array<i32>} : memref<16x128xf32, #tpu.memory_space<vmem>>, vector<16x128xf32>,
    %c8_i32 = arith.constant 8 : i32
    %7 = tpu.dynamic_rotate %1 by %c8_i32 dim 1 : vector<16x128xf32>, i32 -> vector<16x128xf32>
    %c1 = arith.constant 1 : index
    %c0_6 = arith.constant 0 : index
    %8 = vector.load %arg1[%c1, %c0_6] : memref<9x128xf32, #tpu.memory_space<vmem>>, vector<1x128xf32>
    %9 = vector.broadcast %8 : vector<1x128xf32> to vector<16x128xf32>
    %10 = arith.mulf %7, %9 : vector<16x128xf32>
    %c0_7 = arith.constant 0 : index
    %c0_8 = arith.constant 0 : index
    %11 = vector.load %arg6[%c0_7, %c0_8] : memref<16x128xf32, #tpu.memory_space<vmem>>, vector<16x128xf32>
    %12 = arith.addf %11, %10 : vector<16x128xf32>
    %c0_9 = arith.constant 0 : index
    %c0_10 = arith.constant 0 : index
    %13 = vector.load %arg6[%c0_9, %c0_10] : memref<16x128xf32, #tpu.memory_space<vmem>>, vector<16x128xf32>
    tpu.vector_store %arg6[%c0_9, %c0_10], %12 {strides = array<i32>} : memref<16x128xf32, #tpu.memory_space<vmem>>, vector<16x128xf32>,
    %c7_i32 = arith.constant 7 : i32
    %14 = tpu.dynamic_rotate %1 by %c7_i32 dim 1 : vector<16x128xf32>, i32 -> vector<16x128xf32>
    %c2 = arith.constant 2 : index
    %c0_11 = arith.constant 0 : index
    %15 = vector.load %arg1[%c2, %c0_11] : memref<9x128xf32, #tpu.memory_space<vmem>>, vector<1x128xf32>
    %16 = vector.broadcast %15 : vector<1x128xf32> to vector<16x128xf32>
    %17 = arith.mulf %14, %16 : vector<16x128xf32>
    %c0_12 = arith.constant 0 : index
    %c0_13 = arith.constant 0 : index
    %18 = vector.load %arg6[%c0_12, %c0_13] : memref<16x128xf32, #tpu.memory_space<vmem>>, vector<16x128xf32>
    %19 = arith.addf %18, %17 : vector<16x128xf32>
    %c0_14 = arith.constant 0 : index
    %c0_15 = arith.constant 0 : index
    %20 = vector.load %arg6[%c0_14, %c0_15] : memref<16x128xf32, #tpu.memory_space<vmem>>, vector<16x128xf32>
    tpu.vector_store %arg6[%c0_14, %c0_15], %19 {strides = array<i32>} : memref<16x128xf32, #tpu.memory_space<vmem>>, vector<16x128xf32>,
    %c1_i32 = arith.constant 1 : i32
    %21 = tpu.dynamic_rotate %1 by %c1_i32 dim 1 : vector<16x128xf32>, i32 -> vector<16x128xf32>
    %c3 = arith.constant 3 : index
    %c0_16 = arith.constant 0 : index
    %22 = vector.load %arg1[%c3, %c0_16] : memref<9x128xf32, #tpu.memory_space<vmem>>, vector<1x128xf32>
    %23 = vector.broadcast %22 : vector<1x128xf32> to vector<16x128xf32>
    %24 = arith.mulf %21, %23 : vector<16x128xf32>
    %c0_17 = arith.constant 0 : index
    %c0_18 = arith.constant 0 : index
    %25 = vector.load %arg6[%c0_17, %c0_18] : memref<16x128xf32, #tpu.memory_space<vmem>>, vector<16x128xf32>
    %26 = arith.addf %25, %24 : vector<16x128xf32>
    %c0_19 = arith.constant 0 : index
    %c0_20 = arith.constant 0 : index
    %27 = vector.load %arg6[%c0_19, %c0_20] : memref<16x128xf32, #tpu.memory_space<vmem>>, vector<16x128xf32>
    tpu.vector_store %arg6[%c0_19, %c0_20], %26 {strides = array<i32>} : memref<16x128xf32, #tpu.memory_space<vmem>>, vector<16x128xf32>,
    %c4 = arith.constant 4 : index
    %c0_21 = arith.constant 0 : index
    %28 = vector.load %arg1[%c4, %c0_21] : memref<9x128xf32, #tpu.memory_space<vmem>>, vector<1x128xf32>
    %29 = vector.broadcast %28 : vector<1x128xf32> to vector<16x128xf32>
    %30 = arith.mulf %1, %29 : vector<16x128xf32>
    %c0_22 = arith.constant 0 : index
    %c0_23 = arith.constant 0 : index
    %31 = vector.load %arg6[%c0_22, %c0_23] : memref<16x128xf32, #tpu.memory_space<vmem>>, vector<16x128xf32>
    %32 = arith.addf %31, %30 : vector<16x128xf32>
    %c0_24 = arith.constant 0 : index
    %c0_25 = arith.constant 0 : index
    %33 = vector.load %arg6[%c0_24, %c0_25] : memref<16x128xf32, #tpu.memory_space<vmem>>, vector<16x128xf32>
    tpu.vector_store %arg6[%c0_24, %c0_25], %32 {strides = array<i32>} : memref<16x128xf32, #tpu.memory_space<vmem>>, vector<16x128xf32>,
    %c127_i32 = arith.constant 127 : i32
    %34 = tpu.dynamic_rotate %1 by %c127_i32 dim 1 : vector<16x128xf32>, i32 -> vector<16x128xf32>
    %c5 = arith.constant 5 : index
    %c0_26 = arith.constant 0 : index
    %35 = vector.load %arg1[%c5, %c0_26] : memref<9x128xf32, #tpu.memory_space<vmem>>, vector<1x128xf32>
    %36 = vector.broadcast %35 : vector<1x128xf32> to vector<16x128xf32>
    %37 = arith.mulf %34, %36 : vector<16x128xf32>
    %c0_27 = arith.constant 0 : index
    %c0_28 = arith.constant 0 : index
    %38 = vector.load %arg6[%c0_27, %c0_28] : memref<16x128xf32, #tpu.memory_space<vmem>>, vector<16x128xf32>
    %39 = arith.addf %38, %37 : vector<16x128xf32>
    %c0_29 = arith.constant 0 : index
    %c0_30 = arith.constant 0 : index
    %40 = vector.load %arg6[%c0_29, %c0_30] : memref<16x128xf32, #tpu.memory_space<vmem>>, vector<16x128xf32>
    tpu.vector_store %arg6[%c0_29, %c0_30], %39 {strides = array<i32>} : memref<16x128xf32, #tpu.memory_space<vmem>>, vector<16x128xf32>,
    %c121_i32 = arith.constant 121 : i32
    %41 = tpu.dynamic_rotate %1 by %c121_i32 dim 1 : vector<16x128xf32>, i32 -> vector<16x128xf32>
    %c6 = arith.constant 6 : index
    %c0_31 = arith.constant 0 : index
    %42 = vector.load %arg1[%c6, %c0_31] : memref<9x128xf32, #tpu.memory_space<vmem>>, vector<1x128xf32>
    %43 = vector.broadcast %42 : vector<1x128xf32> to vector<16x128xf32>
    %44 = arith.mulf %41, %43 : vector<16x128xf32>
    %c0_32 = arith.constant 0 : index
    %c0_33 = arith.constant 0 : index
    %45 = vector.load %arg6[%c0_32, %c0_33] : memref<16x128xf32, #tpu.memory_space<vmem>>, vector<16x128xf32>
    %46 = arith.addf %45, %44 : vector<16x128xf32>
    %c0_34 = arith.constant 0 : index
    %c0_35 = arith.constant 0 : index
    %47 = vector.load %arg6[%c0_34, %c0_35] : memref<16x128xf32, #tpu.memory_space<vmem>>, vector<16x128xf32>
    tpu.vector_store %arg6[%c0_34, %c0_35], %46 {strides = array<i32>} : memref<16x128xf32, #tpu.memory_space<vmem>>, vector<16x128xf32>,
    %c120_i32 = arith.constant 120 : i32
    %48 = tpu.dynamic_rotate %1 by %c120_i32 dim 1 : vector<16x128xf32>, i32 -> vector<16x128xf32>
    %c7 = arith.constant 7 : index
    %c0_36 = arith.constant 0 : index
    %49 = vector.load %arg1[%c7, %c0_36] : memref<9x128xf32, #tpu.memory_space<vmem>>, vector<1x128xf32>
    %50 = vector.broadcast %49 : vector<1x128xf32> to vector<16x128xf32>
    %51 = arith.mulf %48, %50 : vector<16x128xf32>
    %c0_37 = arith.constant 0 : index
    %c0_38 = arith.constant 0 : index
    %52 = vector.load %arg6[%c0_37, %c0_38] : memref<16x128xf32, #tpu.memory_space<vmem>>, vector<16x128xf32>
    %53 = arith.addf %52, %51 : vector<16x128xf32>
    %c0_39 = arith.constant 0 : index
    %c0_40 = arith.constant 0 : index
    %54 = vector.load %arg6[%c0_39, %c0_40] : memref<16x128xf32, #tpu.memory_space<vmem>>, vector<16x128xf32>
    tpu.vector_store %arg6[%c0_39, %c0_40], %53 {strides = array<i32>} : memref<16x128xf32, #tpu.memory_space<vmem>>, vector<16x128xf32>,
    %c119_i32 = arith.constant 119 : i32
    %55 = tpu.dynamic_rotate %1 by %c119_i32 dim 1 : vector<16x128xf32>, i32 -> vector<16x128xf32>
    %c8 = arith.constant 8 : index
    %c0_41 = arith.constant 0 : index
    %56 = vector.load %arg1[%c8, %c0_41] : memref<9x128xf32, #tpu.memory_space<vmem>>, vector<1x128xf32>
    %57 = vector.broadcast %56 : vector<1x128xf32> to vector<16x128xf32>
    %58 = arith.mulf %55, %57 : vector<16x128xf32>
    %c0_42 = arith.constant 0 : index
    %c0_43 = arith.constant 0 : index
    %59 = vector.load %arg6[%c0_42, %c0_43] : memref<16x128xf32, #tpu.memory_space<vmem>>, vector<16x128xf32>
    %60 = arith.addf %59, %58 : vector<16x128xf32>
    %c0_44 = arith.constant 0 : index
    %c0_45 = arith.constant 0 : index
    %61 = vector.load %arg6[%c0_44, %c0_45] : memref<16x128xf32, #tpu.memory_space<vmem>>, vector<16x128xf32>
    tpu.vector_store %arg6[%c0_44, %c0_45], %60 {strides = array<i32>} : memref<16x128xf32, #tpu.memory_space<vmem>>, vector<16x128xf32>,
    %c0_46 = arith.constant 0 : index
    %c0_47 = arith.constant 0 : index
    %62 = vector.load %arg2[%c0_46, %c0_47] : memref<192x16xf32, #tpu.memory_space<vmem>>, vector<192x16xf32>
    %c0_48 = arith.constant 0 : index
    %c0_49 = arith.constant 0 : index
    %63 = vector.load %arg6[%c0_48, %c0_49] : memref<16x128xf32, #tpu.memory_space<vmem>>, vector<16x128xf32>
    %cst = arith.constant dense<0.000000e+00> : vector<192x128xf32>
    %64 = tpu.matmul %62, %63, %cst {dimension_numbers = #tpu.dot_dimension_numbers<[1], [0], [0], [1], [0, 0, 1, 1], [], []>} : vector<192x16xf32>, vector<16x128xf32>, vector<192x128xf32> -> vector<192x128xf32>
    %c0_50 = arith.constant 0 : index
    %c0_51 = arith.constant 0 : index
    %65 = vector.load %arg3[%c0_50, %c0_51] : memref<192x1xf32, #tpu.memory_space<vmem>>, vector<192x1xf32>
    %66 = vector.broadcast %65 : vector<192x1xf32> to vector<192x128xf32>
    %67 = arith.addf %64, %66 : vector<192x128xf32>
    %cst_52 = arith.constant 0.000000e+00 : f32
    %68 = vector.broadcast %cst_52 : f32 to vector<192x128xf32>
    %69 = arith.maximumf %67, %68 : vector<192x128xf32>
    %c0_53 = arith.constant 0 : index
    %c0_54 = arith.constant 0 : index
    %c0_55 = arith.constant 0 : index
    %70 = vector.load %arg5[%c0_53, %c0_54, %c0_55] : memref<1x192x128xf32, #tpu.memory_space<vmem>>, vector<1x192x128xf32>
    %71 = vector.shape_cast %70 : vector<1x192x128xf32> to vector<192x128xf32>
    %72 = vector.shape_cast %69 : vector<192x128xf32> to vector<1x192x128xf32>
    tpu.vector_store %arg5[%c0_53, %c0_54, %c0_55], %72 {strides = array<i32>} : memref<1x192x128xf32, #tpu.memory_space<vmem>>, vector<1x192x128xf32>,
    return
  }
  func.func @transform_0(%arg0: i32) -> (i32, i32) {
    %c0_i32 = arith.constant 0 : i32
    %c0_i32_0 = arith.constant 0 : i32
    %c0_i32_1 = arith.constant 0 : i32
    return %c0_i32, %c0_i32_0 : i32, i32
  }
  func.func @transform_1(%arg0: i32) -> (i32, i32) {
    %c0_i32 = arith.constant 0 : i32
    %c0_i32_0 = arith.constant 0 : i32
    %c0_i32_1 = arith.constant 0 : i32
    return %c0_i32, %c0_i32_0 : i32, i32
  }
  func.func @transform_2(%arg0: i32) -> (i32, i32) {
    %c0_i32 = arith.constant 0 : i32
    %c0_i32_0 = arith.constant 0 : i32
    %c0_i32_1 = arith.constant 0 : i32
    return %c0_i32, %c0_i32_0 : i32, i32
  }
  func.func @transform_3(%arg0: i32) -> (i32, i32, i32) {
    %c0_i32 = arith.constant 0 : i32
    %c0_i32_0 = arith.constant 0 : i32
    %c0_i32_1 = arith.constant 0 : i32
    return %arg0, %c0_i32, %c0_i32_0 : i32, i32, i32
  }
  func.func @transform_4(%arg0: i32) -> (i32, i32, i32) {
    %c0_i32 = arith.constant 0 : i32
    %c0_i32_0 = arith.constant 0 : i32
    %c0_i32_1 = arith.constant 0 : i32
    return %arg0, %c0_i32, %c0_i32_0 : i32, i32, i32
  }
}

module attributes {stable_mosaic.version = 11 : i64} {
  func.func @_heads_kernel(%arg0: i32, %arg1: i32, %arg2: memref<208x16xf32, #tpu.memory_space<vmem>>, %arg3: memref<208x1xf32, #tpu.memory_space<vmem>>, %arg4: memref<1x16x128xf32, #tpu.memory_space<vmem>>, %arg5: memref<1x16x128xf32, #tpu.memory_space<vmem>>, %arg6: memref<1x192x128xf32, #tpu.memory_space<vmem>>) attributes {dimension_semantics = [#tpu.dimension_semantics<parallel>, #tpu.dimension_semantics<parallel>], iteration_bounds = array<i64: 2, 1>, scalar_prefetch = 0 : i64, scratch_operands = 0 : i64, tpu.core_type = #tpu.core_type<tc>, window_params = [{pipeline_mode = #tpu.pipeline_mode<synchronous>, transform_indices = @transform_0, window_bounds = array<i64: 208, 16>}, {pipeline_mode = #tpu.pipeline_mode<synchronous>, transform_indices = @transform_1, window_bounds = array<i64: 208, 1>}, {transform_indices = @transform_2, window_bounds = array<i64: 1, 16, 128>}, {transform_indices = @transform_3, window_bounds = array<i64: 1, 16, 128>}, {transform_indices = @transform_4, window_bounds = array<i64: 1, 192, 128>}]} {
    %c0 = arith.constant 0 : index
    %c0_0 = arith.constant 0 : index
    %0 = vector.load %arg2[%c0, %c0_0] : memref<208x16xf32, #tpu.memory_space<vmem>>, vector<208x16xf32>
    %c0_1 = arith.constant 0 : index
    %c0_2 = arith.constant 0 : index
    %c0_3 = arith.constant 0 : index
    %1 = vector.load %arg4[%c0_1, %c0_2, %c0_3] : memref<1x16x128xf32, #tpu.memory_space<vmem>>, vector<1x16x128xf32>
    %2 = vector.shape_cast %1 : vector<1x16x128xf32> to vector<16x128xf32>
    %cst = arith.constant dense<0.000000e+00> : vector<208x128xf32>
    %3 = tpu.matmul %0, %2, %cst {dimension_numbers = #tpu.dot_dimension_numbers<[1], [0], [0], [1], [0, 0, 1, 1], [], []>} : vector<208x16xf32>, vector<16x128xf32>, vector<208x128xf32> -> vector<208x128xf32>
    %c0_4 = arith.constant 0 : index
    %c0_5 = arith.constant 0 : index
    %4 = vector.load %arg3[%c0_4, %c0_5] : memref<208x1xf32, #tpu.memory_space<vmem>>, vector<208x1xf32>
    %5 = vector.broadcast %4 : vector<208x1xf32> to vector<208x128xf32>
    %6 = arith.addf %3, %5 : vector<208x128xf32>
    %cst_6 = arith.constant 0.000000e+00 : f32
    %7 = vector.broadcast %cst_6 : f32 to vector<208x128xf32>
    %8 = arith.maximumf %6, %7 : vector<208x128xf32>
    %9 = vector.extract_strided_slice %8 {offsets = [0, 0], sizes = [16, 128], strides = [1, 1]} : vector<208x128xf32> to vector<16x128xf32>
    %c0_7 = arith.constant 0 : index
    %c0_8 = arith.constant 0 : index
    %c0_9 = arith.constant 0 : index
    %10 = vector.load %arg5[%c0_7, %c0_8, %c0_9] : memref<1x16x128xf32, #tpu.memory_space<vmem>>, vector<1x16x128xf32>
    %11 = vector.shape_cast %10 : vector<1x16x128xf32> to vector<16x128xf32>
    %12 = vector.shape_cast %9 : vector<16x128xf32> to vector<1x16x128xf32>
    tpu.vector_store %arg5[%c0_7, %c0_8, %c0_9], %12 {strides = array<i32>} : memref<1x16x128xf32, #tpu.memory_space<vmem>>, vector<1x16x128xf32>,
    %13 = vector.extract_strided_slice %8 {offsets = [16, 0], sizes = [192, 128], strides = [1, 1]} : vector<208x128xf32> to vector<192x128xf32>
    %c0_10 = arith.constant 0 : index
    %c0_11 = arith.constant 0 : index
    %c0_12 = arith.constant 0 : index
    %14 = vector.load %arg6[%c0_10, %c0_11, %c0_12] : memref<1x192x128xf32, #tpu.memory_space<vmem>>, vector<1x192x128xf32>
    %15 = vector.shape_cast %14 : vector<1x192x128xf32> to vector<192x128xf32>
    %16 = vector.shape_cast %13 : vector<192x128xf32> to vector<1x192x128xf32>
    tpu.vector_store %arg6[%c0_10, %c0_11, %c0_12], %16 {strides = array<i32>} : memref<1x192x128xf32, #tpu.memory_space<vmem>>, vector<1x192x128xf32>,
    return
  }
  func.func @transform_0(%arg0: i32, %arg1: i32) -> (i32, i32) {
    %c0_i32 = arith.constant 0 : i32
    %c0_i32_0 = arith.constant 0 : i32
    %c0_i32_1 = arith.constant 0 : i32
    return %c0_i32, %c0_i32_0 : i32, i32
  }
  func.func @transform_1(%arg0: i32, %arg1: i32) -> (i32, i32) {
    %c0_i32 = arith.constant 0 : i32
    %c0_i32_0 = arith.constant 0 : i32
    %c0_i32_1 = arith.constant 0 : i32
    return %c0_i32, %c0_i32_0 : i32, i32
  }
  func.func @transform_2(%arg0: i32, %arg1: i32) -> (i32, i32, i32) {
    %c0_i32 = arith.constant 0 : i32
    %c0_i32_0 = arith.constant 0 : i32
    return %arg0, %c0_i32, %arg1 : i32, i32, i32
  }
  func.func @transform_3(%arg0: i32, %arg1: i32) -> (i32, i32, i32) {
    %c0_i32 = arith.constant 0 : i32
    %c0_i32_0 = arith.constant 0 : i32
    return %arg0, %c0_i32, %arg1 : i32, i32, i32
  }
  func.func @transform_4(%arg0: i32, %arg1: i32) -> (i32, i32, i32) {
    %c0_i32 = arith.constant 0 : i32
    %c0_i32_0 = arith.constant 0 : i32
    return %arg0, %c0_i32, %arg1 : i32, i32, i32
  }
}

module attributes {stable_mosaic.version = 11 : i64} {
  func.func @_branch7x7_kernel(%arg0: i32, %arg1: memref<7x128xf32, #tpu.memory_space<vmem>>, %arg2: memref<7x128xf32, #tpu.memory_space<vmem>>, %arg3: memref<8x56xf32, #tpu.memory_space<vmem>>, %arg4: memref<8x1xf32, #tpu.memory_space<vmem>>, %arg5: memref<192x56xf32, #tpu.memory_space<vmem>>, %arg6: memref<192x1xf32, #tpu.memory_space<vmem>>, %arg7: memref<1x8x128xf32, #tpu.memory_space<vmem>>, %arg8: memref<1x192x128xf32, #tpu.memory_space<vmem>>, %arg9: memref<56x128xf32, #tpu.memory_space<vmem>>, %arg10: memref<8x128xf32, #tpu.memory_space<vmem>>) attributes {dimension_semantics = [#tpu.dimension_semantics<parallel>], iteration_bounds = array<i64: 2>, scalar_prefetch = 0 : i64, scratch_operands = 2 : i64, tpu.core_type = #tpu.core_type<tc>, window_params = [{pipeline_mode = #tpu.pipeline_mode<synchronous>, transform_indices = @transform_0, window_bounds = array<i64: 7, 128>}, {pipeline_mode = #tpu.pipeline_mode<synchronous>, transform_indices = @transform_1, window_bounds = array<i64: 7, 128>}, {pipeline_mode = #tpu.pipeline_mode<synchronous>, transform_indices = @transform_2, window_bounds = array<i64: 8, 56>}, {pipeline_mode = #tpu.pipeline_mode<synchronous>, transform_indices = @transform_3, window_bounds = array<i64: 8, 1>}, {pipeline_mode = #tpu.pipeline_mode<synchronous>, transform_indices = @transform_4, window_bounds = array<i64: 192, 56>}, {pipeline_mode = #tpu.pipeline_mode<synchronous>, transform_indices = @transform_5, window_bounds = array<i64: 192, 1>}, {transform_indices = @transform_6, window_bounds = array<i64: 1, 8, 128>}, {transform_indices = @transform_7, window_bounds = array<i64: 1, 192, 128>}]} {
    %c0 = arith.constant 0 : index
    %c0_0 = arith.constant 0 : index
    %c0_1 = arith.constant 0 : index
    %0 = vector.load %arg7[%c0, %c0_0, %c0_1] : memref<1x8x128xf32, #tpu.memory_space<vmem>>, vector<1x8x128xf32>
    %1 = vector.shape_cast %0 : vector<1x8x128xf32> to vector<8x128xf32>
    %c0_2 = arith.constant 0 : index
    %c0_3 = arith.constant 0 : index
    %2 = vector.load %arg10[%c0_2, %c0_3] : memref<8x128xf32, #tpu.memory_space<vmem>>, vector<8x128xf32>
    tpu.vector_store %arg10[%c0_2, %c0_3], %1 {strides = array<i32>} : memref<8x128xf32, #tpu.memory_space<vmem>>, vector<8x128xf32>,
    %c0_4 = arith.constant 0 : index
    %c0_5 = arith.constant 0 : index
    %3 = vector.load %arg10[%c0_4, %c0_5] : memref<8x128xf32, #tpu.memory_space<vmem>>, vector<8x128xf32>
    %c3_i32 = arith.constant 3 : i32
    %4 = tpu.dynamic_rotate %3 by %c3_i32 dim 1 : vector<8x128xf32>, i32 -> vector<8x128xf32>
    %c0_6 = arith.constant 0 : index
    %c0_7 = arith.constant 0 : index
    %5 = vector.load %arg1[%c0_6, %c0_7] : memref<7x128xf32, #tpu.memory_space<vmem>>, vector<1x128xf32>
    %6 = vector.broadcast %5 : vector<1x128xf32> to vector<8x128xf32>
    %7 = arith.mulf %4, %6 : vector<8x128xf32>
    %c0_8 = arith.constant 0 : index
    %c0_9 = arith.constant 0 : index
    %8 = vector.load %arg9[%c0_8, %c0_9] : memref<56x128xf32, #tpu.memory_space<vmem>>, vector<8x128xf32>
    tpu.vector_store %arg9[%c0_8, %c0_9], %7 {strides = array<i32>} : memref<56x128xf32, #tpu.memory_space<vmem>>, vector<8x128xf32>,
    %c0_10 = arith.constant 0 : index
    %c0_11 = arith.constant 0 : index
    %9 = vector.load %arg10[%c0_10, %c0_11] : memref<8x128xf32, #tpu.memory_space<vmem>>, vector<8x128xf32>
    %c2_i32 = arith.constant 2 : i32
    %10 = tpu.dynamic_rotate %9 by %c2_i32 dim 1 : vector<8x128xf32>, i32 -> vector<8x128xf32>
    %c1 = arith.constant 1 : index
    %c0_12 = arith.constant 0 : index
    %11 = vector.load %arg1[%c1, %c0_12] : memref<7x128xf32, #tpu.memory_space<vmem>>, vector<1x128xf32>
    %12 = vector.broadcast %11 : vector<1x128xf32> to vector<8x128xf32>
    %13 = arith.mulf %10, %12 : vector<8x128xf32>
    %c8 = arith.constant 8 : index
    %c0_13 = arith.constant 0 : index
    %14 = vector.load %arg9[%c8, %c0_13] : memref<56x128xf32, #tpu.memory_space<vmem>>, vector<8x128xf32>
    tpu.vector_store %arg9[%c8, %c0_13], %13 {strides = array<i32>} : memref<56x128xf32, #tpu.memory_space<vmem>>, vector<8x128xf32>,
    %c0_14 = arith.constant 0 : index
    %c0_15 = arith.constant 0 : index
    %15 = vector.load %arg10[%c0_14, %c0_15] : memref<8x128xf32, #tpu.memory_space<vmem>>, vector<8x128xf32>
    %c1_i32 = arith.constant 1 : i32
    %16 = tpu.dynamic_rotate %15 by %c1_i32 dim 1 : vector<8x128xf32>, i32 -> vector<8x128xf32>
    %c2 = arith.constant 2 : index
    %c0_16 = arith.constant 0 : index
    %17 = vector.load %arg1[%c2, %c0_16] : memref<7x128xf32, #tpu.memory_space<vmem>>, vector<1x128xf32>
    %18 = vector.broadcast %17 : vector<1x128xf32> to vector<8x128xf32>
    %19 = arith.mulf %16, %18 : vector<8x128xf32>
    %c16 = arith.constant 16 : index
    %c0_17 = arith.constant 0 : index
    %20 = vector.load %arg9[%c16, %c0_17] : memref<56x128xf32, #tpu.memory_space<vmem>>, vector<8x128xf32>
    tpu.vector_store %arg9[%c16, %c0_17], %19 {strides = array<i32>} : memref<56x128xf32, #tpu.memory_space<vmem>>, vector<8x128xf32>,
    %c0_18 = arith.constant 0 : index
    %c0_19 = arith.constant 0 : index
    %21 = vector.load %arg10[%c0_18, %c0_19] : memref<8x128xf32, #tpu.memory_space<vmem>>, vector<8x128xf32>
    %c3 = arith.constant 3 : index
    %c0_20 = arith.constant 0 : index
    %22 = vector.load %arg1[%c3, %c0_20] : memref<7x128xf32, #tpu.memory_space<vmem>>, vector<1x128xf32>
    %23 = vector.broadcast %22 : vector<1x128xf32> to vector<8x128xf32>
    %24 = arith.mulf %21, %23 : vector<8x128xf32>
    %c24 = arith.constant 24 : index
    %c0_21 = arith.constant 0 : index
    %25 = vector.load %arg9[%c24, %c0_21] : memref<56x128xf32, #tpu.memory_space<vmem>>, vector<8x128xf32>
    tpu.vector_store %arg9[%c24, %c0_21], %24 {strides = array<i32>} : memref<56x128xf32, #tpu.memory_space<vmem>>, vector<8x128xf32>,
    %c0_22 = arith.constant 0 : index
    %c0_23 = arith.constant 0 : index
    %26 = vector.load %arg10[%c0_22, %c0_23] : memref<8x128xf32, #tpu.memory_space<vmem>>, vector<8x128xf32>
    %c127_i32 = arith.constant 127 : i32
    %27 = tpu.dynamic_rotate %26 by %c127_i32 dim 1 : vector<8x128xf32>, i32 -> vector<8x128xf32>
    %c4 = arith.constant 4 : index
    %c0_24 = arith.constant 0 : index
    %28 = vector.load %arg1[%c4, %c0_24] : memref<7x128xf32, #tpu.memory_space<vmem>>, vector<1x128xf32>
    %29 = vector.broadcast %28 : vector<1x128xf32> to vector<8x128xf32>
    %30 = arith.mulf %27, %29 : vector<8x128xf32>
    %c32 = arith.constant 32 : index
    %c0_25 = arith.constant 0 : index
    %31 = vector.load %arg9[%c32, %c0_25] : memref<56x128xf32, #tpu.memory_space<vmem>>, vector<8x128xf32>
    tpu.vector_store %arg9[%c32, %c0_25], %30 {strides = array<i32>} : memref<56x128xf32, #tpu.memory_space<vmem>>, vector<8x128xf32>,
    %c0_26 = arith.constant 0 : index
    %c0_27 = arith.constant 0 : index
    %32 = vector.load %arg10[%c0_26, %c0_27] : memref<8x128xf32, #tpu.memory_space<vmem>>, vector<8x128xf32>
    %c126_i32 = arith.constant 126 : i32
    %33 = tpu.dynamic_rotate %32 by %c126_i32 dim 1 : vector<8x128xf32>, i32 -> vector<8x128xf32>
    %c5 = arith.constant 5 : index
    %c0_28 = arith.constant 0 : index
    %34 = vector.load %arg1[%c5, %c0_28] : memref<7x128xf32, #tpu.memory_space<vmem>>, vector<1x128xf32>
    %35 = vector.broadcast %34 : vector<1x128xf32> to vector<8x128xf32>
    %36 = arith.mulf %33, %35 : vector<8x128xf32>
    %c40 = arith.constant 40 : index
    %c0_29 = arith.constant 0 : index
    %37 = vector.load %arg9[%c40, %c0_29] : memref<56x128xf32, #tpu.memory_space<vmem>>, vector<8x128xf32>
    tpu.vector_store %arg9[%c40, %c0_29], %36 {strides = array<i32>} : memref<56x128xf32, #tpu.memory_space<vmem>>, vector<8x128xf32>,
    %c0_30 = arith.constant 0 : index
    %c0_31 = arith.constant 0 : index
    %38 = vector.load %arg10[%c0_30, %c0_31] : memref<8x128xf32, #tpu.memory_space<vmem>>, vector<8x128xf32>
    %c125_i32 = arith.constant 125 : i32
    %39 = tpu.dynamic_rotate %38 by %c125_i32 dim 1 : vector<8x128xf32>, i32 -> vector<8x128xf32>
    %c6 = arith.constant 6 : index
    %c0_32 = arith.constant 0 : index
    %40 = vector.load %arg1[%c6, %c0_32] : memref<7x128xf32, #tpu.memory_space<vmem>>, vector<1x128xf32>
    %41 = vector.broadcast %40 : vector<1x128xf32> to vector<8x128xf32>
    %42 = arith.mulf %39, %41 : vector<8x128xf32>
    %c48 = arith.constant 48 : index
    %c0_33 = arith.constant 0 : index
    %43 = vector.load %arg9[%c48, %c0_33] : memref<56x128xf32, #tpu.memory_space<vmem>>, vector<8x128xf32>
    tpu.vector_store %arg9[%c48, %c0_33], %42 {strides = array<i32>} : memref<56x128xf32, #tpu.memory_space<vmem>>, vector<8x128xf32>,
    %c0_34 = arith.constant 0 : index
    %c0_35 = arith.constant 0 : index
    %44 = vector.load %arg3[%c0_34, %c0_35] : memref<8x56xf32, #tpu.memory_space<vmem>>, vector<8x56xf32>
    %c0_36 = arith.constant 0 : index
    %c0_37 = arith.constant 0 : index
    %45 = vector.load %arg9[%c0_36, %c0_37] : memref<56x128xf32, #tpu.memory_space<vmem>>, vector<56x128xf32>
    %cst = arith.constant dense<0.000000e+00> : vector<8x128xf32>
    %46 = tpu.matmul %44, %45, %cst {dimension_numbers = #tpu.dot_dimension_numbers<[1], [0], [0], [1], [0, 0, 1, 1], [], []>} : vector<8x56xf32>, vector<56x128xf32>, vector<8x128xf32> -> vector<8x128xf32>
    %c0_38 = arith.constant 0 : index
    %c0_39 = arith.constant 0 : index
    %47 = vector.load %arg4[%c0_38, %c0_39] : memref<8x1xf32, #tpu.memory_space<vmem>>, vector<8x1xf32>
    %48 = vector.broadcast %47 : vector<8x1xf32> to vector<8x128xf32>
    %49 = arith.addf %46, %48 : vector<8x128xf32>
    %cst_40 = arith.constant 0.000000e+00 : f32
    %50 = vector.broadcast %cst_40 : f32 to vector<8x128xf32>
    %51 = arith.maximumf %49, %50 : vector<8x128xf32>
    %c0_41 = arith.constant 0 : index
    %c0_42 = arith.constant 0 : index
    %52 = vector.load %arg10[%c0_41, %c0_42] : memref<8x128xf32, #tpu.memory_space<vmem>>, vector<8x128xf32>
    tpu.vector_store %arg10[%c0_41, %c0_42], %51 {strides = array<i32>} : memref<8x128xf32, #tpu.memory_space<vmem>>, vector<8x128xf32>,
    %c0_43 = arith.constant 0 : index
    %c0_44 = arith.constant 0 : index
    %53 = vector.load %arg10[%c0_43, %c0_44] : memref<8x128xf32, #tpu.memory_space<vmem>>, vector<8x128xf32>
    %c24_i32 = arith.constant 24 : i32
    %54 = tpu.dynamic_rotate %53 by %c24_i32 dim 1 : vector<8x128xf32>, i32 -> vector<8x128xf32>
    %c0_45 = arith.constant 0 : index
    %c0_46 = arith.constant 0 : index
    %55 = vector.load %arg2[%c0_45, %c0_46] : memref<7x128xf32, #tpu.memory_space<vmem>>, vector<1x128xf32>
    %56 = vector.broadcast %55 : vector<1x128xf32> to vector<8x128xf32>
    %57 = arith.mulf %54, %56 : vector<8x128xf32>
    %c0_47 = arith.constant 0 : index
    %c0_48 = arith.constant 0 : index
    %58 = vector.load %arg9[%c0_47, %c0_48] : memref<56x128xf32, #tpu.memory_space<vmem>>, vector<8x128xf32>
    tpu.vector_store %arg9[%c0_47, %c0_48], %57 {strides = array<i32>} : memref<56x128xf32, #tpu.memory_space<vmem>>, vector<8x128xf32>,
    %c0_49 = arith.constant 0 : index
    %c0_50 = arith.constant 0 : index
    %59 = vector.load %arg10[%c0_49, %c0_50] : memref<8x128xf32, #tpu.memory_space<vmem>>, vector<8x128xf32>
    %c16_i32 = arith.constant 16 : i32
    %60 = tpu.dynamic_rotate %59 by %c16_i32 dim 1 : vector<8x128xf32>, i32 -> vector<8x128xf32>
    %c1_51 = arith.constant 1 : index
    %c0_52 = arith.constant 0 : index
    %61 = vector.load %arg2[%c1_51, %c0_52] : memref<7x128xf32, #tpu.memory_space<vmem>>, vector<1x128xf32>
    %62 = vector.broadcast %61 : vector<1x128xf32> to vector<8x128xf32>
    %63 = arith.mulf %60, %62 : vector<8x128xf32>
    %c8_53 = arith.constant 8 : index
    %c0_54 = arith.constant 0 : index
    %64 = vector.load %arg9[%c8_53, %c0_54] : memref<56x128xf32, #tpu.memory_space<vmem>>, vector<8x128xf32>
    tpu.vector_store %arg9[%c8_53, %c0_54], %63 {strides = array<i32>} : memref<56x128xf32, #tpu.memory_space<vmem>>, vector<8x128xf32>,
    %c0_55 = arith.constant 0 : index
    %c0_56 = arith.constant 0 : index
    %65 = vector.load %arg10[%c0_55, %c0_56] : memref<8x128xf32, #tpu.memory_space<vmem>>, vector<8x128xf32>
    %c8_i32 = arith.constant 8 : i32
    %66 = tpu.dynamic_rotate %65 by %c8_i32 dim 1 : vector<8x128xf32>, i32 -> vector<8x128xf32>
    %c2_57 = arith.constant 2 : index
    %c0_58 = arith.constant 0 : index
    %67 = vector.load %arg2[%c2_57, %c0_58] : memref<7x128xf32, #tpu.memory_space<vmem>>, vector<1x128xf32>
    %68 = vector.broadcast %67 : vector<1x128xf32> to vector<8x128xf32>
    %69 = arith.mulf %66, %68 : vector<8x128xf32>
    %c16_59 = arith.constant 16 : index
    %c0_60 = arith.constant 0 : index
    %70 = vector.load %arg9[%c16_59, %c0_60] : memref<56x128xf32, #tpu.memory_space<vmem>>, vector<8x128xf32>
    tpu.vector_store %arg9[%c16_59, %c0_60], %69 {strides = array<i32>} : memref<56x128xf32, #tpu.memory_space<vmem>>, vector<8x128xf32>,
    %c0_61 = arith.constant 0 : index
    %c0_62 = arith.constant 0 : index
    %71 = vector.load %arg10[%c0_61, %c0_62] : memref<8x128xf32, #tpu.memory_space<vmem>>, vector<8x128xf32>
    %c3_63 = arith.constant 3 : index
    %c0_64 = arith.constant 0 : index
    %72 = vector.load %arg2[%c3_63, %c0_64] : memref<7x128xf32, #tpu.memory_space<vmem>>, vector<1x128xf32>
    %73 = vector.broadcast %72 : vector<1x128xf32> to vector<8x128xf32>
    %74 = arith.mulf %71, %73 : vector<8x128xf32>
    %c24_65 = arith.constant 24 : index
    %c0_66 = arith.constant 0 : index
    %75 = vector.load %arg9[%c24_65, %c0_66] : memref<56x128xf32, #tpu.memory_space<vmem>>, vector<8x128xf32>
    tpu.vector_store %arg9[%c24_65, %c0_66], %74 {strides = array<i32>} : memref<56x128xf32, #tpu.memory_space<vmem>>, vector<8x128xf32>,
    %c0_67 = arith.constant 0 : index
    %c0_68 = arith.constant 0 : index
    %76 = vector.load %arg10[%c0_67, %c0_68] : memref<8x128xf32, #tpu.memory_space<vmem>>, vector<8x128xf32>
    %c120_i32 = arith.constant 120 : i32
    %77 = tpu.dynamic_rotate %76 by %c120_i32 dim 1 : vector<8x128xf32>, i32 -> vector<8x128xf32>
    %c4_69 = arith.constant 4 : index
    %c0_70 = arith.constant 0 : index
    %78 = vector.load %arg2[%c4_69, %c0_70] : memref<7x128xf32, #tpu.memory_space<vmem>>, vector<1x128xf32>
    %79 = vector.broadcast %78 : vector<1x128xf32> to vector<8x128xf32>
    %80 = arith.mulf %77, %79 : vector<8x128xf32>
    %c32_71 = arith.constant 32 : index
    %c0_72 = arith.constant 0 : index
    %81 = vector.load %arg9[%c32_71, %c0_72] : memref<56x128xf32, #tpu.memory_space<vmem>>, vector<8x128xf32>
    tpu.vector_store %arg9[%c32_71, %c0_72], %80 {strides = array<i32>} : memref<56x128xf32, #tpu.memory_space<vmem>>, vector<8x128xf32>,
    %c0_73 = arith.constant 0 : index
    %c0_74 = arith.constant 0 : index
    %82 = vector.load %arg10[%c0_73, %c0_74] : memref<8x128xf32, #tpu.memory_space<vmem>>, vector<8x128xf32>
    %c112_i32 = arith.constant 112 : i32
    %83 = tpu.dynamic_rotate %82 by %c112_i32 dim 1 : vector<8x128xf32>, i32 -> vector<8x128xf32>
    %c5_75 = arith.constant 5 : index
    %c0_76 = arith.constant 0 : index
    %84 = vector.load %arg2[%c5_75, %c0_76] : memref<7x128xf32, #tpu.memory_space<vmem>>, vector<1x128xf32>
    %85 = vector.broadcast %84 : vector<1x128xf32> to vector<8x128xf32>
    %86 = arith.mulf %83, %85 : vector<8x128xf32>
    %c40_77 = arith.constant 40 : index
    %c0_78 = arith.constant 0 : index
    %87 = vector.load %arg9[%c40_77, %c0_78] : memref<56x128xf32, #tpu.memory_space<vmem>>, vector<8x128xf32>
    tpu.vector_store %arg9[%c40_77, %c0_78], %86 {strides = array<i32>} : memref<56x128xf32, #tpu.memory_space<vmem>>, vector<8x128xf32>,
    %c0_79 = arith.constant 0 : index
    %c0_80 = arith.constant 0 : index
    %88 = vector.load %arg10[%c0_79, %c0_80] : memref<8x128xf32, #tpu.memory_space<vmem>>, vector<8x128xf32>
    %c104_i32 = arith.constant 104 : i32
    %89 = tpu.dynamic_rotate %88 by %c104_i32 dim 1 : vector<8x128xf32>, i32 -> vector<8x128xf32>
    %c6_81 = arith.constant 6 : index
    %c0_82 = arith.constant 0 : index
    %90 = vector.load %arg2[%c6_81, %c0_82] : memref<7x128xf32, #tpu.memory_space<vmem>>, vector<1x128xf32>
    %91 = vector.broadcast %90 : vector<1x128xf32> to vector<8x128xf32>
    %92 = arith.mulf %89, %91 : vector<8x128xf32>
    %c48_83 = arith.constant 48 : index
    %c0_84 = arith.constant 0 : index
    %93 = vector.load %arg9[%c48_83, %c0_84] : memref<56x128xf32, #tpu.memory_space<vmem>>, vector<8x128xf32>
    tpu.vector_store %arg9[%c48_83, %c0_84], %92 {strides = array<i32>} : memref<56x128xf32, #tpu.memory_space<vmem>>, vector<8x128xf32>,
    %c0_85 = arith.constant 0 : index
    %c0_86 = arith.constant 0 : index
    %94 = vector.load %arg5[%c0_85, %c0_86] : memref<192x56xf32, #tpu.memory_space<vmem>>, vector<192x56xf32>
    %c0_87 = arith.constant 0 : index
    %c0_88 = arith.constant 0 : index
    %95 = vector.load %arg9[%c0_87, %c0_88] : memref<56x128xf32, #tpu.memory_space<vmem>>, vector<56x128xf32>
    %cst_89 = arith.constant dense<0.000000e+00> : vector<192x128xf32>
    %96 = tpu.matmul %94, %95, %cst_89 {dimension_numbers = #tpu.dot_dimension_numbers<[1], [0], [0], [1], [0, 0, 1, 1], [], []>} : vector<192x56xf32>, vector<56x128xf32>, vector<192x128xf32> -> vector<192x128xf32>
    %c0_90 = arith.constant 0 : index
    %c0_91 = arith.constant 0 : index
    %97 = vector.load %arg6[%c0_90, %c0_91] : memref<192x1xf32, #tpu.memory_space<vmem>>, vector<192x1xf32>
    %98 = vector.broadcast %97 : vector<192x1xf32> to vector<192x128xf32>
    %99 = arith.addf %96, %98 : vector<192x128xf32>
    %cst_92 = arith.constant 0.000000e+00 : f32
    %100 = vector.broadcast %cst_92 : f32 to vector<192x128xf32>
    %101 = arith.maximumf %99, %100 : vector<192x128xf32>
    %c0_93 = arith.constant 0 : index
    %c0_94 = arith.constant 0 : index
    %c0_95 = arith.constant 0 : index
    %102 = vector.load %arg8[%c0_93, %c0_94, %c0_95] : memref<1x192x128xf32, #tpu.memory_space<vmem>>, vector<1x192x128xf32>
    %103 = vector.shape_cast %102 : vector<1x192x128xf32> to vector<192x128xf32>
    %104 = vector.shape_cast %101 : vector<192x128xf32> to vector<1x192x128xf32>
    tpu.vector_store %arg8[%c0_93, %c0_94, %c0_95], %104 {strides = array<i32>} : memref<1x192x128xf32, #tpu.memory_space<vmem>>, vector<1x192x128xf32>,
    return
  }
  func.func @transform_0(%arg0: i32) -> (i32, i32) {
    %c0_i32 = arith.constant 0 : i32
    %c0_i32_0 = arith.constant 0 : i32
    %c0_i32_1 = arith.constant 0 : i32
    return %c0_i32, %c0_i32_0 : i32, i32
  }
  func.func @transform_1(%arg0: i32) -> (i32, i32) {
    %c0_i32 = arith.constant 0 : i32
    %c0_i32_0 = arith.constant 0 : i32
    %c0_i32_1 = arith.constant 0 : i32
    return %c0_i32, %c0_i32_0 : i32, i32
  }
  func.func @transform_2(%arg0: i32) -> (i32, i32) {
    %c0_i32 = arith.constant 0 : i32
    %c0_i32_0 = arith.constant 0 : i32
    %c0_i32_1 = arith.constant 0 : i32
    return %c0_i32, %c0_i32_0 : i32, i32
  }
  func.func @transform_3(%arg0: i32) -> (i32, i32) {
    %c0_i32 = arith.constant 0 : i32
    %c0_i32_0 = arith.constant 0 : i32
    %c0_i32_1 = arith.constant 0 : i32
    return %c0_i32, %c0_i32_0 : i32, i32
  }
  func.func @transform_4(%arg0: i32) -> (i32, i32) {
    %c0_i32 = arith.constant 0 : i32
    %c0_i32_0 = arith.constant 0 : i32
    %c0_i32_1 = arith.constant 0 : i32
    return %c0_i32, %c0_i32_0 : i32, i32
  }
  func.func @transform_5(%arg0: i32) -> (i32, i32) {
    %c0_i32 = arith.constant 0 : i32
    %c0_i32_0 = arith.constant 0 : i32
    %c0_i32_1 = arith.constant 0 : i32
    return %c0_i32, %c0_i32_0 : i32, i32
  }
  func.func @transform_6(%arg0: i32) -> (i32, i32, i32) {
    %c0_i32 = arith.constant 0 : i32
    %c0_i32_0 = arith.constant 0 : i32
    %c0_i32_1 = arith.constant 0 : i32
    return %arg0, %c0_i32, %c0_i32_0 : i32, i32, i32
  }
  func.func @transform_7(%arg0: i32) -> (i32, i32, i32) {
    %c0_i32 = arith.constant 0 : i32
    %c0_i32_0 = arith.constant 0 : i32
    %c0_i32_1 = arith.constant 0 : i32
    return %arg0, %c0_i32, %c0_i32_0 : i32, i32, i32
  }
}

module attributes {stable_mosaic.version = 11 : i64} {
  func.func @_branch_dbl_kernel(%arg0: i32, %arg1: memref<7x128xf32, #tpu.memory_space<vmem>>, %arg2: memref<7x128xf32, #tpu.memory_space<vmem>>, %arg3: memref<8x56xf32, #tpu.memory_space<vmem>>, %arg4: memref<8x1xf32, #tpu.memory_space<vmem>>, %arg5: memref<8x56xf32, #tpu.memory_space<vmem>>, %arg6: memref<8x1xf32, #tpu.memory_space<vmem>>, %arg7: memref<8x56xf32, #tpu.memory_space<vmem>>, %arg8: memref<8x1xf32, #tpu.memory_space<vmem>>, %arg9: memref<192x56xf32, #tpu.memory_space<vmem>>, %arg10: memref<192x1xf32, #tpu.memory_space<vmem>>, %arg11: memref<1x8x128xf32, #tpu.memory_space<vmem>>, %arg12: memref<1x192x128xf32, #tpu.memory_space<vmem>>, %arg13: memref<56x128xf32, #tpu.memory_space<vmem>>, %arg14: memref<8x128xf32, #tpu.memory_space<vmem>>) attributes {dimension_semantics = [#tpu.dimension_semantics<parallel>], iteration_bounds = array<i64: 2>, scalar_prefetch = 0 : i64, scratch_operands = 2 : i64, tpu.core_type = #tpu.core_type<tc>, window_params = [{pipeline_mode = #tpu.pipeline_mode<synchronous>, transform_indices = @transform_0, window_bounds = array<i64: 7, 128>}, {pipeline_mode = #tpu.pipeline_mode<synchronous>, transform_indices = @transform_1, window_bounds = array<i64: 7, 128>}, {pipeline_mode = #tpu.pipeline_mode<synchronous>, transform_indices = @transform_2, window_bounds = array<i64: 8, 56>}, {pipeline_mode = #tpu.pipeline_mode<synchronous>, transform_indices = @transform_3, window_bounds = array<i64: 8, 1>}, {pipeline_mode = #tpu.pipeline_mode<synchronous>, transform_indices = @transform_4, window_bounds = array<i64: 8, 56>}, {pipeline_mode = #tpu.pipeline_mode<synchronous>, transform_indices = @transform_5, window_bounds = array<i64: 8, 1>}, {pipeline_mode = #tpu.pipeline_mode<synchronous>, transform_indices = @transform_6, window_bounds = array<i64: 8, 56>}, {pipeline_mode = #tpu.pipeline_mode<synchronous>, transform_indices = @transform_7, window_bounds = array<i64: 8, 1>}, {pipeline_mode = #tpu.pipeline_mode<synchronous>, transform_indices = @transform_8, window_bounds = array<i64: 192, 56>}, {pipeline_mode = #tpu.pipeline_mode<synchronous>, transform_indices = @transform_9, window_bounds = array<i64: 192, 1>}, {transform_indices = @transform_10, window_bounds = array<i64: 1, 8, 128>}, {transform_indices = @transform_11, window_bounds = array<i64: 1, 192, 128>}]} {
    %c0 = arith.constant 0 : index
    %c0_0 = arith.constant 0 : index
    %c0_1 = arith.constant 0 : index
    %0 = vector.load %arg11[%c0, %c0_0, %c0_1] : memref<1x8x128xf32, #tpu.memory_space<vmem>>, vector<1x8x128xf32>
    %1 = vector.shape_cast %0 : vector<1x8x128xf32> to vector<8x128xf32>
    %c0_2 = arith.constant 0 : index
    %c0_3 = arith.constant 0 : index
    %2 = vector.load %arg14[%c0_2, %c0_3] : memref<8x128xf32, #tpu.memory_space<vmem>>, vector<8x128xf32>
    tpu.vector_store %arg14[%c0_2, %c0_3], %1 {strides = array<i32>} : memref<8x128xf32, #tpu.memory_space<vmem>>, vector<8x128xf32>,
    %c0_4 = arith.constant 0 : index
    %c0_5 = arith.constant 0 : index
    %3 = vector.load %arg14[%c0_4, %c0_5] : memref<8x128xf32, #tpu.memory_space<vmem>>, vector<8x128xf32>
    %c24_i32 = arith.constant 24 : i32
    %4 = tpu.dynamic_rotate %3 by %c24_i32 dim 1 : vector<8x128xf32>, i32 -> vector<8x128xf32>
    %c0_6 = arith.constant 0 : index
    %c0_7 = arith.constant 0 : index
    %5 = vector.load %arg2[%c0_6, %c0_7] : memref<7x128xf32, #tpu.memory_space<vmem>>, vector<1x128xf32>
    %6 = vector.broadcast %5 : vector<1x128xf32> to vector<8x128xf32>
    %7 = arith.mulf %4, %6 : vector<8x128xf32>
    %c0_8 = arith.constant 0 : index
    %c0_9 = arith.constant 0 : index
    %8 = vector.load %arg13[%c0_8, %c0_9] : memref<56x128xf32, #tpu.memory_space<vmem>>, vector<8x128xf32>
    tpu.vector_store %arg13[%c0_8, %c0_9], %7 {strides = array<i32>} : memref<56x128xf32, #tpu.memory_space<vmem>>, vector<8x128xf32>,
    %c0_10 = arith.constant 0 : index
    %c0_11 = arith.constant 0 : index
    %9 = vector.load %arg14[%c0_10, %c0_11] : memref<8x128xf32, #tpu.memory_space<vmem>>, vector<8x128xf32>
    %c16_i32 = arith.constant 16 : i32
    %10 = tpu.dynamic_rotate %9 by %c16_i32 dim 1 : vector<8x128xf32>, i32 -> vector<8x128xf32>
    %c1 = arith.constant 1 : index
    %c0_12 = arith.constant 0 : index
    %11 = vector.load %arg2[%c1, %c0_12] : memref<7x128xf32, #tpu.memory_space<vmem>>, vector<1x128xf32>
    %12 = vector.broadcast %11 : vector<1x128xf32> to vector<8x128xf32>
    %13 = arith.mulf %10, %12 : vector<8x128xf32>
    %c8 = arith.constant 8 : index
    %c0_13 = arith.constant 0 : index
    %14 = vector.load %arg13[%c8, %c0_13] : memref<56x128xf32, #tpu.memory_space<vmem>>, vector<8x128xf32>
    tpu.vector_store %arg13[%c8, %c0_13], %13 {strides = array<i32>} : memref<56x128xf32, #tpu.memory_space<vmem>>, vector<8x128xf32>,
    %c0_14 = arith.constant 0 : index
    %c0_15 = arith.constant 0 : index
    %15 = vector.load %arg14[%c0_14, %c0_15] : memref<8x128xf32, #tpu.memory_space<vmem>>, vector<8x128xf32>
    %c8_i32 = arith.constant 8 : i32
    %16 = tpu.dynamic_rotate %15 by %c8_i32 dim 1 : vector<8x128xf32>, i32 -> vector<8x128xf32>
    %c2 = arith.constant 2 : index
    %c0_16 = arith.constant 0 : index
    %17 = vector.load %arg2[%c2, %c0_16] : memref<7x128xf32, #tpu.memory_space<vmem>>, vector<1x128xf32>
    %18 = vector.broadcast %17 : vector<1x128xf32> to vector<8x128xf32>
    %19 = arith.mulf %16, %18 : vector<8x128xf32>
    %c16 = arith.constant 16 : index
    %c0_17 = arith.constant 0 : index
    %20 = vector.load %arg13[%c16, %c0_17] : memref<56x128xf32, #tpu.memory_space<vmem>>, vector<8x128xf32>
    tpu.vector_store %arg13[%c16, %c0_17], %19 {strides = array<i32>} : memref<56x128xf32, #tpu.memory_space<vmem>>, vector<8x128xf32>,
    %c0_18 = arith.constant 0 : index
    %c0_19 = arith.constant 0 : index
    %21 = vector.load %arg14[%c0_18, %c0_19] : memref<8x128xf32, #tpu.memory_space<vmem>>, vector<8x128xf32>
    %c3 = arith.constant 3 : index
    %c0_20 = arith.constant 0 : index
    %22 = vector.load %arg2[%c3, %c0_20] : memref<7x128xf32, #tpu.memory_space<vmem>>, vector<1x128xf32>
    %23 = vector.broadcast %22 : vector<1x128xf32> to vector<8x128xf32>
    %24 = arith.mulf %21, %23 : vector<8x128xf32>
    %c24 = arith.constant 24 : index
    %c0_21 = arith.constant 0 : index
    %25 = vector.load %arg13[%c24, %c0_21] : memref<56x128xf32, #tpu.memory_space<vmem>>, vector<8x128xf32>
    tpu.vector_store %arg13[%c24, %c0_21], %24 {strides = array<i32>} : memref<56x128xf32, #tpu.memory_space<vmem>>, vector<8x128xf32>,
    %c0_22 = arith.constant 0 : index
    %c0_23 = arith.constant 0 : index
    %26 = vector.load %arg14[%c0_22, %c0_23] : memref<8x128xf32, #tpu.memory_space<vmem>>, vector<8x128xf32>
    %c120_i32 = arith.constant 120 : i32
    %27 = tpu.dynamic_rotate %26 by %c120_i32 dim 1 : vector<8x128xf32>, i32 -> vector<8x128xf32>
    %c4 = arith.constant 4 : index
    %c0_24 = arith.constant 0 : index
    %28 = vector.load %arg2[%c4, %c0_24] : memref<7x128xf32, #tpu.memory_space<vmem>>, vector<1x128xf32>
    %29 = vector.broadcast %28 : vector<1x128xf32> to vector<8x128xf32>
    %30 = arith.mulf %27, %29 : vector<8x128xf32>
    %c32 = arith.constant 32 : index
    %c0_25 = arith.constant 0 : index
    %31 = vector.load %arg13[%c32, %c0_25] : memref<56x128xf32, #tpu.memory_space<vmem>>, vector<8x128xf32>
    tpu.vector_store %arg13[%c32, %c0_25], %30 {strides = array<i32>} : memref<56x128xf32, #tpu.memory_space<vmem>>, vector<8x128xf32>,
    %c0_26 = arith.constant 0 : index
    %c0_27 = arith.constant 0 : index
    %32 = vector.load %arg14[%c0_26, %c0_27] : memref<8x128xf32, #tpu.memory_space<vmem>>, vector<8x128xf32>
    %c112_i32 = arith.constant 112 : i32
    %33 = tpu.dynamic_rotate %32 by %c112_i32 dim 1 : vector<8x128xf32>, i32 -> vector<8x128xf32>
    %c5 = arith.constant 5 : index
    %c0_28 = arith.constant 0 : index
    %34 = vector.load %arg2[%c5, %c0_28] : memref<7x128xf32, #tpu.memory_space<vmem>>, vector<1x128xf32>
    %35 = vector.broadcast %34 : vector<1x128xf32> to vector<8x128xf32>
    %36 = arith.mulf %33, %35 : vector<8x128xf32>
    %c40 = arith.constant 40 : index
    %c0_29 = arith.constant 0 : index
    %37 = vector.load %arg13[%c40, %c0_29] : memref<56x128xf32, #tpu.memory_space<vmem>>, vector<8x128xf32>
    tpu.vector_store %arg13[%c40, %c0_29], %36 {strides = array<i32>} : memref<56x128xf32, #tpu.memory_space<vmem>>, vector<8x128xf32>,
    %c0_30 = arith.constant 0 : index
    %c0_31 = arith.constant 0 : index
    %38 = vector.load %arg14[%c0_30, %c0_31] : memref<8x128xf32, #tpu.memory_space<vmem>>, vector<8x128xf32>
    %c104_i32 = arith.constant 104 : i32
    %39 = tpu.dynamic_rotate %38 by %c104_i32 dim 1 : vector<8x128xf32>, i32 -> vector<8x128xf32>
    %c6 = arith.constant 6 : index
    %c0_32 = arith.constant 0 : index
    %40 = vector.load %arg2[%c6, %c0_32] : memref<7x128xf32, #tpu.memory_space<vmem>>, vector<1x128xf32>
    %41 = vector.broadcast %40 : vector<1x128xf32> to vector<8x128xf32>
    %42 = arith.mulf %39, %41 : vector<8x128xf32>
    %c48 = arith.constant 48 : index
    %c0_33 = arith.constant 0 : index
    %43 = vector.load %arg13[%c48, %c0_33] : memref<56x128xf32, #tpu.memory_space<vmem>>, vector<8x128xf32>
    tpu.vector_store %arg13[%c48, %c0_33], %42 {strides = array<i32>} : memref<56x128xf32, #tpu.memory_space<vmem>>, vector<8x128xf32>,
    %c0_34 = arith.constant 0 : index
    %c0_35 = arith.constant 0 : index
    %44 = vector.load %arg3[%c0_34, %c0_35] : memref<8x56xf32, #tpu.memory_space<vmem>>, vector<8x56xf32>
    %c0_36 = arith.constant 0 : index
    %c0_37 = arith.constant 0 : index
    %45 = vector.load %arg13[%c0_36, %c0_37] : memref<56x128xf32, #tpu.memory_space<vmem>>, vector<56x128xf32>
    %cst = arith.constant dense<0.000000e+00> : vector<8x128xf32>
    %46 = tpu.matmul %44, %45, %cst {dimension_numbers = #tpu.dot_dimension_numbers<[1], [0], [0], [1], [0, 0, 1, 1], [], []>} : vector<8x56xf32>, vector<56x128xf32>, vector<8x128xf32> -> vector<8x128xf32>
    %c0_38 = arith.constant 0 : index
    %c0_39 = arith.constant 0 : index
    %47 = vector.load %arg4[%c0_38, %c0_39] : memref<8x1xf32, #tpu.memory_space<vmem>>, vector<8x1xf32>
    %48 = vector.broadcast %47 : vector<8x1xf32> to vector<8x128xf32>
    %49 = arith.addf %46, %48 : vector<8x128xf32>
    %cst_40 = arith.constant 0.000000e+00 : f32
    %50 = vector.broadcast %cst_40 : f32 to vector<8x128xf32>
    %51 = arith.maximumf %49, %50 : vector<8x128xf32>
    %c0_41 = arith.constant 0 : index
    %c0_42 = arith.constant 0 : index
    %52 = vector.load %arg14[%c0_41, %c0_42] : memref<8x128xf32, #tpu.memory_space<vmem>>, vector<8x128xf32>
    tpu.vector_store %arg14[%c0_41, %c0_42], %51 {strides = array<i32>} : memref<8x128xf32, #tpu.memory_space<vmem>>, vector<8x128xf32>,
    %c0_43 = arith.constant 0 : index
    %c0_44 = arith.constant 0 : index
    %53 = vector.load %arg14[%c0_43, %c0_44] : memref<8x128xf32, #tpu.memory_space<vmem>>, vector<8x128xf32>
    %c3_i32 = arith.constant 3 : i32
    %54 = tpu.dynamic_rotate %53 by %c3_i32 dim 1 : vector<8x128xf32>, i32 -> vector<8x128xf32>
    %c0_45 = arith.constant 0 : index
    %c0_46 = arith.constant 0 : index
    %55 = vector.load %arg1[%c0_45, %c0_46] : memref<7x128xf32, #tpu.memory_space<vmem>>, vector<1x128xf32>
    %56 = vector.broadcast %55 : vector<1x128xf32> to vector<8x128xf32>
    %57 = arith.mulf %54, %56 : vector<8x128xf32>
    %c0_47 = arith.constant 0 : index
    %c0_48 = arith.constant 0 : index
    %58 = vector.load %arg13[%c0_47, %c0_48] : memref<56x128xf32, #tpu.memory_space<vmem>>, vector<8x128xf32>
    tpu.vector_store %arg13[%c0_47, %c0_48], %57 {strides = array<i32>} : memref<56x128xf32, #tpu.memory_space<vmem>>, vector<8x128xf32>,
    %c0_49 = arith.constant 0 : index
    %c0_50 = arith.constant 0 : index
    %59 = vector.load %arg14[%c0_49, %c0_50] : memref<8x128xf32, #tpu.memory_space<vmem>>, vector<8x128xf32>
    %c2_i32 = arith.constant 2 : i32
    %60 = tpu.dynamic_rotate %59 by %c2_i32 dim 1 : vector<8x128xf32>, i32 -> vector<8x128xf32>
    %c1_51 = arith.constant 1 : index
    %c0_52 = arith.constant 0 : index
    %61 = vector.load %arg1[%c1_51, %c0_52] : memref<7x128xf32, #tpu.memory_space<vmem>>, vector<1x128xf32>
    %62 = vector.broadcast %61 : vector<1x128xf32> to vector<8x128xf32>
    %63 = arith.mulf %60, %62 : vector<8x128xf32>
    %c8_53 = arith.constant 8 : index
    %c0_54 = arith.constant 0 : index
    %64 = vector.load %arg13[%c8_53, %c0_54] : memref<56x128xf32, #tpu.memory_space<vmem>>, vector<8x128xf32>
    tpu.vector_store %arg13[%c8_53, %c0_54], %63 {strides = array<i32>} : memref<56x128xf32, #tpu.memory_space<vmem>>, vector<8x128xf32>,
    %c0_55 = arith.constant 0 : index
    %c0_56 = arith.constant 0 : index
    %65 = vector.load %arg14[%c0_55, %c0_56] : memref<8x128xf32, #tpu.memory_space<vmem>>, vector<8x128xf32>
    %c1_i32 = arith.constant 1 : i32
    %66 = tpu.dynamic_rotate %65 by %c1_i32 dim 1 : vector<8x128xf32>, i32 -> vector<8x128xf32>
    %c2_57 = arith.constant 2 : index
    %c0_58 = arith.constant 0 : index
    %67 = vector.load %arg1[%c2_57, %c0_58] : memref<7x128xf32, #tpu.memory_space<vmem>>, vector<1x128xf32>
    %68 = vector.broadcast %67 : vector<1x128xf32> to vector<8x128xf32>
    %69 = arith.mulf %66, %68 : vector<8x128xf32>
    %c16_59 = arith.constant 16 : index
    %c0_60 = arith.constant 0 : index
    %70 = vector.load %arg13[%c16_59, %c0_60] : memref<56x128xf32, #tpu.memory_space<vmem>>, vector<8x128xf32>
    tpu.vector_store %arg13[%c16_59, %c0_60], %69 {strides = array<i32>} : memref<56x128xf32, #tpu.memory_space<vmem>>, vector<8x128xf32>,
    %c0_61 = arith.constant 0 : index
    %c0_62 = arith.constant 0 : index
    %71 = vector.load %arg14[%c0_61, %c0_62] : memref<8x128xf32, #tpu.memory_space<vmem>>, vector<8x128xf32>
    %c3_63 = arith.constant 3 : index
    %c0_64 = arith.constant 0 : index
    %72 = vector.load %arg1[%c3_63, %c0_64] : memref<7x128xf32, #tpu.memory_space<vmem>>, vector<1x128xf32>
    %73 = vector.broadcast %72 : vector<1x128xf32> to vector<8x128xf32>
    %74 = arith.mulf %71, %73 : vector<8x128xf32>
    %c24_65 = arith.constant 24 : index
    %c0_66 = arith.constant 0 : index
    %75 = vector.load %arg13[%c24_65, %c0_66] : memref<56x128xf32, #tpu.memory_space<vmem>>, vector<8x128xf32>
    tpu.vector_store %arg13[%c24_65, %c0_66], %74 {strides = array<i32>} : memref<56x128xf32, #tpu.memory_space<vmem>>, vector<8x128xf32>,
    %c0_67 = arith.constant 0 : index
    %c0_68 = arith.constant 0 : index
    %76 = vector.load %arg14[%c0_67, %c0_68] : memref<8x128xf32, #tpu.memory_space<vmem>>, vector<8x128xf32>
    %c127_i32 = arith.constant 127 : i32
    %77 = tpu.dynamic_rotate %76 by %c127_i32 dim 1 : vector<8x128xf32>, i32 -> vector<8x128xf32>
    %c4_69 = arith.constant 4 : index
    %c0_70 = arith.constant 0 : index
    %78 = vector.load %arg1[%c4_69, %c0_70] : memref<7x128xf32, #tpu.memory_space<vmem>>, vector<1x128xf32>
    %79 = vector.broadcast %78 : vector<1x128xf32> to vector<8x128xf32>
    %80 = arith.mulf %77, %79 : vector<8x128xf32>
    %c32_71 = arith.constant 32 : index
    %c0_72 = arith.constant 0 : index
    %81 = vector.load %arg13[%c32_71, %c0_72] : memref<56x128xf32, #tpu.memory_space<vmem>>, vector<8x128xf32>
    tpu.vector_store %arg13[%c32_71, %c0_72], %80 {strides = array<i32>} : memref<56x128xf32, #tpu.memory_space<vmem>>, vector<8x128xf32>,
    %c0_73 = arith.constant 0 : index
    %c0_74 = arith.constant 0 : index
    %82 = vector.load %arg14[%c0_73, %c0_74] : memref<8x128xf32, #tpu.memory_space<vmem>>, vector<8x128xf32>
    %c126_i32 = arith.constant 126 : i32
    %83 = tpu.dynamic_rotate %82 by %c126_i32 dim 1 : vector<8x128xf32>, i32 -> vector<8x128xf32>
    %c5_75 = arith.constant 5 : index
    %c0_76 = arith.constant 0 : index
    %84 = vector.load %arg1[%c5_75, %c0_76] : memref<7x128xf32, #tpu.memory_space<vmem>>, vector<1x128xf32>
    %85 = vector.broadcast %84 : vector<1x128xf32> to vector<8x128xf32>
    %86 = arith.mulf %83, %85 : vector<8x128xf32>
    %c40_77 = arith.constant 40 : index
    %c0_78 = arith.constant 0 : index
    %87 = vector.load %arg13[%c40_77, %c0_78] : memref<56x128xf32, #tpu.memory_space<vmem>>, vector<8x128xf32>
    tpu.vector_store %arg13[%c40_77, %c0_78], %86 {strides = array<i32>} : memref<56x128xf32, #tpu.memory_space<vmem>>, vector<8x128xf32>,
    %c0_79 = arith.constant 0 : index
    %c0_80 = arith.constant 0 : index
    %88 = vector.load %arg14[%c0_79, %c0_80] : memref<8x128xf32, #tpu.memory_space<vmem>>, vector<8x128xf32>
    %c125_i32 = arith.constant 125 : i32
    %89 = tpu.dynamic_rotate %88 by %c125_i32 dim 1 : vector<8x128xf32>, i32 -> vector<8x128xf32>
    %c6_81 = arith.constant 6 : index
    %c0_82 = arith.constant 0 : index
    %90 = vector.load %arg1[%c6_81, %c0_82] : memref<7x128xf32, #tpu.memory_space<vmem>>, vector<1x128xf32>
    %91 = vector.broadcast %90 : vector<1x128xf32> to vector<8x128xf32>
    %92 = arith.mulf %89, %91 : vector<8x128xf32>
    %c48_83 = arith.constant 48 : index
    %c0_84 = arith.constant 0 : index
    %93 = vector.load %arg13[%c48_83, %c0_84] : memref<56x128xf32, #tpu.memory_space<vmem>>, vector<8x128xf32>
    tpu.vector_store %arg13[%c48_83, %c0_84], %92 {strides = array<i32>} : memref<56x128xf32, #tpu.memory_space<vmem>>, vector<8x128xf32>,
    %c0_85 = arith.constant 0 : index
    %c0_86 = arith.constant 0 : index
    %94 = vector.load %arg5[%c0_85, %c0_86] : memref<8x56xf32, #tpu.memory_space<vmem>>, vector<8x56xf32>
    %c0_87 = arith.constant 0 : index
    %c0_88 = arith.constant 0 : index
    %95 = vector.load %arg13[%c0_87, %c0_88] : memref<56x128xf32, #tpu.memory_space<vmem>>, vector<56x128xf32>
    %cst_89 = arith.constant dense<0.000000e+00> : vector<8x128xf32>
    %96 = tpu.matmul %94, %95, %cst_89 {dimension_numbers = #tpu.dot_dimension_numbers<[1], [0], [0], [1], [0, 0, 1, 1], [], []>} : vector<8x56xf32>, vector<56x128xf32>, vector<8x128xf32> -> vector<8x128xf32>
    %c0_90 = arith.constant 0 : index
    %c0_91 = arith.constant 0 : index
    %97 = vector.load %arg6[%c0_90, %c0_91] : memref<8x1xf32, #tpu.memory_space<vmem>>, vector<8x1xf32>
    %98 = vector.broadcast %97 : vector<8x1xf32> to vector<8x128xf32>
    %99 = arith.addf %96, %98 : vector<8x128xf32>
    %cst_92 = arith.constant 0.000000e+00 : f32
    %100 = vector.broadcast %cst_92 : f32 to vector<8x128xf32>
    %101 = arith.maximumf %99, %100 : vector<8x128xf32>
    %c0_93 = arith.constant 0 : index
    %c0_94 = arith.constant 0 : index
    %102 = vector.load %arg14[%c0_93, %c0_94] : memref<8x128xf32, #tpu.memory_space<vmem>>, vector<8x128xf32>
    tpu.vector_store %arg14[%c0_93, %c0_94], %101 {strides = array<i32>} : memref<8x128xf32, #tpu.memory_space<vmem>>, vector<8x128xf32>,
    %c0_95 = arith.constant 0 : index
    %c0_96 = arith.constant 0 : index
    %103 = vector.load %arg14[%c0_95, %c0_96] : memref<8x128xf32, #tpu.memory_space<vmem>>, vector<8x128xf32>
    %c24_i32_97 = arith.constant 24 : i32
    %104 = tpu.dynamic_rotate %103 by %c24_i32_97 dim 1 : vector<8x128xf32>, i32 -> vector<8x128xf32>
    %c0_98 = arith.constant 0 : index
    %c0_99 = arith.constant 0 : index
    %105 = vector.load %arg2[%c0_98, %c0_99] : memref<7x128xf32, #tpu.memory_space<vmem>>, vector<1x128xf32>
    %106 = vector.broadcast %105 : vector<1x128xf32> to vector<8x128xf32>
    %107 = arith.mulf %104, %106 : vector<8x128xf32>
    %c0_100 = arith.constant 0 : index
    %c0_101 = arith.constant 0 : index
    %108 = vector.load %arg13[%c0_100, %c0_101] : memref<56x128xf32, #tpu.memory_space<vmem>>, vector<8x128xf32>
    tpu.vector_store %arg13[%c0_100, %c0_101], %107 {strides = array<i32>} : memref<56x128xf32, #tpu.memory_space<vmem>>, vector<8x128xf32>,
    %c0_102 = arith.constant 0 : index
    %c0_103 = arith.constant 0 : index
    %109 = vector.load %arg14[%c0_102, %c0_103] : memref<8x128xf32, #tpu.memory_space<vmem>>, vector<8x128xf32>
    %c16_i32_104 = arith.constant 16 : i32
    %110 = tpu.dynamic_rotate %109 by %c16_i32_104 dim 1 : vector<8x128xf32>, i32 -> vector<8x128xf32>
    %c1_105 = arith.constant 1 : index
    %c0_106 = arith.constant 0 : index
    %111 = vector.load %arg2[%c1_105, %c0_106] : memref<7x128xf32, #tpu.memory_space<vmem>>, vector<1x128xf32>
    %112 = vector.broadcast %111 : vector<1x128xf32> to vector<8x128xf32>
    %113 = arith.mulf %110, %112 : vector<8x128xf32>
    %c8_107 = arith.constant 8 : index
    %c0_108 = arith.constant 0 : index
    %114 = vector.load %arg13[%c8_107, %c0_108] : memref<56x128xf32, #tpu.memory_space<vmem>>, vector<8x128xf32>
    tpu.vector_store %arg13[%c8_107, %c0_108], %113 {strides = array<i32>} : memref<56x128xf32, #tpu.memory_space<vmem>>, vector<8x128xf32>,
    %c0_109 = arith.constant 0 : index
    %c0_110 = arith.constant 0 : index
    %115 = vector.load %arg14[%c0_109, %c0_110] : memref<8x128xf32, #tpu.memory_space<vmem>>, vector<8x128xf32>
    %c8_i32_111 = arith.constant 8 : i32
    %116 = tpu.dynamic_rotate %115 by %c8_i32_111 dim 1 : vector<8x128xf32>, i32 -> vector<8x128xf32>
    %c2_112 = arith.constant 2 : index
    %c0_113 = arith.constant 0 : index
    %117 = vector.load %arg2[%c2_112, %c0_113] : memref<7x128xf32, #tpu.memory_space<vmem>>, vector<1x128xf32>
    %118 = vector.broadcast %117 : vector<1x128xf32> to vector<8x128xf32>
    %119 = arith.mulf %116, %118 : vector<8x128xf32>
    %c16_114 = arith.constant 16 : index
    %c0_115 = arith.constant 0 : index
    %120 = vector.load %arg13[%c16_114, %c0_115] : memref<56x128xf32, #tpu.memory_space<vmem>>, vector<8x128xf32>
    tpu.vector_store %arg13[%c16_114, %c0_115], %119 {strides = array<i32>} : memref<56x128xf32, #tpu.memory_space<vmem>>, vector<8x128xf32>,
    %c0_116 = arith.constant 0 : index
    %c0_117 = arith.constant 0 : index
    %121 = vector.load %arg14[%c0_116, %c0_117] : memref<8x128xf32, #tpu.memory_space<vmem>>, vector<8x128xf32>
    %c3_118 = arith.constant 3 : index
    %c0_119 = arith.constant 0 : index
    %122 = vector.load %arg2[%c3_118, %c0_119] : memref<7x128xf32, #tpu.memory_space<vmem>>, vector<1x128xf32>
    %123 = vector.broadcast %122 : vector<1x128xf32> to vector<8x128xf32>
    %124 = arith.mulf %121, %123 : vector<8x128xf32>
    %c24_120 = arith.constant 24 : index
    %c0_121 = arith.constant 0 : index
    %125 = vector.load %arg13[%c24_120, %c0_121] : memref<56x128xf32, #tpu.memory_space<vmem>>, vector<8x128xf32>
    tpu.vector_store %arg13[%c24_120, %c0_121], %124 {strides = array<i32>} : memref<56x128xf32, #tpu.memory_space<vmem>>, vector<8x128xf32>,
    %c0_122 = arith.constant 0 : index
    %c0_123 = arith.constant 0 : index
    %126 = vector.load %arg14[%c0_122, %c0_123] : memref<8x128xf32, #tpu.memory_space<vmem>>, vector<8x128xf32>
    %c120_i32_124 = arith.constant 120 : i32
    %127 = tpu.dynamic_rotate %126 by %c120_i32_124 dim 1 : vector<8x128xf32>, i32 -> vector<8x128xf32>
    %c4_125 = arith.constant 4 : index
    %c0_126 = arith.constant 0 : index
    %128 = vector.load %arg2[%c4_125, %c0_126] : memref<7x128xf32, #tpu.memory_space<vmem>>, vector<1x128xf32>
    %129 = vector.broadcast %128 : vector<1x128xf32> to vector<8x128xf32>
    %130 = arith.mulf %127, %129 : vector<8x128xf32>
    %c32_127 = arith.constant 32 : index
    %c0_128 = arith.constant 0 : index
    %131 = vector.load %arg13[%c32_127, %c0_128] : memref<56x128xf32, #tpu.memory_space<vmem>>, vector<8x128xf32>
    tpu.vector_store %arg13[%c32_127, %c0_128], %130 {strides = array<i32>} : memref<56x128xf32, #tpu.memory_space<vmem>>, vector<8x128xf32>,
    %c0_129 = arith.constant 0 : index
    %c0_130 = arith.constant 0 : index
    %132 = vector.load %arg14[%c0_129, %c0_130] : memref<8x128xf32, #tpu.memory_space<vmem>>, vector<8x128xf32>
    %c112_i32_131 = arith.constant 112 : i32
    %133 = tpu.dynamic_rotate %132 by %c112_i32_131 dim 1 : vector<8x128xf32>, i32 -> vector<8x128xf32>
    %c5_132 = arith.constant 5 : index
    %c0_133 = arith.constant 0 : index
    %134 = vector.load %arg2[%c5_132, %c0_133] : memref<7x128xf32, #tpu.memory_space<vmem>>, vector<1x128xf32>
    %135 = vector.broadcast %134 : vector<1x128xf32> to vector<8x128xf32>
    %136 = arith.mulf %133, %135 : vector<8x128xf32>
    %c40_134 = arith.constant 40 : index
    %c0_135 = arith.constant 0 : index
    %137 = vector.load %arg13[%c40_134, %c0_135] : memref<56x128xf32, #tpu.memory_space<vmem>>, vector<8x128xf32>
    tpu.vector_store %arg13[%c40_134, %c0_135], %136 {strides = array<i32>} : memref<56x128xf32, #tpu.memory_space<vmem>>, vector<8x128xf32>,
    %c0_136 = arith.constant 0 : index
    %c0_137 = arith.constant 0 : index
    %138 = vector.load %arg14[%c0_136, %c0_137] : memref<8x128xf32, #tpu.memory_space<vmem>>, vector<8x128xf32>
    %c104_i32_138 = arith.constant 104 : i32
    %139 = tpu.dynamic_rotate %138 by %c104_i32_138 dim 1 : vector<8x128xf32>, i32 -> vector<8x128xf32>
    %c6_139 = arith.constant 6 : index
    %c0_140 = arith.constant 0 : index
    %140 = vector.load %arg2[%c6_139, %c0_140] : memref<7x128xf32, #tpu.memory_space<vmem>>, vector<1x128xf32>
    %141 = vector.broadcast %140 : vector<1x128xf32> to vector<8x128xf32>
    %142 = arith.mulf %139, %141 : vector<8x128xf32>
    %c48_141 = arith.constant 48 : index
    %c0_142 = arith.constant 0 : index
    %143 = vector.load %arg13[%c48_141, %c0_142] : memref<56x128xf32, #tpu.memory_space<vmem>>, vector<8x128xf32>
    tpu.vector_store %arg13[%c48_141, %c0_142], %142 {strides = array<i32>} : memref<56x128xf32, #tpu.memory_space<vmem>>, vector<8x128xf32>,
    %c0_143 = arith.constant 0 : index
    %c0_144 = arith.constant 0 : index
    %144 = vector.load %arg7[%c0_143, %c0_144] : memref<8x56xf32, #tpu.memory_space<vmem>>, vector<8x56xf32>
    %c0_145 = arith.constant 0 : index
    %c0_146 = arith.constant 0 : index
    %145 = vector.load %arg13[%c0_145, %c0_146] : memref<56x128xf32, #tpu.memory_space<vmem>>, vector<56x128xf32>
    %cst_147 = arith.constant dense<0.000000e+00> : vector<8x128xf32>
    %146 = tpu.matmul %144, %145, %cst_147 {dimension_numbers = #tpu.dot_dimension_numbers<[1], [0], [0], [1], [0, 0, 1, 1], [], []>} : vector<8x56xf32>, vector<56x128xf32>, vector<8x128xf32> -> vector<8x128xf32>
    %c0_148 = arith.constant 0 : index
    %c0_149 = arith.constant 0 : index
    %147 = vector.load %arg8[%c0_148, %c0_149] : memref<8x1xf32, #tpu.memory_space<vmem>>, vector<8x1xf32>
    %148 = vector.broadcast %147 : vector<8x1xf32> to vector<8x128xf32>
    %149 = arith.addf %146, %148 : vector<8x128xf32>
    %cst_150 = arith.constant 0.000000e+00 : f32
    %150 = vector.broadcast %cst_150 : f32 to vector<8x128xf32>
    %151 = arith.maximumf %149, %150 : vector<8x128xf32>
    %c0_151 = arith.constant 0 : index
    %c0_152 = arith.constant 0 : index
    %152 = vector.load %arg14[%c0_151, %c0_152] : memref<8x128xf32, #tpu.memory_space<vmem>>, vector<8x128xf32>
    tpu.vector_store %arg14[%c0_151, %c0_152], %151 {strides = array<i32>} : memref<8x128xf32, #tpu.memory_space<vmem>>, vector<8x128xf32>,
    %c0_153 = arith.constant 0 : index
    %c0_154 = arith.constant 0 : index
    %153 = vector.load %arg14[%c0_153, %c0_154] : memref<8x128xf32, #tpu.memory_space<vmem>>, vector<8x128xf32>
    %c3_i32_155 = arith.constant 3 : i32
    %154 = tpu.dynamic_rotate %153 by %c3_i32_155 dim 1 : vector<8x128xf32>, i32 -> vector<8x128xf32>
    %c0_156 = arith.constant 0 : index
    %c0_157 = arith.constant 0 : index
    %155 = vector.load %arg1[%c0_156, %c0_157] : memref<7x128xf32, #tpu.memory_space<vmem>>, vector<1x128xf32>
    %156 = vector.broadcast %155 : vector<1x128xf32> to vector<8x128xf32>
    %157 = arith.mulf %154, %156 : vector<8x128xf32>
    %c0_158 = arith.constant 0 : index
    %c0_159 = arith.constant 0 : index
    %158 = vector.load %arg13[%c0_158, %c0_159] : memref<56x128xf32, #tpu.memory_space<vmem>>, vector<8x128xf32>
    tpu.vector_store %arg13[%c0_158, %c0_159], %157 {strides = array<i32>} : memref<56x128xf32, #tpu.memory_space<vmem>>, vector<8x128xf32>,
    %c0_160 = arith.constant 0 : index
    %c0_161 = arith.constant 0 : index
    %159 = vector.load %arg14[%c0_160, %c0_161] : memref<8x128xf32, #tpu.memory_space<vmem>>, vector<8x128xf32>
    %c2_i32_162 = arith.constant 2 : i32
    %160 = tpu.dynamic_rotate %159 by %c2_i32_162 dim 1 : vector<8x128xf32>, i32 -> vector<8x128xf32>
    %c1_163 = arith.constant 1 : index
    %c0_164 = arith.constant 0 : index
    %161 = vector.load %arg1[%c1_163, %c0_164] : memref<7x128xf32, #tpu.memory_space<vmem>>, vector<1x128xf32>
    %162 = vector.broadcast %161 : vector<1x128xf32> to vector<8x128xf32>
    %163 = arith.mulf %160, %162 : vector<8x128xf32>
    %c8_165 = arith.constant 8 : index
    %c0_166 = arith.constant 0 : index
    %164 = vector.load %arg13[%c8_165, %c0_166] : memref<56x128xf32, #tpu.memory_space<vmem>>, vector<8x128xf32>
    tpu.vector_store %arg13[%c8_165, %c0_166], %163 {strides = array<i32>} : memref<56x128xf32, #tpu.memory_space<vmem>>, vector<8x128xf32>,
    %c0_167 = arith.constant 0 : index
    %c0_168 = arith.constant 0 : index
    %165 = vector.load %arg14[%c0_167, %c0_168] : memref<8x128xf32, #tpu.memory_space<vmem>>, vector<8x128xf32>
    %c1_i32_169 = arith.constant 1 : i32
    %166 = tpu.dynamic_rotate %165 by %c1_i32_169 dim 1 : vector<8x128xf32>, i32 -> vector<8x128xf32>
    %c2_170 = arith.constant 2 : index
    %c0_171 = arith.constant 0 : index
    %167 = vector.load %arg1[%c2_170, %c0_171] : memref<7x128xf32, #tpu.memory_space<vmem>>, vector<1x128xf32>
    %168 = vector.broadcast %167 : vector<1x128xf32> to vector<8x128xf32>
    %169 = arith.mulf %166, %168 : vector<8x128xf32>
    %c16_172 = arith.constant 16 : index
    %c0_173 = arith.constant 0 : index
    %170 = vector.load %arg13[%c16_172, %c0_173] : memref<56x128xf32, #tpu.memory_space<vmem>>, vector<8x128xf32>
    tpu.vector_store %arg13[%c16_172, %c0_173], %169 {strides = array<i32>} : memref<56x128xf32, #tpu.memory_space<vmem>>, vector<8x128xf32>,
    %c0_174 = arith.constant 0 : index
    %c0_175 = arith.constant 0 : index
    %171 = vector.load %arg14[%c0_174, %c0_175] : memref<8x128xf32, #tpu.memory_space<vmem>>, vector<8x128xf32>
    %c3_176 = arith.constant 3 : index
    %c0_177 = arith.constant 0 : index
    %172 = vector.load %arg1[%c3_176, %c0_177] : memref<7x128xf32, #tpu.memory_space<vmem>>, vector<1x128xf32>
    %173 = vector.broadcast %172 : vector<1x128xf32> to vector<8x128xf32>
    %174 = arith.mulf %171, %173 : vector<8x128xf32>
    %c24_178 = arith.constant 24 : index
    %c0_179 = arith.constant 0 : index
    %175 = vector.load %arg13[%c24_178, %c0_179] : memref<56x128xf32, #tpu.memory_space<vmem>>, vector<8x128xf32>
    tpu.vector_store %arg13[%c24_178, %c0_179], %174 {strides = array<i32>} : memref<56x128xf32, #tpu.memory_space<vmem>>, vector<8x128xf32>,
    %c0_180 = arith.constant 0 : index
    %c0_181 = arith.constant 0 : index
    %176 = vector.load %arg14[%c0_180, %c0_181] : memref<8x128xf32, #tpu.memory_space<vmem>>, vector<8x128xf32>
    %c127_i32_182 = arith.constant 127 : i32
    %177 = tpu.dynamic_rotate %176 by %c127_i32_182 dim 1 : vector<8x128xf32>, i32 -> vector<8x128xf32>
    %c4_183 = arith.constant 4 : index
    %c0_184 = arith.constant 0 : index
    %178 = vector.load %arg1[%c4_183, %c0_184] : memref<7x128xf32, #tpu.memory_space<vmem>>, vector<1x128xf32>
    %179 = vector.broadcast %178 : vector<1x128xf32> to vector<8x128xf32>
    %180 = arith.mulf %177, %179 : vector<8x128xf32>
    %c32_185 = arith.constant 32 : index
    %c0_186 = arith.constant 0 : index
    %181 = vector.load %arg13[%c32_185, %c0_186] : memref<56x128xf32, #tpu.memory_space<vmem>>, vector<8x128xf32>
    tpu.vector_store %arg13[%c32_185, %c0_186], %180 {strides = array<i32>} : memref<56x128xf32, #tpu.memory_space<vmem>>, vector<8x128xf32>,
    %c0_187 = arith.constant 0 : index
    %c0_188 = arith.constant 0 : index
    %182 = vector.load %arg14[%c0_187, %c0_188] : memref<8x128xf32, #tpu.memory_space<vmem>>, vector<8x128xf32>
    %c126_i32_189 = arith.constant 126 : i32
    %183 = tpu.dynamic_rotate %182 by %c126_i32_189 dim 1 : vector<8x128xf32>, i32 -> vector<8x128xf32>
    %c5_190 = arith.constant 5 : index
    %c0_191 = arith.constant 0 : index
    %184 = vector.load %arg1[%c5_190, %c0_191] : memref<7x128xf32, #tpu.memory_space<vmem>>, vector<1x128xf32>
    %185 = vector.broadcast %184 : vector<1x128xf32> to vector<8x128xf32>
    %186 = arith.mulf %183, %185 : vector<8x128xf32>
    %c40_192 = arith.constant 40 : index
    %c0_193 = arith.constant 0 : index
    %187 = vector.load %arg13[%c40_192, %c0_193] : memref<56x128xf32, #tpu.memory_space<vmem>>, vector<8x128xf32>
    tpu.vector_store %arg13[%c40_192, %c0_193], %186 {strides = array<i32>} : memref<56x128xf32, #tpu.memory_space<vmem>>, vector<8x128xf32>,
    %c0_194 = arith.constant 0 : index
    %c0_195 = arith.constant 0 : index
    %188 = vector.load %arg14[%c0_194, %c0_195] : memref<8x128xf32, #tpu.memory_space<vmem>>, vector<8x128xf32>
    %c125_i32_196 = arith.constant 125 : i32
    %189 = tpu.dynamic_rotate %188 by %c125_i32_196 dim 1 : vector<8x128xf32>, i32 -> vector<8x128xf32>
    %c6_197 = arith.constant 6 : index
    %c0_198 = arith.constant 0 : index
    %190 = vector.load %arg1[%c6_197, %c0_198] : memref<7x128xf32, #tpu.memory_space<vmem>>, vector<1x128xf32>
    %191 = vector.broadcast %190 : vector<1x128xf32> to vector<8x128xf32>
    %192 = arith.mulf %189, %191 : vector<8x128xf32>
    %c48_199 = arith.constant 48 : index
    %c0_200 = arith.constant 0 : index
    %193 = vector.load %arg13[%c48_199, %c0_200] : memref<56x128xf32, #tpu.memory_space<vmem>>, vector<8x128xf32>
    tpu.vector_store %arg13[%c48_199, %c0_200], %192 {strides = array<i32>} : memref<56x128xf32, #tpu.memory_space<vmem>>, vector<8x128xf32>,
    %c0_201 = arith.constant 0 : index
    %c0_202 = arith.constant 0 : index
    %194 = vector.load %arg9[%c0_201, %c0_202] : memref<192x56xf32, #tpu.memory_space<vmem>>, vector<192x56xf32>
    %c0_203 = arith.constant 0 : index
    %c0_204 = arith.constant 0 : index
    %195 = vector.load %arg13[%c0_203, %c0_204] : memref<56x128xf32, #tpu.memory_space<vmem>>, vector<56x128xf32>
    %cst_205 = arith.constant dense<0.000000e+00> : vector<192x128xf32>
    %196 = tpu.matmul %194, %195, %cst_205 {dimension_numbers = #tpu.dot_dimension_numbers<[1], [0], [0], [1], [0, 0, 1, 1], [], []>} : vector<192x56xf32>, vector<56x128xf32>, vector<192x128xf32> -> vector<192x128xf32>
    %c0_206 = arith.constant 0 : index
    %c0_207 = arith.constant 0 : index
    %197 = vector.load %arg10[%c0_206, %c0_207] : memref<192x1xf32, #tpu.memory_space<vmem>>, vector<192x1xf32>
    %198 = vector.broadcast %197 : vector<192x1xf32> to vector<192x128xf32>
    %199 = arith.addf %196, %198 : vector<192x128xf32>
    %cst_208 = arith.constant 0.000000e+00 : f32
    %200 = vector.broadcast %cst_208 : f32 to vector<192x128xf32>
    %201 = arith.maximumf %199, %200 : vector<192x128xf32>
    %c0_209 = arith.constant 0 : index
    %c0_210 = arith.constant 0 : index
    %c0_211 = arith.constant 0 : index
    %202 = vector.load %arg12[%c0_209, %c0_210, %c0_211] : memref<1x192x128xf32, #tpu.memory_space<vmem>>, vector<1x192x128xf32>
    %203 = vector.shape_cast %202 : vector<1x192x128xf32> to vector<192x128xf32>
    %204 = vector.shape_cast %201 : vector<192x128xf32> to vector<1x192x128xf32>
    tpu.vector_store %arg12[%c0_209, %c0_210, %c0_211], %204 {strides = array<i32>} : memref<1x192x128xf32, #tpu.memory_space<vmem>>, vector<1x192x128xf32>,
    return
  }
  func.func @transform_0(%arg0: i32) -> (i32, i32) {
    %c0_i32 = arith.constant 0 : i32
    %c0_i32_0 = arith.constant 0 : i32
    %c0_i32_1 = arith.constant 0 : i32
    return %c0_i32, %c0_i32_0 : i32, i32
  }
  func.func @transform_1(%arg0: i32) -> (i32, i32) {
    %c0_i32 = arith.constant 0 : i32
    %c0_i32_0 = arith.constant 0 : i32
    %c0_i32_1 = arith.constant 0 : i32
    return %c0_i32, %c0_i32_0 : i32, i32
  }
  func.func @transform_2(%arg0: i32) -> (i32, i32) {
    %c0_i32 = arith.constant 0 : i32
    %c0_i32_0 = arith.constant 0 : i32
    %c0_i32_1 = arith.constant 0 : i32
    return %c0_i32, %c0_i32_0 : i32, i32
  }
  func.func @transform_3(%arg0: i32) -> (i32, i32) {
    %c0_i32 = arith.constant 0 : i32
    %c0_i32_0 = arith.constant 0 : i32
    %c0_i32_1 = arith.constant 0 : i32
    return %c0_i32, %c0_i32_0 : i32, i32
  }
  func.func @transform_4(%arg0: i32) -> (i32, i32) {
    %c0_i32 = arith.constant 0 : i32
    %c0_i32_0 = arith.constant 0 : i32
    %c0_i32_1 = arith.constant 0 : i32
    return %c0_i32, %c0_i32_0 : i32, i32
  }
  func.func @transform_5(%arg0: i32) -> (i32, i32) {
    %c0_i32 = arith.constant 0 : i32
    %c0_i32_0 = arith.constant 0 : i32
    %c0_i32_1 = arith.constant 0 : i32
    return %c0_i32, %c0_i32_0 : i32, i32
  }
  func.func @transform_6(%arg0: i32) -> (i32, i32) {
    %c0_i32 = arith.constant 0 : i32
    %c0_i32_0 = arith.constant 0 : i32
    %c0_i32_1 = arith.constant 0 : i32
    return %c0_i32, %c0_i32_0 : i32, i32
  }
  func.func @transform_7(%arg0: i32) -> (i32, i32) {
    %c0_i32 = arith.constant 0 : i32
    %c0_i32_0 = arith.constant 0 : i32
    %c0_i32_1 = arith.constant 0 : i32
    return %c0_i32, %c0_i32_0 : i32, i32
  }
  func.func @transform_8(%arg0: i32) -> (i32, i32) {
    %c0_i32 = arith.constant 0 : i32
    %c0_i32_0 = arith.constant 0 : i32
    %c0_i32_1 = arith.constant 0 : i32
    return %c0_i32, %c0_i32_0 : i32, i32
  }
  func.func @transform_9(%arg0: i32) -> (i32, i32) {
    %c0_i32 = arith.constant 0 : i32
    %c0_i32_0 = arith.constant 0 : i32
    %c0_i32_1 = arith.constant 0 : i32
    return %c0_i32, %c0_i32_0 : i32, i32
  }
  func.func @transform_10(%arg0: i32) -> (i32, i32, i32) {
    %c1_i32 = arith.constant 1 : i32
    %c0_i32 = arith.constant 0 : i32
    %c0_i32_0 = arith.constant 0 : i32
    return %arg0, %c1_i32, %c0_i32 : i32, i32, i32
  }
  func.func @transform_11(%arg0: i32) -> (i32, i32, i32) {
    %c0_i32 = arith.constant 0 : i32
    %c0_i32_0 = arith.constant 0 : i32
    %c0_i32_1 = arith.constant 0 : i32
    return %arg0, %c0_i32, %c0_i32_0 : i32, i32, i32
  }
}

</mosaic_0001>

<llo_original>
// kernel: inception_c_forward.5
$region0: #{inception_c_forward.5}
  #allocation0 [shape = 'u32[]', space=smem, size = 0x4, offset = 0x4, fixed_abs, tag = 'smem constant byte address 0x4 - core index']
  #allocation1 [shape = 'u32[72,128]{1,0:T(1,128)}', space=vmem, size = 0x9000, scoped, tag = 'internal scratch']
  #allocation2 [shape = 'f32[56,128]{1,0:T(8,128)}', space=vmem, size = 0x7000, scoped, tag = 'scratch operand']
  #allocation3 [shape = 'f32[8,128]{1,0:T(8,128)}', space=vmem, size = 0x1000, scoped, tag = 'scratch operand']
  %s0 = inlined_call_operand.vmem [shape: f32[7,128], index: 0, kind: input, shape index: {}]
  %s1 = inlined_call_operand.vmem [shape: f32[7,128], index: 1, kind: input, shape index: {}]
  %s2 = inlined_call_operand.vmem [shape: f32[8,56], index: 2, kind: input, shape index: {}]
  %s3 = inlined_call_operand.vmem [shape: f32[8,1], index: 3, kind: input, shape index: {}]
  %s4 = inlined_call_operand.vmem [shape: f32[192,56], index: 4, kind: input, shape index: {}]
  %s5 = inlined_call_operand.vmem [shape: f32[192,1], index: 5, kind: input, shape index: {}]
  %s6 = inlined_call_operand.vmem [shape: f32[2,16,128], index: 6, kind: input, shape index: {}]
  %s7 = inlined_call_operand.vmem [shape: f32[2,192,128], index: 7, kind: output, shape index: {}]
  %s8 = sld [smem:[#allocation0]]
  $region61: #{inception_c_forward.5} parent=0
    _
  %s10 = ssub.s32 1, %s8
  %s11 = scalar_select 0, %s10, %s8
  loop: start=0, step=1, limit=4
  $region2: #{inception_c_forward.5} parent=0 // loop_pre_header
    _
  $region3: #{inception_c_forward.5} parent=0 // loop_header
    %s13 = sphi 0, %s17
    %p14 = scmp.ge.s32.totalorder %s13, 4
    %s21 = sphi 0, %s21
    %s23 = sphi 0, %s21
    %s24 = sphi 0, %s23
    %s38 = sphi 0, %s24
    %s42 = sphi 0, %s42
    %s44 = sphi 0, %s42
    %s45 = sphi 0, %s44
    %s59 = sphi 0, %s45
    %s63 = sphi 0, %s63
    %s65 = sphi 0, %s63
    %s66 = sphi 0, %s65
    %s80 = sphi 0, %s66
    %s84 = sphi 0, %s84
    %s86 = sphi 0, %s84
    %s87 = sphi 0, %s86
    %s101 = sphi 0, %s87
    %s105 = sphi 0, %s105
    %s107 = sphi 0, %s105
    %s108 = sphi 0, %s107
    %s122 = sphi 0, %s108
    %s126 = sphi 0, %s126
    %s128 = sphi 0, %s126
    %s129 = sphi 0, %s128
    %s143 = sphi 0, %s129
    %s149 = sphi 0, %s151
    %s152 = sphi 0, %s149
    %s153 = sphi 0, %s152
    %s169 = sphi 0, %s153
    %s175 = sphi 0, %s177
    %s178 = sphi 0, %s175
    %s179 = sphi 0, %s178
    %s195 = sphi 0, %s179
  $region4: #{inception_c_forward.5} parent=0 // loop_header_branch
    %16 = sbr.rel (%p14) target = $region8
  $region5: #{inception_c_forward.5} parent=0 // loop_body
    %s18 = ssub.s32 %s13, 1
    %s19 = ssub.s32 %s13, 2
    %s20 = sadd.s32 %s13, 1
    %s22 = sadd.s32 %s21, 1
    %p25 = scmp.eq.s32.totalorder %s13, 1
    %p26 = scmp.ne.s32.totalorder %s21, %s23
    %p27 = scmp.eq.s32.totalorder %s13, 0
    %p28 = por %p26, %p27
    %p29 = scmp.ne.s32.totalorder %s21, %s23
    %p30 = scmp.eq.s32.totalorder %s18, 1
    %p31 = por %p29, %p30
    %p32 = scmp.ne.s32.totalorder %s23, %s24
    %p33 = scmp.eq.s32.totalorder %s18, 0
    %p34 = por %p32, %p33
    %p35 = scmp.ne.s32.totalorder %s23, %s24
    %p36 = scmp.eq.s32.totalorder %s19, 1
    %p37 = por %p35, %p36
    %p39 = scmp.ne.s32.totalorder %s24, %s38
    %p40 = scmp.eq.s32.totalorder %s19, 0
    %p41 = por %p39, %p40
    %s43 = sadd.s32 %s42, 1
    %p46 = scmp.eq.s32.totalorder %s13, 1
    %p47 = scmp.ne.s32.totalorder %s42, %s44
    %p48 = scmp.eq.s32.totalorder %s13, 0
    %p49 = por %p47, %p48
    %p50 = scmp.ne.s32.totalorder %s42, %s44
    %p51 = scmp.eq.s32.totalorder %s18, 1
    %p52 = por %p50, %p51
    %p53 = scmp.ne.s32.totalorder %s44, %s45
    %p54 = scmp.eq.s32.totalorder %s18, 0
    %p55 = por %p53, %p54
    %p56 = scmp.ne.s32.totalorder %s44, %s45
    %p57 = scmp.eq.s32.totalorder %s19, 1
    %p58 = por %p56, %p57
    %p60 = scmp.ne.s32.totalorder %s45, %s59
    %p61 = scmp.eq.s32.totalorder %s19, 0
    %p62 = por %p60, %p61
    %s64 = sadd.s32 %s63, 1
    %p67 = scmp.eq.s32.totalorder %s13, 1
    %p68 = scmp.ne.s32.totalorder %s63, %s65
    %p69 = scmp.eq.s32.totalorder %s13, 0
    %p70 = por %p68, %p69
    %p71 = scmp.ne.s32.totalorder %s63, %s65
    %p72 = scmp.eq.s32.totalorder %s18, 1
    %p73 = por %p71, %p72
    %p74 = scmp.ne.s32.totalorder %s65, %s66
    %p75 = scmp.eq.s32.totalorder %s18, 0
    %p76 = por %p74, %p75
    %p77 = scmp.ne.s32.totalorder %s65, %s66
    %p78 = scmp.eq.s32.totalorder %s19, 1
    %p79 = por %p77, %p78
    %p81 = scmp.ne.s32.totalorder %s66, %s80
    %p82 = scmp.eq.s32.totalorder %s19, 0
    %p83 = por %p81, %p82
    %s85 = sadd.s32 %s84, 1
    %p88 = scmp.eq.s32.totalorder %s13, 1
    %p89 = scmp.ne.s32.totalorder %s84, %s86
    %p90 = scmp.eq.s32.totalorder %s13, 0
    %p91 = por %p89, %p90
    %p92 = scmp.ne.s32.totalorder %s84, %s86
    %p93 = scmp.eq.s32.totalorder %s18, 1
    %p94 = por %p92, %p93
    %p95 = scmp.ne.s32.totalorder %s86, %s87
    %p96 = scmp.eq.s32.totalorder %s18, 0
    %p97 = por %p95, %p96
    %p98 = scmp.ne.s32.totalorder %s86, %s87
    %p99 = scmp.eq.s32.totalorder %s19, 1
    %p100 = por %p98, %p99
    %p102 = scmp.ne.s32.totalorder %s87, %s101
    %p103 = scmp.eq.s32.totalorder %s19, 0
    %p104 = por %p102, %p103
    %s106 = sadd.s32 %s105, 1
    %p109 = scmp.eq.s32.totalorder %s13, 1
    %p110 = scmp.ne.s32.totalorder %s105, %s107
    %p111 = scmp.eq.s32.totalorder %s13, 0
    %p112 = por %p110, %p111
    %p113 = scmp.ne.s32.totalorder %s105, %s107
    %p114 = scmp.eq.s32.totalorder %s18, 1
    %p115 = por %p113, %p114
    %p116 = scmp.ne.s32.totalorder %s107, %s108
    %p117 = scmp.eq.s32.totalorder %s18, 0
    %p118 = por %p116, %p117
    %p119 = scmp.ne.s32.totalorder %s107, %s108
    %p120 = scmp.eq.s32.totalorder %s19, 1
    %p121 = por %p119, %p120
    %p123 = scmp.ne.s32.totalorder %s108, %s122
    %p124 = scmp.eq.s32.totalorder %s19, 0
    %p125 = por %p123, %p124
    %s127 = sadd.s32 %s126, 1
    %p130 = scmp.eq.s32.totalorder %s13, 1
    %p131 = scmp.ne.s32.totalorder %s126, %s128
    %p132 = scmp.eq.s32.totalorder %s13, 0
    %p133 = por %p131, %p132
    %p134 = scmp.ne.s32.totalorder %s126, %s128
    %p135 = scmp.eq.s32.totalorder %s18, 1
    %p136 = por %p134, %p135
    %p137 = scmp.ne.s32.totalorder %s128, %s129
    %p138 = scmp.eq.s32.totalorder %s18, 0
    %p139 = por %p137, %p138
    %p140 = scmp.ne.s32.totalorder %s128, %s129
    %p141 = scmp.eq.s32.totalorder %s19, 1
    %p142 = por %p140, %p141
    %p144 = scmp.ne.s32.totalorder %s129, %s143
    %p145 = scmp.eq.s32.totalorder %s19, 0
    %p146 = por %p144, %p145
    %s147 = ssub.s32 %s13, %s20
    %p148 = scmp.eq.s32.totalorder %s147, 0
    %s150 = sadd.s32 %s149, 1
    %s151 = scalar_select %p148, %s149, %s150
    %p154 = pneg %p148
    %p155 = scmp.eq.s32.totalorder %s13, 1
    %p156 = por %p154, %p155
    %p157 = scmp.ne.s32.totalorder %s149, %s152
    %p158 = scmp.eq.s32.totalorder %s13, 0
    %p159 = por %p157, %p158
    %p160 = scmp.ne.s32.totalorder %s149, %s152
    %p161 = scmp.eq.s32.totalorder %s18, 1
    %p162 = por %p160, %p161
    %p163 = scmp.ne.s32.totalorder %s152, %s153
    %p164 = scmp.eq.s32.totalorder %s18, 0
    %p165 = por %p163, %p164
    %p166 = scmp.ne.s32.totalorder %s152, %s153
    %p167 = scmp.eq.s32.totalorder %s19, 1
    %p168 = por %p166, %p167
    %p170 = scmp.ne.s32.totalorder %s153, %s169
    %p171 = scmp.eq.s32.totalorder %s19, 0
    %p172 = por %p170, %p171
    %s173 = ssub.s32 %s13, %s20
    %p174 = scmp.eq.s32.totalorder %s173, 0
    %s176 = sadd.s32 %s175, 1
    %s177 = scalar_select %p174, %s175, %s176
    %p180 = pneg %p174
    %p181 = scmp.eq.s32.totalorder %s13, 1
    %p182 = por %p180, %p181
    %p183 = scmp.ne.s32.totalorder %s175, %s178
    %p184 = scmp.eq.s32.totalorder %s13, 0
    %p185 = por %p183, %p184
    %p186 = scmp.ne.s32.totalorder %s175, %s178
    %p187 = scmp.eq.s32.totalorder %s18, 1
    %p188 = por %p186, %p187
    %p189 = scmp.ne.s32.totalorder %s178, %s179
    %p190 = scmp.eq.s32.totalorder %s18, 0
    %p191 = por %p189, %p190
    %p192 = scmp.ne.s32.totalorder %s178, %s179
    %p193 = scmp.eq.s32.totalorder %s19, 1
    %p194 = por %p192, %p193
    %p196 = scmp.ne.s32.totalorder %s179, %s195
    %p197 = scmp.eq.s32.totalorder %s19, 0
    %p198 = por %p196, %p197
    %p199 = scmp.le.s32.totalorder 1, %s13
    %p200 = scmp.lt.s32.totalorder %s13, 3
    %p201 = pnand %p199, %p200
    %p202 = pneg %p201
    // Predicated region
    $region9: #{inception_c_forward.5} parent=5 // pred_check
      _
    $region10: #{inception_c_forward.5} parent=5 // pred_check_branch
      %204 = sbr.rel (%p201) target = $region12
    $region11: #{inception_c_forward.5} parent=5 // pred_region
      %s205 = ssub.s32 %s13, 1
      // Predicated region
      $region13: #{inception_c_forward.5} parent=11 // pred_check
        %p206 = pneg %p34
      $region14: #{inception_c_forward.5} parent=11 // pred_check_branch
        %208 = sbr.rel (%p206) target = $region16
      $region15: #{inception_c_forward.5} parent=11 // pred_region
        _
      $region16: #{inception_c_forward.5} parent=11 // pred_fallthru
        _
      // Predicated region
      $region17: #{inception_c_forward.5} parent=11 // pred_check
        %p209 = pneg %p55
      $region18: #{inception_c_forward.5} parent=11 // pred_check_branch
        %211 = sbr.rel (%p209) target = $region20
      $region19: #{inception_c_forward.5} parent=11 // pred_region
        _
      $region20: #{inception_c_forward.5} parent=11 // pred_fallthru
        _
      // Predicated region
      $region21: #{inception_c_forward.5} parent=11 // pred_check
        %p212 = pneg %p76
      $region22: #{inception_c_forward.5} parent=11 // pred_check_branch
        %214 = sbr.rel (%p212) target = $region24
      $region23: #{inception_c_forward.5} parent=11 // pred_region
        _
      $region24: #{inception_c_forward.5} parent=11 // pred_fallthru
        _
      // Predicated region
      $region25: #{inception_c_forward.5} parent=11 // pred_check
        %p215 = pneg %p97
      $region26: #{inception_c_forward.5} parent=11 // pred_check_branch
        %217 = sbr.rel (%p215) target = $region28
      $region27: #{inception_c_forward.5} parent=11 // pred_region
        _
      $region28: #{inception_c_forward.5} parent=11 // pred_fallthru
        _
      // Predicated region
      $region29: #{inception_c_forward.5} parent=11 // pred_check
        %p218 = pneg %p118
      $region30: #{inception_c_forward.5} parent=11 // pred_check_branch
        %220 = sbr.rel (%p218) target = $region32
      $region31: #{inception_c_forward.5} parent=11 // pred_region
        _
      $region32: #{inception_c_forward.5} parent=11 // pred_fallthru
        _
      // Predicated region
      $region33: #{inception_c_forward.5} parent=11 // pred_check
        %p221 = pneg %p139
      $region34: #{inception_c_forward.5} parent=11 // pred_check_branch
        %223 = sbr.rel (%p221) target = $region36
      $region35: #{inception_c_forward.5} parent=11 // pred_region
        _
      $region36: #{inception_c_forward.5} parent=11 // pred_fallthru
        _
    $region12: #{inception_c_forward.5} parent=5 // pred_fallthru
      _
    %p224 = scmp.lt.s32.totalorder %s13, 2
    // Predicated region
    $region37: #{inception_c_forward.5} parent=5 // pred_check
      %p225 = pneg %p224
    $region38: #{inception_c_forward.5} parent=5 // pred_check_branch
      %227 = sbr.rel (%p225) target = $region40
    $region39: #{inception_c_forward.5} parent=5 // pred_region
      // Predicated region
      $region41: #{inception_c_forward.5} parent=39 // pred_check
        %p228 = pneg %p159
      $region42: #{inception_c_forward.5} parent=39 // pred_check_branch
        %230 = sbr.rel (%p228) target = $region44
      $region43: #{inception_c_forward.5} parent=39 // pred_region
        %p231 = scmp.lt.s32.totalorder %s13, 1
        %s232 = scalar_select %p231, %s13, 1
        %s233 = smul.addr %s232, 2
        %s234 = smul.addr %s233, 8
        %s235 = scalar_lea.vmem %s6, %s234
      $region44: #{inception_c_forward.5} parent=39 // pred_fallthru
        _
    $region40: #{inception_c_forward.5} parent=5 // pred_fallthru
      _
    %p236 = scmp.le.s32.totalorder 1, %s13
    %p237 = scmp.lt.s32.totalorder %s13, 3
    %p238 = pnand %p236, %p237
    %p239 = pneg %p238
    // Predicated region
    $region45: #{inception_c_forward.5} parent=5 // pred_check
      _
    $region46: #{inception_c_forward.5} parent=5 // pred_check_branch
      %241 = sbr.rel (%p238) target = $region48
    $region47: #{inception_c_forward.5} parent=5 // pred_region
      %s242 = ssub.s32 %s13, 1
      %p243 = pneg %p34
      %p244 = pneg %p31
      %p245 = pneg %p55
      %p246 = pneg %p52
      %p247 = pneg %p76
      %p248 = pneg %p73
      %p249 = pneg %p97
      %p250 = pneg %p94
      %p251 = pneg %p118
      %p252 = pneg %p115
      %p253 = pneg %p139
      %p254 = pneg %p136
      %p255 = scmp.lt.s32.totalorder %s18, 1
      %s256 = scalar_select %p255, %s18, 1
      %s257 = smul.addr %s256, 2
      %s258 = smul.addr %s257, 8
      %s259 = scalar_lea.vmem %s6, %s258
      %p260 = pneg %p165
      %p261 = pneg %p162
      %p262 = pneg %p191
      %p263 = pneg %p188
      %p264 = scmp.lt.s32.totalorder %s18, 1
      %s265 = scalar_select %p264, %s18, 1
      %s266 = smul.addr %s265, 24
      %s267 = smul.addr %s266, 8
      %s268 = scalar_lea.vmem %s7, %s267
      %p269 = scmp.lt.s32.totalorder %s18, 1
      %s270 = scalar_select %p269, %s18, 1
      %s271 = smul.addr %s270, 2
      %s272 = smul.addr %s271, 8
      %s273 = scalar_lea.vmem %s6, %s272
      %p274 = scmp.lt.s32.totalorder %s18, 1
      %s275 = scalar_select %p274, %s18, 1
      %s276 = smul.addr %s275, 24
      %s277 = smul.addr %s276, 8
      %s278 = scalar_lea.vmem %s7, %s277
      %v279 = vld [vmem:[%s273] sm:$0xff]
      %280 = vst [vmem:[#allocation3] sm:$0xff] %v279
      %v281 = vld [vmem:[#allocation3] sm:$0xff]
      %282 = vrot.lane.b32.xlu0 %v281, 3
      %v283 = vpop.permute.xlu0 %282
      %v284 = vld [vmem:[%s0] sm:$0x1]
      %v285 = vperm.slane %v284, 0
      %v286 = vmul.f32 %v283, %v285
      %287 = vst [vmem:[#allocation2] sm:$0xff] %v286
      %v288 = vld [vmem:[#allocation3] sm:$0xff]
      %289 = vrot.lane.b32.xlu0 %v288, 2
      %v290 = vpop.permute.xlu0 %289
      %v291 = vld [vmem:[%s0 + $0x1] sm:$0x1]
      %v292 = vperm.slane %v291, 0
      %v293 = vmul.f32 %v290, %v292
      %294 = vst [vmem:[#allocation2 + $0x8] sm:$0xff] %v293
      %v295 = vld [vmem:[#allocation3] sm:$0xff]
      %296 = vrot.lane.b32.xlu0 %v295, 1
      %v297 = vpop.permute.xlu0 %296
      %v298 = vld [vmem:[%s0 + $0x2] sm:$0x1]
      %v299 = vperm.slane %v298, 0
      %v300 = vmul.f32 %v297, %v299
      %301 = vst [vmem:[#allocation2 + $0x10] sm:$0xff] %v300
      %v302 = vld [vmem:[#allocation3] sm:$0xff]
      %v303 = vld [vmem:[%s0 + $0x3] sm:$0x1]
      %v304 = vperm.slane %v303, 0
      %v305 = vmul.f32 %v302, %v304
      %306 = vst [vmem:[#allocation2 + $0x18] sm:$0xff] %v305
      %v307 = vld [vmem:[#allocation3] sm:$0xff]
      %308 = vrot.lane.b32.xlu0 %v307, 127
      %v309 = vpop.permute.xlu0 %308
      %v310 = vld [vmem:[%s0 + $0x4] sm:$0x1]
      %v311 = vperm.slane %v310, 0
      %v312 = vmul.f32 %v309, %v311
      %313 = vst [vmem:[#allocation2 + $0x20] sm:$0xff] %v312
      %v314 = vld [vmem:[#allocation3] sm:$0xff]
      %315 = vrot.lane.b32.xlu0 %v314, 126
      %v316 = vpop.permute.xlu0 %315
      %v317 = vld [vmem:[%s0 + $0x5] sm:$0x1]
      %v318 = vperm.slane %v317, 0
      %v319 = vmul.f32 %v316, %v318
      %320 = vst [vmem:[#allocation2 + $0x28] sm:$0xff] %v319
      %v321 = vld [vmem:[#allocation3] sm:$0xff]
      %322 = vrot.lane.b32.xlu0 %v321, 125
      %v323 = vpop.permute.xlu0 %322
      %v324 = vld [vmem:[%s0 + $0x6] sm:$0x1]
      %v325 = vperm.slane %v324, 0
      %v326 = vmul.f32 %v323, %v325
      %327 = vst [vmem:[#allocation2 + $0x30] sm:$0xff] %v326
      %v328 = vld [vmem:[%s2] sm:$0xff]
      %v329 = vld [vmem:[#allocation2] sm:$0xff]
      %v330 = vld [vmem:[#allocation2 + $0x8] sm:$0xff]
      %v331 = vld [vmem:[#allocation2 + $0x10] sm:$0xff]
      %v332 = vld [vmem:[#allocation2 + $0x18] sm:$0xff]
      %v333 = vld [vmem:[#allocation2 + $0x20] sm:$0xff]
      %v334 = vld [vmem:[#allocation2 + $0x28] sm:$0xff]
      %v335 = vld [vmem:[#allocation2 + $0x30] sm:$0xff]
      %v336 = vld [vmem:[%s3] sm:$0xff]
      %338 = vset.pattern.permute.xlu0 0
      %339 = vperm.xlu0 %338, %v336
      %v340 = vpop.permute.xlu0 %339
      %vm342 = vcmask 457728
      %v344 = vsel %vm342, %v328, 0
      %346 = vmatpush.msra.mxu0 0.0
      %347 = vmatpush.msra.mxu0 0.0
      %348 = vmatpush.msra.mxu0 0.0
      %349 = vmatpush.msra.mxu0 0.0
      %350 = vmatpush.msra.mxu0 0.0
      %351 = vmatpush.msra.mxu0 0.0
      %352 = vmatpush.msra.mxu0 0.0
      %353 = vmatpush.msra.mxu0 0.0
      %354 = vmatpush.msra.mxu0 0.0
      %355 = vmatpush.msra.mxu0 %v335
      %356 = vmatpush.msra.mxu0 %v334
      %357 = vmatpush.msra.mxu0 %v333
      %358 = vmatpush.msra.mxu0 %v332
      %359 = vmatpush.msra.mxu0 %v331
      %360 = vmatpush.msra.mxu0 %v330
      %361 = vmatpush.msra.mxu0 %v329
      %362 = vmatmul.f32.gmra.mxu0 %v344
      %v363 = vpop.f32.mrf.mxu0
      %v364 = vadd.f32 %v340, %v363
      %365 = vdwg.mxu0
      %v366 = vmax.f32 %v364, 0.0
      %367 = vst [vmem:[#allocation3] sm:$0xff] %v366
      %v368 = vld [vmem:[#allocation3] sm:$0xff]
      %369 = vrot.lane.b32.xlu0 %v368, 24
      %v370 = vpop.permute.xlu0 %369
      %v371 = vld [vmem:[%s1] sm:$0x1]
      %v372 = vperm.slane %v371, 0
      %v373 = vmul.f32 %v370, %v372
      %374 = vst [vmem:[#allocation2] sm:$0xff] %v373
      %v375 = vld [vmem:[#allocation3] sm:$0xff]
      %376 = vrot.lane.b32.xlu0 %v375, 16
      %v377 = vpop.permute.xlu0 %376
      %v378 = vld [vmem:[%s1 + $0x1] sm:$0x1]
      %v379 = vperm.slane %v378, 0
      %v380 = vmul.f32 %v377, %v379
      %381 = vst [vmem:[#allocation2 + $0x8] sm:$0xff] %v380
      %v382 = vld [vmem:[#allocation3] sm:$0xff]
      %383 = vrot.lane.b32.xlu0 %v382, 8
      %v384 = vpop.permute.xlu0 %383
      %v385 = vld [vmem:[%s1 + $0x2] sm:$0x1]
      %v386 = vperm.slane %v385, 0
      %v387 = vmul.f32 %v384, %v386
      %388 = vst [vmem:[#allocation2 + $0x10] sm:$0xff] %v387
      %v389 = vld [vmem:[#allocation3] sm:$0xff]
      %v390 = vld [vmem:[%s1 + $0x3] sm:$0x1]
      %v391 = vperm.slane %v390, 0
      %v392 = vmul.f32 %v389, %v391
      %393 = vst [vmem:[#allocation2 + $0x18] sm:$0xff] %v392
      %v394 = vld [vmem:[#allocation3] sm:$0xff]
      %395 = vrot.lane.b32.xlu0 %v394, 120
      %v396 = vpop.permute.xlu0 %395
      %v397 = vld [vmem:[%s1 + $0x4] sm:$0x1]
      %v398 = vperm.slane %v397, 0
      %v399 = vmul.f32 %v396, %v398
      %400 = vst [vmem:[#allocation2 + $0x20] sm:$0xff] %v399
      %v401 = vld [vmem:[#allocation3] sm:$0xff]
      %402 = vrot.lane.b32.xlu0 %v401, 112
      %v403 = vpop.permute.xlu0 %402
      %v404 = vld [vmem:[%s1 + $0x5] sm:$0x1]
      %v405 = vperm.slane %v404, 0
      %v406 = vmul.f32 %v403, %v405
      %407 = vst [vmem:[#allocation2 + $0x28] sm:$0xff] %v406
      %v408 = vld [vmem:[#allocation3] sm:$0xff]
      %409 = vrot.lane.b32.xlu0 %v408, 104
      %v410 = vpop.permute.xlu0 %409
      %v411 = vld [vmem:[%s1 + $0x6] sm:$0x1]
      %v412 = vperm.slane %v411, 0
      %v413 = vmul.f32 %v410, %v412
      %414 = vst [vmem:[#allocation2 + $0x30] sm:$0xff] %v413
      %v415 = vld [vmem:[%s4] sm:$0xff]
      %v416 = vld [vmem:[%s4 + $0x8] sm:$0xff]
      %v417 = vld [vmem:[%s4 + $0x10] sm:$0xff]
      %v418 = vld [vmem:[%s4 + $0x18] sm:$0xff]
      %v419 = vld [vmem:[%s4 + $0x20] sm:$0xff]
      %v420 = vld [vmem:[%s4 + $0x28] sm:$0xff]
      %v421 = vld [vmem:[%s4 + $0x30] sm:$0xff]
      %v422 = vld [vmem:[%s4 + $0x38] sm:$0xff]
      %v423 = vld [vmem:[%s4 + $0x40] sm:$0xff]
      %v424 = vld [vmem:[%s4 + $0x48] sm:$0xff]
      %v425 = vld [vmem:[%s4 + $0x50] sm:$0xff]
      %v426 = vld [vmem:[%s4 + $0x58] sm:$0xff]
      %v427 = vld [vmem:[%s4 + $0x60] sm:$0xff]
      %v428 = vld [vmem:[%s4 + $0x68] sm:$0xff]
      %v429 = vld [vmem:[%s4 + $0x70] sm:$0xff]
      %v430 = vld [vmem:[%s4 + $0x78] sm:$0xff]
      %v431 = vld [vmem:[%s4 + $0x80] sm:$0xff]
      %v432 = vld [vmem:[%s4 + $0x88] sm:$0xff]
      %v433 = vld [vmem:[%s4 + $0x90] sm:$0xff]
      %v434 = vld [vmem:[%s4 + $0x98] sm:$0xff]
      %v435 = vld [vmem:[%s4 + $0xa0] sm:$0xff]
      %v436 = vld [vmem:[%s4 + $0xa8] sm:$0xff]
      %v437 = vld [vmem:[%s4 + $0xb0] sm:$0xff]
      %v438 = vld [vmem:[%s4 + $0xb8] sm:$0xff]
      %v439 = vld [vmem:[#allocation2] sm:$0xff]
      %v440 = vld [vmem:[#allocation2 + $0x8] sm:$0xff]
      %v441 = vld [vmem:[#allocation2 + $0x10] sm:$0xff]
      %v442 = vld [vmem:[#allocation2 + $0x18] sm:$0xff]
      %v443 = vld [vmem:[#allocation2 + $0x20] sm:$0xff]
      %v444 = vld [vmem:[#allocation2 + $0x28] sm:$0xff]
      %v445 = vld [vmem:[#allocation2 + $0x30] sm:$0xff]
      %v446 = vld [vmem:[%s5] sm:$0xff]
      %v447 = vld [vmem:[%s5 + $0x8] sm:$0xff]
      %v448 = vld [vmem:[%s5 + $0x10] sm:$0xff]
      %v449 = vld [vmem:[%s5 + $0x18] sm:$0xff]
      %v450 = vld [vmem:[%s5 + $0x20] sm:$0xff]
      %v451 = vld [vmem:[%s5 + $0x28] sm:$0xff]
      %v452 = vld [vmem:[%s5 + $0x30] sm:$0xff]
      %v453 = vld [vmem:[%s5 + $0x38] sm:$0xff]
      %v454 = vld [vmem:[%s5 + $0x40] sm:$0xff]
      %v455 = vld [vmem:[%s5 + $0x48] sm:$0xff]
      %v456 = vld [vmem:[%s5 + $0x50] sm:$0xff]
      %v457 = vld [vmem:[%s5 + $0x58] sm:$0xff]
      %v458 = vld [vmem:[%s5 + $0x60] sm:$0xff]
      %v459 = vld [vmem:[%s5 + $0x68] sm:$0xff]
      %v460 = vld [vmem:[%s5 + $0x70] sm:$0xff]
      %v461 = vld [vmem:[%s5 + $0x78] sm:$0xff]
      %v462 = vld [vmem:[%s5 + $0x80] sm:$0xff]
      %v463 = vld [vmem:[%s5 + $0x88] sm:$0xff]
      %v464 = vld [vmem:[%s5 + $0x90] sm:$0xff]
      %v465 = vld [vmem:[%s5 + $0x98] sm:$0xff]
      %v466 = vld [vmem:[%s5 + $0xa0] sm:$0xff]
      %v467 = vld [vmem:[%s5 + $0xa8] sm:$0xff]
      %v468 = vld [vmem:[%s5 + $0xb0] sm:$0xff]
      %v469 = vld [vmem:[%s5 + $0xb8] sm:$0xff]
      %471 = vset.pattern.permute.xlu0 0
      %472 = vperm.xlu0 %471, %v446
      %v473 = vpop.permute.xlu0 %472
      %476 = vset.pattern.permute.xlu0 0
      %477 = vperm.xlu0 %476, %v447
      %v478 = vpop.permute.xlu0 %477
      %481 = vset.pattern.permute.xlu0 0
      %482 = vperm.xlu0 %481, %v448
      %v483 = vpop.permute.xlu0 %482
      %486 = vset.pattern.permute.xlu0 0
      %487 = vperm.xlu0 %486, %v449
      %v488 = vpop.permute.xlu0 %487
      %491 = vset.pattern.permute.xlu0 0
      %492 = vperm.xlu0 %491, %v450
      %v493 = vpop.permute.xlu0 %492
      %496 = vset.pattern.permute.xlu0 0
      %497 = vperm.xlu0 %496, %v451
      %v498 = vpop.permute.xlu0 %497
      %501 = vset.pattern.permute.xlu0 0
      %502 = vperm.xlu0 %501, %v452
      %v503 = vpop.permute.xlu0 %502
      %506 = vset.pattern.permute.xlu0 0
      %507 = vperm.xlu0 %506, %v453
      %v508 = vpop.permute.xlu0 %507
      %511 = vset.pattern.permute.xlu0 0
      %512 = vperm.xlu0 %511, %v454
      %v513 = vpop.permute.xlu0 %512
      %516 = vset.pattern.permute.xlu0 0
      %517 = vperm.xlu0 %516, %v455
      %v518 = vpop.permute.xlu0 %517
      %521 = vset.pattern.permute.xlu0 0
      %522 = vperm.xlu0 %521, %v456
      %v523 = vpop.permute.xlu0 %522
      %526 = vset.pattern.permute.xlu0 0
      %527 = vperm.xlu0 %526, %v457
      %v528 = vpop.permute.xlu0 %527
      %531 = vset.pattern.permute.xlu0 0
      %532 = vperm.xlu0 %531, %v458
      %v533 = vpop.permute.xlu0 %532
      %536 = vset.pattern.permute.xlu0 0
      %537 = vperm.xlu0 %536, %v459
      %v538 = vpop.permute.xlu0 %537
      %541 = vset.pattern.permute.xlu0 0
      %542 = vperm.xlu0 %541, %v460
      %v543 = vpop.permute.xlu0 %542
      %546 = vset.pattern.permute.xlu0 0
      %547 = vperm.xlu0 %546, %v461
      %v548 = vpop.permute.xlu0 %547
      %551 = vset.pattern.permute.xlu0 0
      %552 = vperm.xlu0 %551, %v462
      %v553 = vpop.permute.xlu0 %552
      %556 = vset.pattern.permute.xlu0 0
      %557 = vperm.xlu0 %556, %v463
      %v558 = vpop.permute.xlu0 %557
      %561 = vset.pattern.permute.xlu0 0
      %562 = vperm.xlu0 %561, %v464
      %v563 = vpop.permute.xlu0 %562
      %566 = vset.pattern.permute.xlu0 0
      %567 = vperm.xlu0 %566, %v465
      %v568 = vpop.permute.xlu0 %567
      %571 = vset.pattern.permute.xlu0 0
      %572 = vperm.xlu0 %571, %v466
      %v573 = vpop.permute.xlu0 %572
      %576 = vset.pattern.permute.xlu0 0
      %577 = vperm.xlu0 %576, %v467
      %v578 = vpop.permute.xlu0 %577
      %581 = vset.pattern.permute.xlu0 0
      %582 = vperm.xlu0 %581, %v468
      %v583 = vpop.permute.xlu0 %582
      %586 = vset.pattern.permute.xlu0 0
      %587 = vperm.xlu0 %586, %v469
      %v588 = vpop.permute.xlu0 %587
      %v591 = vsel %vm342, %v415, 0
      %v594 = vsel %vm342, %v416, 0
      %v597 = vsel %vm342, %v417, 0
      %v600 = vsel %vm342, %v418, 0
      %v603 = vsel %vm342, %v419, 0
      %v606 = vsel %vm342, %v420, 0
      %v609 = vsel %vm342, %v421, 0
      %v612 = vsel %vm342, %v422, 0
      %v615 = vsel %vm342, %v423, 0
      %v618 = vsel %vm342, %v424, 0
      %v621 = vsel %vm342, %v425, 0
      %v624 = vsel %vm342, %v426, 0
      %v627 = vsel %vm342, %v427, 0
      %v630 = vsel %vm342, %v428, 0
      %v633 = vsel %vm342, %v429, 0
      %v636 = vsel %vm342, %v430, 0
      %v639 = vsel %vm342, %v431, 0
      %v642 = vsel %vm342, %v432, 0
      %v645 = vsel %vm342, %v433, 0
      %v648 = vsel %vm342, %v434, 0
      %v651 = vsel %vm342, %v435, 0
      %v654 = vsel %vm342, %v436, 0
      %v657 = vsel %vm342, %v437, 0
      %v660 = vsel %vm342, %v438, 0
      %662 = vmatpush.msra.mxu0 0.0
      %663 = vmatpush.msra.mxu0 0.0
      %664 = vmatpush.msra.mxu0 0.0
      %665 = vmatpush.msra.mxu0 0.0
      %666 = vmatpush.msra.mxu0 0.0
      %667 = vmatpush.msra.mxu0 0.0
      %668 = vmatpush.msra.mxu0 0.0
      %669 = vmatpush.msra.mxu0 0.0
      %670 = vmatpush.msra.mxu0 0.0
      %671 = vmatpush.msra.mxu0 %v445
      %672 = vmatpush.msra.mxu0 %v444
      %673 = vmatpush.msra.mxu0 %v443
      %674 = vmatpush.msra.mxu0 %v442
      %675 = vmatpush.msra.mxu0 %v441
      %676 = vmatpush.msra.mxu0 %v440
      %677 = vmatpush.msra.mxu0 %v439
      %678 = vmatmul.f32.gmra.mxu0 %v591
      %v679 = vpop.f32.mrf.mxu0
      %v680 = vadd.f32 %v473, %v679
      %681 = vmatmul.f32.gmra.mxu0 %v594
      %v682 = vpop.f32.mrf.mxu0
      %v683 = vadd.f32 %v478, %v682
      %684 = vmatmul.f32.gmra.mxu0 %v597
      %v685 = vpop.f32.mrf.mxu0
      %v686 = vadd.f32 %v483, %v685
      %687 = vmatmul.f32.gmra.mxu0 %v600
      %v688 = vpop.f32.mrf.mxu0
      %v689 = vadd.f32 %v488, %v688
      %690 = vmatmul.f32.gmra.mxu0 %v603
      %v691 = vpop.f32.mrf.mxu0
      %v692 = vadd.f32 %v493, %v691
      %693 = vmatmul.f32.gmra.mxu0 %v606
      %v694 = vpop.f32.mrf.mxu0
      %v695 = vadd.f32 %v498, %v694
      %696 = vmatmul.f32.gmra.mxu0 %v609
      %v697 = vpop.f32.mrf.mxu0
      %v698 = vadd.f32 %v503, %v697
      %699 = vmatmul.f32.gmra.mxu0 %v612
      %v700 = vpop.f32.mrf.mxu0
      %v701 = vadd.f32 %v508, %v700
      %702 = vmatmul.f32.gmra.mxu0 %v615
      %v703 = vpop.f32.mrf.mxu0
      %v704 = vadd.f32 %v513, %v703
      %705 = vmatmul.f32.gmra.mxu0 %v618
      %v706 = vpop.f32.mrf.mxu0
      %v707 = vadd.f32 %v518, %v706
      %708 = vmatmul.f32.gmra.mxu0 %v621
      %v709 = vpop.f32.mrf.mxu0
      %v710 = vadd.f32 %v523, %v709
      %711 = vmatmul.f32.gmra.mxu0 %v624
      %v712 = vpop.f32.mrf.mxu0
      %v713 = vadd.f32 %v528, %v712
      %714 = vmatmul.f32.gmra.mxu0 %v627
      %v715 = vpop.f32.mrf.mxu0
      %v716 = vadd.f32 %v533, %v715
      %717 = vmatmul.f32.gmra.mxu0 %v630
      %v718 = vpop.f32.mrf.mxu0
      %v719 = vadd.f32 %v538, %v718
      %720 = vmatmul.f32.gmra.mxu0 %v633
      %v721 = vpop.f32.mrf.mxu0
      %v722 = vadd.f32 %v543, %v721
      %723 = vmatmul.f32.gmra.mxu0 %v636
      %v724 = vpop.f32.mrf.mxu0
      %v725 = vadd.f32 %v548, %v724
      %726 = vmatmul.f32.gmra.mxu0 %v639
      %v727 = vpop.f32.mrf.mxu0
      %v728 = vadd.f32 %v553, %v727
      %729 = vmatmul.f32.gmra.mxu0 %v642
      %v730 = vpop.f32.mrf.mxu0
      %v731 = vadd.f32 %v558, %v730
      %732 = vmatmul.f32.gmra.mxu0 %v645
      %v733 = vpop.f32.mrf.mxu0
      %v734 = vadd.f32 %v563, %v733
      %735 = vmatmul.f32.gmra.mxu0 %v648
      %v736 = vpop.f32.mrf.mxu0
      %v737 = vadd.f32 %v568, %v736
      %738 = vmatmul.f32.gmra.mxu0 %v651
      %v739 = vpop.f32.mrf.mxu0
      %v740 = vadd.f32 %v573, %v739
      %741 = vmatmul.f32.gmra.mxu0 %v654
      %v742 = vpop.f32.mrf.mxu0
      %v743 = vadd.f32 %v578, %v742
      %744 = vmatmul.f32.gmra.mxu0 %v657
      %v745 = vpop.f32.mrf.mxu0
      %v746 = vadd.f32 %v583, %v745
      %747 = vmatmul.f32.gmra.mxu0 %v660
      %v748 = vpop.f32.mrf.mxu0
      %v749 = vadd.f32 %v588, %v748
      %750 = vdwg.mxu0
      %v751 = vmax.f32 %v680, 0.0
      %v752 = vmax.f32 %v683, 0.0
      %v753 = vmax.f32 %v686, 0.0
      %v754 = vmax.f32 %v689, 0.0
      %v755 = vmax.f32 %v692, 0.0
      %v756 = vmax.f32 %v695, 0.0
      %v757 = vmax.f32 %v698, 0.0
      %v758 = vmax.f32 %v701, 0.0
      %v759 = vmax.f32 %v704, 0.0
      %v760 = vmax.f32 %v707, 0.0
      %v761 = vmax.f32 %v710, 0.0
      %v762 = vmax.f32 %v713, 0.0
      %v763 = vmax.f32 %v716, 0.0
      %v764 = vmax.f32 %v719, 0.0
      %v765 = vmax.f32 %v722, 0.0
      %v766 = vmax.f32 %v725, 0.0
      %v767 = vmax.f32 %v728, 0.0
      %v768 = vmax.f32 %v731, 0.0
      %v769 = vmax.f32 %v734, 0.0
      %v770 = vmax.f32 %v737, 0.0
      %v771 = vmax.f32 %v740, 0.0
      %v772 = vmax.f32 %v743, 0.0
      %v773 = vmax.f32 %v746, 0.0
      %v774 = vmax.f32 %v749, 0.0
      %775 = vst [vmem:[%s278] sm:$0xff] %v751
      %776 = vst [vmem:[%s278 + $0x8] sm:$0xff] %v752
      %777 = vst [vmem:[%s278 + $0x10] sm:$0xff] %v753
      %778 = vst [vmem:[%s278 + $0x18] sm:$0xff] %v754
      %779 = vst [vmem:[%s278 + $0x20] sm:$0xff] %v755
      %780 = vst [vmem:[%s278 + $0x28] sm:$0xff] %v756
      %781 = vst [vmem:[%s278 + $0x30] sm:$0xff] %v757
      %782 = vst [vmem:[%s278 + $0x38] sm:$0xff] %v758
      %783 = vst [vmem:[%s278 + $0x40] sm:$0xff] %v759
      %784 = vst [vmem:[%s278 + $0x48] sm:$0xff] %v760
      %785 = vst [vmem:[%s278 + $0x50] sm:$0xff] %v761
      %786 = vst [vmem:[%s278 + $0x58] sm:$0xff] %v762
      %787 = vst [vmem:[%s278 + $0x60] sm:$0xff] %v763
      %788 = vst [vmem:[%s278 + $0x68] sm:$0xff] %v764
      %789 = vst [vmem:[%s278 + $0x70] sm:$0xff] %v765
      %790 = vst [vmem:[%s278 + $0x78] sm:$0xff] %v766
      %791 = vst [vmem:[%s278 + $0x80] sm:$0xff] %v767
      %792 = vst [vmem:[%s278 + $0x88] sm:$0xff] %v768
      %793 = vst [vmem:[%s278 + $0x90] sm:$0xff] %v769
      %794 = vst [vmem:[%s278 + $0x98] sm:$0xff] %v770
      %795 = vst [vmem:[%s278 + $0xa0] sm:$0xff] %v771
      %796 = vst [vmem:[%s278 + $0xa8] sm:$0xff] %v772
      %797 = vst [vmem:[%s278 + $0xb0] sm:$0xff] %v773
      %798 = vst [vmem:[%s278 + $0xb8] sm:$0xff] %v774
      %p799 = scmp.lt.s32.totalorder %s18, 1
      %s800 = scalar_select %p799, %s18, 1
      %s801 = smul.addr %s800, 24
      %s802 = smul.addr %s801, 8
      %s803 = scalar_lea.vmem %s7, %s802
      // Predicated region
      $region49: #{inception_c_forward.5} parent=47 // pred_check
        %p804 = pneg %p188
      $region50: #{inception_c_forward.5} parent=47 // pred_check_branch
        %806 = sbr.rel (%p804) target = $region52
      $region51: #{inception_c_forward.5} parent=47 // pred_region
        _
      $region52: #{inception_c_forward.5} parent=47 // pred_fallthru
        _
    $region48: #{inception_c_forward.5} parent=5 // pred_fallthru
      _
    %p807 = scmp.le.s32.totalorder 2, %s13
    // Predicated region
    $region53: #{inception_c_forward.5} parent=5 // pred_check
      %p808 = pneg %p807
    $region54: #{inception_c_forward.5} parent=5 // pred_check_branch
      %810 = sbr.rel (%p808) target = $region56
    $region55: #{inception_c_forward.5} parent=5 // pred_region
      %s811 = ssub.s32 %s13, 2
      // Predicated region
      $region57: #{inception_c_forward.5} parent=55 // pred_check
        %p812 = pneg %p194
      $region58: #{inception_c_forward.5} parent=55 // pred_check_branch
        %814 = sbr.rel (%p812) target = $region60
      $region59: #{inception_c_forward.5} parent=55 // pred_region
        %p815 = scmp.lt.s32.totalorder %s19, 1
        %s816 = scalar_select %p815, %s19, 1
        %s817 = smul.addr %s816, 24
        %s818 = smul.addr %s817, 8
        %s819 = scalar_lea.vmem %s7, %s818
      $region60: #{inception_c_forward.5} parent=55 // pred_fallthru
        _
    $region56: #{inception_c_forward.5} parent=5 // pred_fallthru
      _
  $region6: #{inception_c_forward.5} parent=0 // loop_footer
    %s17 = sadd.s32 1, %s13
  $region7: #{inception_c_forward.5} parent=0 // loop_footer_branch
    %12 = sbr.rel target = $region3
  $region8: #{inception_c_forward.5} parent=0 // loop_exit
    _

// kernel: inception_c_forward.7
$region0: #{inception_c_forward.7}
  #allocation0 [shape = 'u32[]', space=smem, size = 0x4, offset = 0x4, fixed_abs, tag = 'smem constant byte address 0x4 - core index']
  #allocation1 [shape = 'u32[72,128]{1,0:T(1,128)}', space=vmem, size = 0x9000, scoped, tag = 'internal scratch']
  #allocation2 [shape = 'f32[16,128]{1,0:T(8,128)}', space=vmem, size = 0x2000, scoped, tag = 'scratch operand']
  %s0 = inlined_call_operand.vmem [shape: f32[9,128], index: 0, kind: input, shape index: {}]
  %s1 = inlined_call_operand.vmem [shape: f32[192,16], index: 1, kind: input, shape index: {}]
  %s2 = inlined_call_operand.vmem [shape: f32[192,1], index: 2, kind: input, shape index: {}]
  %s3 = inlined_call_operand.vmem [shape: f32[2,16,128], index: 3, kind: input, shape index: {}]
  %s4 = inlined_call_operand.vmem [shape: f32[2,192,128], index: 4, kind: output, shape index: {}]
  %s5 = sld [smem:[#allocation0]]
  $region49: #{inception_c_forward.7} parent=0
    _
  %s7 = ssub.s32 1, %s5
  %s8 = scalar_select 0, %s7, %s5
  loop: start=0, step=1, limit=4
  $region2: #{inception_c_forward.7} parent=0 // loop_pre_header
    _
  $region3: #{inception_c_forward.7} parent=0 // loop_header
    %s10 = sphi 0, %s14
    %p11 = scmp.ge.s32.totalorder %s10, 4
    %s18 = sphi 0, %s18
    %s20 = sphi 0, %s18
    %s21 = sphi 0, %s20
    %s35 = sphi 0, %s21
    %s39 = sphi 0, %s39
    %s41 = sphi 0, %s39
    %s42 = sphi 0, %s41
    %s56 = sphi 0, %s42
    %s60 = sphi 0, %s60
    %s62 = sphi 0, %s60
    %s63 = sphi 0, %s62
    %s77 = sphi 0, %s63
    %s83 = sphi 0, %s85
    %s86 = sphi 0, %s83
    %s87 = sphi 0, %s86
    %s103 = sphi 0, %s87
    %s109 = sphi 0, %s111
    %s112 = sphi 0, %s109
    %s113 = sphi 0, %s112
    %s129 = sphi 0, %s113
  $region4: #{inception_c_forward.7} parent=0 // loop_header_branch
    %13 = sbr.rel (%p11) target = $region8
  $region5: #{inception_c_forward.7} parent=0 // loop_body
    %s15 = ssub.s32 %s10, 1
    %s16 = ssub.s32 %s10, 2
    %s17 = sadd.s32 %s10, 1
    %s19 = sadd.s32 %s18, 1
    %p22 = scmp.eq.s32.totalorder %s10, 1
    %p23 = scmp.ne.s32.totalorder %s18, %s20
    %p24 = scmp.eq.s32.totalorder %s10, 0
    %p25 = por %p23, %p24
    %p26 = scmp.ne.s32.totalorder %s18, %s20
    %p27 = scmp.eq.s32.totalorder %s15, 1
    %p28 = por %p26, %p27
    %p29 = scmp.ne.s32.totalorder %s20, %s21
    %p30 = scmp.eq.s32.totalorder %s15, 0
    %p31 = por %p29, %p30
    %p32 = scmp.ne.s32.totalorder %s20, %s21
    %p33 = scmp.eq.s32.totalorder %s16, 1
    %p34 = por %p32, %p33
    %p36 = scmp.ne.s32.totalorder %s21, %s35
    %p37 = scmp.eq.s32.totalorder %s16, 0
    %p38 = por %p36, %p37
    %s40 = sadd.s32 %s39, 1
    %p43 = scmp.eq.s32.totalorder %s10, 1
    %p44 = scmp.ne.s32.totalorder %s39, %s41
    %p45 = scmp.eq.s32.totalorder %s10, 0
    %p46 = por %p44, %p45
    %p47 = scmp.ne.s32.totalorder %s39, %s41
    %p48 = scmp.eq.s32.totalorder %s15, 1
    %p49 = por %p47, %p48
    %p50 = scmp.ne.s32.totalorder %s41, %s42
    %p51 = scmp.eq.s32.totalorder %s15, 0
    %p52 = por %p50, %p51
    %p53 = scmp.ne.s32.totalorder %s41, %s42
    %p54 = scmp.eq.s32.totalorder %s16, 1
    %p55 = por %p53, %p54
    %p57 = scmp.ne.s32.totalorder %s42, %s56
    %p58 = scmp.eq.s32.totalorder %s16, 0
    %p59 = por %p57, %p58
    %s61 = sadd.s32 %s60, 1
    %p64 = scmp.eq.s32.totalorder %s10, 1
    %p65 = scmp.ne.s32.totalorder %s60, %s62
    %p66 = scmp.eq.s32.totalorder %s10, 0
    %p67 = por %p65, %p66
    %p68 = scmp.ne.s32.totalorder %s60, %s62
    %p69 = scmp.eq.s32.totalorder %s15, 1
    %p70 = por %p68, %p69
    %p71 = scmp.ne.s32.totalorder %s62, %s63
    %p72 = scmp.eq.s32.totalorder %s15, 0
    %p73 = por %p71, %p72
    %p74 = scmp.ne.s32.totalorder %s62, %s63
    %p75 = scmp.eq.s32.totalorder %s16, 1
    %p76 = por %p74, %p75
    %p78 = scmp.ne.s32.totalorder %s63, %s77
    %p79 = scmp.eq.s32.totalorder %s16, 0
    %p80 = por %p78, %p79
    %s81 = ssub.s32 %s10, %s17
    %p82 = scmp.eq.s32.totalorder %s81, 0
    %s84 = sadd.s32 %s83, 1
    %s85 = scalar_select %p82, %s83, %s84
    %p88 = pneg %p82
    %p89 = scmp.eq.s32.totalorder %s10, 1
    %p90 = por %p88, %p89
    %p91 = scmp.ne.s32.totalorder %s83, %s86
    %p92 = scmp.eq.s32.totalorder %s10, 0
    %p93 = por %p91, %p92
    %p94 = scmp.ne.s32.totalorder %s83, %s86
    %p95 = scmp.eq.s32.totalorder %s15, 1
    %p96 = por %p94, %p95
    %p97 = scmp.ne.s32.totalorder %s86, %s87
    %p98 = scmp.eq.s32.totalorder %s15, 0
    %p99 = por %p97, %p98
    %p100 = scmp.ne.s32.totalorder %s86, %s87
    %p101 = scmp.eq.s32.totalorder %s16, 1
    %p102 = por %p100, %p101
    %p104 = scmp.ne.s32.totalorder %s87, %s103
    %p105 = scmp.eq.s32.totalorder %s16, 0
    %p106 = por %p104, %p105
    %s107 = ssub.s32 %s10, %s17
    %p108 = scmp.eq.s32.totalorder %s107, 0
    %s110 = sadd.s32 %s109, 1
    %s111 = scalar_select %p108, %s109, %s110
    %p114 = pneg %p108
    %p115 = scmp.eq.s32.totalorder %s10, 1
    %p116 = por %p114, %p115
    %p117 = scmp.ne.s32.totalorder %s109, %s112
    %p118 = scmp.eq.s32.totalorder %s10, 0
    %p119 = por %p117, %p118
    %p120 = scmp.ne.s32.totalorder %s109, %s112
    %p121 = scmp.eq.s32.totalorder %s15, 1
    %p122 = por %p120, %p121
    %p123 = scmp.ne.s32.totalorder %s112, %s113
    %p124 = scmp.eq.s32.totalorder %s15, 0
    %p125 = por %p123, %p124
    %p126 = scmp.ne.s32.totalorder %s112, %s113
    %p127 = scmp.eq.s32.totalorder %s16, 1
    %p128 = por %p126, %p127
    %p130 = scmp.ne.s32.totalorder %s113, %s129
    %p131 = scmp.eq.s32.totalorder %s16, 0
    %p132 = por %p130, %p131
    %p133 = scmp.le.s32.totalorder 1, %s10
    %p134 = scmp.lt.s32.totalorder %s10, 3
    %p135 = pnand %p133, %p134
    %p136 = pneg %p135
    // Predicated region
    $region9: #{inception_c_forward.7} parent=5 // pred_check
      _
    $region10: #{inception_c_forward.7} parent=5 // pred_check_branch
      %138 = sbr.rel (%p135) target = $region12
    $region11: #{inception_c_forward.7} parent=5 // pred_region
      %s139 = ssub.s32 %s10, 1
      // Predicated region
      $region13: #{inception_c_forward.7} parent=11 // pred_check
        %p140 = pneg %p31
      $region14: #{inception_c_forward.7} parent=11 // pred_check_branch
        %142 = sbr.rel (%p140) target = $region16
      $region15: #{inception_c_forward.7} parent=11 // pred_region
        _
      $region16: #{inception_c_forward.7} parent=11 // pred_fallthru
        _
      // Predicated region
      $region17: #{inception_c_forward.7} parent=11 // pred_check
        %p143 = pneg %p52
      $region18: #{inception_c_forward.7} parent=11 // pred_check_branch
        %145 = sbr.rel (%p143) target = $region20
      $region19: #{inception_c_forward.7} parent=11 // pred_region
        _
      $region20: #{inception_c_forward.7} parent=11 // pred_fallthru
        _
      // Predicated region
      $region21: #{inception_c_forward.7} parent=11 // pred_check
        %p146 = pneg %p73
      $region22: #{inception_c_forward.7} parent=11 // pred_check_branch
        %148 = sbr.rel (%p146) target = $region24
      $region23: #{inception_c_forward.7} parent=11 // pred_region
        _
      $region24: #{inception_c_forward.7} parent=11 // pred_fallthru
        _
    $region12: #{inception_c_forward.7} parent=5 // pred_fallthru
      _
    %p149 = scmp.lt.s32.totalorder %s10, 2
    // Predicated region
    $region25: #{inception_c_forward.7} parent=5 // pred_check
      %p150 = pneg %p149
    $region26: #{inception_c_forward.7} parent=5 // pred_check_branch
      %152 = sbr.rel (%p150) target = $region28
    $region27: #{inception_c_forward.7} parent=5 // pred_region
      // Predicated region
      $region29: #{inception_c_forward.7} parent=27 // pred_check
        %p153 = pneg %p93
      $region30: #{inception_c_forward.7} parent=27 // pred_check_branch
        %155 = sbr.rel (%p153) target = $region32
      $region31: #{inception_c_forward.7} parent=27 // pred_region
        %p156 = scmp.lt.s32.totalorder %s10, 1
        %s157 = scalar_select %p156, %s10, 1
        %s158 = smul.addr %s157, 2
        %s159 = smul.addr %s158, 8
        %s160 = scalar_lea.vmem %s3, %s159
      $region32: #{inception_c_forward.7} parent=27 // pred_fallthru
        _
    $region28: #{inception_c_forward.7} parent=5 // pred_fallthru
      _
    %p161 = scmp.le.s32.totalorder 1, %s10
    %p162 = scmp.lt.s32.totalorder %s10, 3
    %p163 = pnand %p161, %p162
    %p164 = pneg %p163
    // Predicated region
    $region33: #{inception_c_forward.7} parent=5 // pred_check
      _
    $region34: #{inception_c_forward.7} parent=5 // pred_check_branch
      %166 = sbr.rel (%p163) target = $region36
    $region35: #{inception_c_forward.7} parent=5 // pred_region
      %s167 = ssub.s32 %s10, 1
      %p168 = pneg %p31
      %p169 = pneg %p28
      %p170 = pneg %p52
      %p171 = pneg %p49
      %p172 = pneg %p73
      %p173 = pneg %p70
      %p174 = scmp.lt.s32.totalorder %s15, 1
      %s175 = scalar_select %p174, %s15, 1
      %s176 = smul.addr %s175, 2
      %s177 = smul.addr %s176, 8
      %s178 = scalar_lea.vmem %s3, %s177
      %p179 = pneg %p99
      %p180 = pneg %p96
      %p181 = pneg %p125
      %p182 = pneg %p122
      %p183 = scmp.lt.s32.totalorder %s15, 1
      %s184 = scalar_select %p183, %s15, 1
      %s185 = smul.addr %s184, 24
      %s186 = smul.addr %s185, 8
      %s187 = scalar_lea.vmem %s4, %s186
      %p188 = scmp.lt.s32.totalorder %s15, 1
      %s189 = scalar_select %p188, %s15, 1
      %s190 = smul.addr %s189, 2
      %s191 = smul.addr %s190, 8
      %s192 = scalar_lea.vmem %s3, %s191
      %p193 = scmp.lt.s32.totalorder %s15, 1
      %s194 = scalar_select %p193, %s15, 1
      %s195 = smul.addr %s194, 24
      %s196 = smul.addr %s195, 8
      %s197 = scalar_lea.vmem %s4, %s196
      %v198 = vld [vmem:[%s192] sm:$0xff]
      %v199 = vld [vmem:[%s192 + $0x8] sm:$0xff]
      %200 = vrot.lane.b32.xlu0 %v198, 9
      %v201 = vpop.permute.xlu0 %200
      %202 = vrot.lane.b32.xlu0 %v199, 9
      %v203 = vpop.permute.xlu0 %202
      %v204 = vld [vmem:[%s0] sm:$0x1]
      %v205 = vperm.slane %v204, 0
      %v206 = vmul.f32 %v201, %v205
      %v207 = vmul.f32 %v203, %v205
      %208 = vst [vmem:[#allocation2] sm:$0xff] %v206
      %209 = vst [vmem:[#allocation2 + $0x8] sm:$0xff] %v207
      %210 = vrot.lane.b32.xlu0 %v198, 8
      %v211 = vpop.permute.xlu0 %210
      %212 = vrot.lane.b32.xlu0 %v199, 8
      %v213 = vpop.permute.xlu0 %212
      %v214 = vld [vmem:[%s0 + $0x1] sm:$0x1]
      %v215 = vperm.slane %v214, 0
      %v216 = vmul.f32 %v211, %v215
      %v217 = vmul.f32 %v213, %v215
      %v218 = vld [vmem:[#allocation2] sm:$0xff]
      %v219 = vld [vmem:[#allocation2 + $0x8] sm:$0xff]
      %v220 = vadd.f32 %v218, %v216
      %v221 = vadd.f32 %v219, %v217
      %222 = vst [vmem:[#allocation2] sm:$0xff] %v220
      %223 = vst [vmem:[#allocation2 + $0x8] sm:$0xff] %v221
      %224 = vrot.lane.b32.xlu0 %v198, 7
      %v225 = vpop.permute.xlu0 %224
      %226 = vrot.lane.b32.xlu0 %v199, 7
      %v227 = vpop.permute.xlu0 %226
      %v228 = vld [vmem:[%s0 + $0x2] sm:$0x1]
      %v229 = vperm.slane %v228, 0
      %v230 = vmul.f32 %v225, %v229
      %v231 = vmul.f32 %v227, %v229
      %v232 = vld [vmem:[#allocation2] sm:$0xff]
      %v233 = vld [vmem:[#allocation2 + $0x8] sm:$0xff]
      %v234 = vadd.f32 %v232, %v230
      %v235 = vadd.f32 %v233, %v231
      %236 = vst [vmem:[#allocation2] sm:$0xff] %v234
      %237 = vst [vmem:[#allocation2 + $0x8] sm:$0xff] %v235
      %238 = vrot.lane.b32.xlu0 %v198, 1
      %v239 = vpop.permute.xlu0 %238
      %240 = vrot.lane.b32.xlu0 %v199, 1
      %v241 = vpop.permute.xlu0 %240
      %v242 = vld [vmem:[%s0 + $0x3] sm:$0x1]
      %v243 = vperm.slane %v242, 0
      %v244 = vmul.f32 %v239, %v243
      %v245 = vmul.f32 %v241, %v243
      %v246 = vld [vmem:[#allocation2] sm:$0xff]
      %v247 = vld [vmem:[#allocation2 + $0x8] sm:$0xff]
      %v248 = vadd.f32 %v246, %v244
      %v249 = vadd.f32 %v247, %v245
      %250 = vst [vmem:[#allocation2] sm:$0xff] %v248
      %251 = vst [vmem:[#allocation2 + $0x8] sm:$0xff] %v249
      %v252 = vld [vmem:[%s0 + $0x4] sm:$0x1]
      %v253 = vperm.slane %v252, 0
      %v254 = vmul.f32 %v198, %v253
      %v255 = vmul.f32 %v199, %v253
      %v256 = vld [vmem:[#allocation2] sm:$0xff]
      %v257 = vld [vmem:[#allocation2 + $0x8] sm:$0xff]
      %v258 = vadd.f32 %v256, %v254
      %v259 = vadd.f32 %v257, %v255
      %260 = vst [vmem:[#allocation2] sm:$0xff] %v258
      %261 = vst [vmem:[#allocation2 + $0x8] sm:$0xff] %v259
      %262 = vrot.lane.b32.xlu0 %v198, 127
      %v263 = vpop.permute.xlu0 %262
      %264 = vrot.lane.b32.xlu0 %v199, 127
      %v265 = vpop.permute.xlu0 %264
      %v266 = vld [vmem:[%s0 + $0x5] sm:$0x1]
      %v267 = vperm.slane %v266, 0
      %v268 = vmul.f32 %v263, %v267
      %v269 = vmul.f32 %v265, %v267
      %v270 = vld [vmem:[#allocation2] sm:$0xff]
      %v271 = vld [vmem:[#allocation2 + $0x8] sm:$0xff]
      %v272 = vadd.f32 %v270, %v268
      %v273 = vadd.f32 %v271, %v269
      %274 = vst [vmem:[#allocation2] sm:$0xff] %v272
      %275 = vst [vmem:[#allocation2 + $0x8] sm:$0xff] %v273
      %276 = vrot.lane.b32.xlu0 %v198, 121
      %v277 = vpop.permute.xlu0 %276
      %278 = vrot.lane.b32.xlu0 %v199, 121
      %v279 = vpop.permute.xlu0 %278
      %v280 = vld [vmem:[%s0 + $0x6] sm:$0x1]
      %v281 = vperm.slane %v280, 0
      %v282 = vmul.f32 %v277, %v281
      %v283 = vmul.f32 %v279, %v281
      %v284 = vld [vmem:[#allocation2] sm:$0xff]
      %v285 = vld [vmem:[#allocation2 + $0x8] sm:$0xff]
      %v286 = vadd.f32 %v284, %v282
      %v287 = vadd.f32 %v285, %v283
      %288 = vst [vmem:[#allocation2] sm:$0xff] %v286
      %289 = vst [vmem:[#allocation2 + $0x8] sm:$0xff] %v287
      %290 = vrot.lane.b32.xlu0 %v198, 120
      %v291 = vpop.permute.xlu0 %290
      %292 = vrot.lane.b32.xlu0 %v199, 120
      %v293 = vpop.permute.xlu0 %292
      %v294 = vld [vmem:[%s0 + $0x7] sm:$0x1]
      %v295 = vperm.slane %v294, 0
      %v296 = vmul.f32 %v291, %v295
      %v297 = vmul.f32 %v293, %v295
      %v298 = vld [vmem:[#allocation2] sm:$0xff]
      %v299 = vld [vmem:[#allocation2 + $0x8] sm:$0xff]
      %v300 = vadd.f32 %v298, %v296
      %v301 = vadd.f32 %v299, %v297
      %302 = vst [vmem:[#allocation2] sm:$0xff] %v300
      %303 = vst [vmem:[#allocation2 + $0x8] sm:$0xff] %v301
      %304 = vrot.lane.b32.xlu0 %v198, 119
      %v305 = vpop.permute.xlu0 %304
      %306 = vrot.lane.b32.xlu0 %v199, 119
      %v307 = vpop.permute.xlu0 %306
      %v308 = vld [vmem:[%s0 + $0x8] sm:$0x1]
      %v309 = vperm.slane %v308, 0
      %v310 = vmul.f32 %v305, %v309
      %v311 = vmul.f32 %v307, %v309
      %v312 = vld [vmem:[#allocation2] sm:$0xff]
      %v313 = vld [vmem:[#allocation2 + $0x8] sm:$0xff]
      %v314 = vadd.f32 %v312, %v310
      %v315 = vadd.f32 %v313, %v311
      %316 = vst [vmem:[#allocation2] sm:$0xff] %v314
      %317 = vst [vmem:[#allocation2 + $0x8] sm:$0xff] %v315
      %v318 = vld [vmem:[%s1] sm:$0xff]
      %v319 = vld [vmem:[%s1 + $0x8] sm:$0xff]
      %v320 = vld [vmem:[%s1 + $0x10] sm:$0xff]
      %v321 = vld [vmem:[%s1 + $0x18] sm:$0xff]
      %v322 = vld [vmem:[%s1 + $0x20] sm:$0xff]
      %v323 = vld [vmem:[%s1 + $0x28] sm:$0xff]
      %v324 = vld [vmem:[%s1 + $0x30] sm:$0xff]
      %v325 = vld [vmem:[%s1 + $0x38] sm:$0xff]
      %v326 = vld [vmem:[%s1 + $0x40] sm:$0xff]
      %v327 = vld [vmem:[%s1 + $0x48] sm:$0xff]
      %v328 = vld [vmem:[%s1 + $0x50] sm:$0xff]
      %v329 = vld [vmem:[%s1 + $0x58] sm:$0xff]
      %v330 = vld [vmem:[%s1 + $0x60] sm:$0xff]
      %v331 = vld [vmem:[%s1 + $0x68] sm:$0xff]
      %v332 = vld [vmem:[%s1 + $0x70] sm:$0xff]
      %v333 = vld [vmem:[%s1 + $0x78] sm:$0xff]
      %v334 = vld [vmem:[%s1 + $0x80] sm:$0xff]
      %v335 = vld [vmem:[%s1 + $0x88] sm:$0xff]
      %v336 = vld [vmem:[%s1 + $0x90] sm:$0xff]
      %v337 = vld [vmem:[%s1 + $0x98] sm:$0xff]
      %v338 = vld [vmem:[%s1 + $0xa0] sm:$0xff]
      %v339 = vld [vmem:[%s1 + $0xa8] sm:$0xff]
      %v340 = vld [vmem:[%s1 + $0xb0] sm:$0xff]
      %v341 = vld [vmem:[%s1 + $0xb8] sm:$0xff]
      %v342 = vld [vmem:[#allocation2] sm:$0xff]
      %v343 = vld [vmem:[#allocation2 + $0x8] sm:$0xff]
      %v344 = vld [vmem:[%s2] sm:$0xff]
      %v345 = vld [vmem:[%s2 + $0x8] sm:$0xff]
      %v346 = vld [vmem:[%s2 + $0x10] sm:$0xff]
      %v347 = vld [vmem:[%s2 + $0x18] sm:$0xff]
      %v348 = vld [vmem:[%s2 + $0x20] sm:$0xff]
      %v349 = vld [vmem:[%s2 + $0x28] sm:$0xff]
      %v350 = vld [vmem:[%s2 + $0x30] sm:$0xff]
      %v351 = vld [vmem:[%s2 + $0x38] sm:$0xff]
      %v352 = vld [vmem:[%s2 + $0x40] sm:$0xff]
      %v353 = vld [vmem:[%s2 + $0x48] sm:$0xff]
      %v354 = vld [vmem:[%s2 + $0x50] sm:$0xff]
      %v355 = vld [vmem:[%s2 + $0x58] sm:$0xff]
      %v356 = vld [vmem:[%s2 + $0x60] sm:$0xff]
      %v357 = vld [vmem:[%s2 + $0x68] sm:$0xff]
      %v358 = vld [vmem:[%s2 + $0x70] sm:$0xff]
      %v359 = vld [vmem:[%s2 + $0x78] sm:$0xff]
      %v360 = vld [vmem:[%s2 + $0x80] sm:$0xff]
      %v361 = vld [vmem:[%s2 + $0x88] sm:$0xff]
      %v362 = vld [vmem:[%s2 + $0x90] sm:$0xff]
      %v363 = vld [vmem:[%s2 + $0x98] sm:$0xff]
      %v364 = vld [vmem:[%s2 + $0xa0] sm:$0xff]
      %v365 = vld [vmem:[%s2 + $0xa8] sm:$0xff]
      %v366 = vld [vmem:[%s2 + $0xb0] sm:$0xff]
      %v367 = vld [vmem:[%s2 + $0xb8] sm:$0xff]
      %369 = vset.pattern.permute.xlu0 0
      %370 = vperm.xlu0 %369, %v344
      %v371 = vpop.permute.xlu0 %370
      %374 = vset.pattern.permute.xlu0 0
      %375 = vperm.xlu0 %374, %v345
      %v376 = vpop.permute.xlu0 %375
      %379 = vset.pattern.permute.xlu0 0
      %380 = vperm.xlu0 %379, %v346
      %v381 = vpop.permute.xlu0 %380
      %384 = vset.pattern.permute.xlu0 0
      %385 = vperm.xlu0 %384, %v347
      %v386 = vpop.permute.xlu0 %385
      %389 = vset.pattern.permute.xlu0 0
      %390 = vperm.xlu0 %389, %v348
      %v391 = vpop.permute.xlu0 %390
      %394 = vset.pattern.permute.xlu0 0
      %395 = vperm.xlu0 %394, %v349
      %v396 = vpop.permute.xlu0 %395
      %399 = vset.pattern.permute.xlu0 0
      %400 = vperm.xlu0 %399, %v350
      %v401 = vpop.permute.xlu0 %400
      %404 = vset.pattern.permute.xlu0 0
      %405 = vperm.xlu0 %404, %v351
      %v406 = vpop.permute.xlu0 %405
      %409 = vset.pattern.permute.xlu0 0
      %410 = vperm.xlu0 %409, %v352
      %v411 = vpop.permute.xlu0 %410
      %414 = vset.pattern.permute.xlu0 0
      %415 = vperm.xlu0 %414, %v353
      %v416 = vpop.permute.xlu0 %415
      %419 = vset.pattern.permute.xlu0 0
      %420 = vperm.xlu0 %419, %v354
      %v421 = vpop.permute.xlu0 %420
      %424 = vset.pattern.permute.xlu0 0
      %425 = vperm.xlu0 %424, %v355
      %v426 = vpop.permute.xlu0 %425
      %429 = vset.pattern.permute.xlu0 0
      %430 = vperm.xlu0 %429, %v356
      %v431 = vpop.permute.xlu0 %430
      %434 = vset.pattern.permute.xlu0 0
      %435 = vperm.xlu0 %434, %v357
      %v436 = vpop.permute.xlu0 %435
      %439 = vset.pattern.permute.xlu0 0
      %440 = vperm.xlu0 %439, %v358
      %v441 = vpop.permute.xlu0 %440
      %444 = vset.pattern.permute.xlu0 0
      %445 = vperm.xlu0 %444, %v359
      %v446 = vpop.permute.xlu0 %445
      %449 = vset.pattern.permute.xlu0 0
      %450 = vperm.xlu0 %449, %v360
      %v451 = vpop.permute.xlu0 %450
      %454 = vset.pattern.permute.xlu0 0
      %455 = vperm.xlu0 %454, %v361
      %v456 = vpop.permute.xlu0 %455
      %459 = vset.pattern.permute.xlu0 0
      %460 = vperm.xlu0 %459, %v362
      %v461 = vpop.permute.xlu0 %460
      %464 = vset.pattern.permute.xlu0 0
      %465 = vperm.xlu0 %464, %v363
      %v466 = vpop.permute.xlu0 %465
      %469 = vset.pattern.permute.xlu0 0
      %470 = vperm.xlu0 %469, %v364
      %v471 = vpop.permute.xlu0 %470
      %474 = vset.pattern.permute.xlu0 0
      %475 = vperm.xlu0 %474, %v365
      %v476 = vpop.permute.xlu0 %475
      %479 = vset.pattern.permute.xlu0 0
      %480 = vperm.xlu0 %479, %v366
      %v481 = vpop.permute.xlu0 %480
      %484 = vset.pattern.permute.xlu0 0
      %485 = vperm.xlu0 %484, %v367
      %v486 = vpop.permute.xlu0 %485
      %vm488 = vcmask 130048
      %v490 = vsel %vm488, %v318, 0
      %v493 = vsel %vm488, %v319, 0
      %v496 = vsel %vm488, %v320, 0
      %v499 = vsel %vm488, %v321, 0
      %v502 = vsel %vm488, %v322, 0
      %v505 = vsel %vm488, %v323, 0
      %v508 = vsel %vm488, %v324, 0
      %v511 = vsel %vm488, %v325, 0
      %v514 = vsel %vm488, %v326, 0
      %v517 = vsel %vm488, %v327, 0
      %v520 = vsel %vm488, %v328, 0
      %v523 = vsel %vm488, %v329, 0
      %v526 = vsel %vm488, %v330, 0
      %v529 = vsel %vm488, %v331, 0
      %v532 = vsel %vm488, %v332, 0
      %v535 = vsel %vm488, %v333, 0
      %v538 = vsel %vm488, %v334, 0
      %v541 = vsel %vm488, %v335, 0
      %v544 = vsel %vm488, %v336, 0
      %v547 = vsel %vm488, %v337, 0
      %v550 = vsel %vm488, %v338, 0
      %v553 = vsel %vm488, %v339, 0
      %v556 = vsel %vm488, %v340, 0
      %v559 = vsel %vm488, %v341, 0
      %561 = vmatpush.msra.mxu0 0.0
      %562 = vmatpush.msra.mxu0 0.0
      %563 = vmatpush.msra.mxu0 0.0
      %564 = vmatpush.msra.mxu0 0.0
      %565 = vmatpush.msra.mxu0 0.0
      %566 = vmatpush.msra.mxu0 0.0
      %567 = vmatpush.msra.mxu0 0.0
      %568 = vmatpush.msra.mxu0 0.0
      %569 = vmatpush.msra.mxu0 0.0
      %570 = vmatpush.msra.mxu0 0.0
      %571 = vmatpush.msra.mxu0 0.0
      %572 = vmatpush.msra.mxu0 0.0
      %573 = vmatpush.msra.mxu0 0.0
      %574 = vmatpush.msra.mxu0 0.0
      %575 = vmatpush.msra.mxu0 %v343
      %576 = vmatpush.msra.mxu0 %v342
      %577 = vmatmul.f32.gmra.mxu0 %v490
      %v578 = vpop.f32.mrf.mxu0
      %v579 = vadd.f32 %v371, %v578
      %580 = vmatmul.f32.gmra.mxu0 %v493
      %v581 = vpop.f32.mrf.mxu0
      %v582 = vadd.f32 %v376, %v581
      %583 = vmatmul.f32.gmra.mxu0 %v496
      %v584 = vpop.f32.mrf.mxu0
      %v585 = vadd.f32 %v381, %v584
      %586 = vmatmul.f32.gmra.mxu0 %v499
      %v587 = vpop.f32.mrf.mxu0
      %v588 = vadd.f32 %v386, %v587
      %589 = vmatmul.f32.gmra.mxu0 %v502
      %v590 = vpop.f32.mrf.mxu0
      %v591 = vadd.f32 %v391, %v590
      %592 = vmatmul.f32.gmra.mxu0 %v505
      %v593 = vpop.f32.mrf.mxu0
      %v594 = vadd.f32 %v396, %v593
      %595 = vmatmul.f32.gmra.mxu0 %v508
      %v596 = vpop.f32.mrf.mxu0
      %v597 = vadd.f32 %v401, %v596
      %598 = vmatmul.f32.gmra.mxu0 %v511
      %v599 = vpop.f32.mrf.mxu0
      %v600 = vadd.f32 %v406, %v599
      %601 = vmatmul.f32.gmra.mxu0 %v514
      %v602 = vpop.f32.mrf.mxu0
      %v603 = vadd.f32 %v411, %v602
      %604 = vmatmul.f32.gmra.mxu0 %v517
      %v605 = vpop.f32.mrf.mxu0
      %v606 = vadd.f32 %v416, %v605
      %607 = vmatmul.f32.gmra.mxu0 %v520
      %v608 = vpop.f32.mrf.mxu0
      %v609 = vadd.f32 %v421, %v608
      %610 = vmatmul.f32.gmra.mxu0 %v523
      %v611 = vpop.f32.mrf.mxu0
      %v612 = vadd.f32 %v426, %v611
      %613 = vmatmul.f32.gmra.mxu0 %v526
      %v614 = vpop.f32.mrf.mxu0
      %v615 = vadd.f32 %v431, %v614
      %616 = vmatmul.f32.gmra.mxu0 %v529
      %v617 = vpop.f32.mrf.mxu0
      %v618 = vadd.f32 %v436, %v617
      %619 = vmatmul.f32.gmra.mxu0 %v532
      %v620 = vpop.f32.mrf.mxu0
      %v621 = vadd.f32 %v441, %v620
      %622 = vmatmul.f32.gmra.mxu0 %v535
      %v623 = vpop.f32.mrf.mxu0
      %v624 = vadd.f32 %v446, %v623
      %625 = vmatmul.f32.gmra.mxu0 %v538
      %v626 = vpop.f32.mrf.mxu0
      %v627 = vadd.f32 %v451, %v626
      %628 = vmatmul.f32.gmra.mxu0 %v541
      %v629 = vpop.f32.mrf.mxu0
      %v630 = vadd.f32 %v456, %v629
      %631 = vmatmul.f32.gmra.mxu0 %v544
      %v632 = vpop.f32.mrf.mxu0
      %v633 = vadd.f32 %v461, %v632
      %634 = vmatmul.f32.gmra.mxu0 %v547
      %v635 = vpop.f32.mrf.mxu0
      %v636 = vadd.f32 %v466, %v635
      %637 = vmatmul.f32.gmra.mxu0 %v550
      %v638 = vpop.f32.mrf.mxu0
      %v639 = vadd.f32 %v471, %v638
      %640 = vmatmul.f32.gmra.mxu0 %v553
      %v641 = vpop.f32.mrf.mxu0
      %v642 = vadd.f32 %v476, %v641
      %643 = vmatmul.f32.gmra.mxu0 %v556
      %v644 = vpop.f32.mrf.mxu0
      %v645 = vadd.f32 %v481, %v644
      %646 = vmatmul.f32.gmra.mxu0 %v559
      %v647 = vpop.f32.mrf.mxu0
      %v648 = vadd.f32 %v486, %v647
      %649 = vdwg.mxu0
      %v650 = vmax.f32 %v579, 0.0
      %v651 = vmax.f32 %v582, 0.0
      %v652 = vmax.f32 %v585, 0.0
      %v653 = vmax.f32 %v588, 0.0
      %v654 = vmax.f32 %v591, 0.0
      %v655 = vmax.f32 %v594, 0.0
      %v656 = vmax.f32 %v597, 0.0
      %v657 = vmax.f32 %v600, 0.0
      %v658 = vmax.f32 %v603, 0.0
      %v659 = vmax.f32 %v606, 0.0
      %v660 = vmax.f32 %v609, 0.0
      %v661 = vmax.f32 %v612, 0.0
      %v662 = vmax.f32 %v615, 0.0
      %v663 = vmax.f32 %v618, 0.0
      %v664 = vmax.f32 %v621, 0.0
      %v665 = vmax.f32 %v624, 0.0
      %v666 = vmax.f32 %v627, 0.0
      %v667 = vmax.f32 %v630, 0.0
      %v668 = vmax.f32 %v633, 0.0
      %v669 = vmax.f32 %v636, 0.0
      %v670 = vmax.f32 %v639, 0.0
      %v671 = vmax.f32 %v642, 0.0
      %v672 = vmax.f32 %v645, 0.0
      %v673 = vmax.f32 %v648, 0.0
      %674 = vst [vmem:[%s197] sm:$0xff] %v650
      %675 = vst [vmem:[%s197 + $0x8] sm:$0xff] %v651
      %676 = vst [vmem:[%s197 + $0x10] sm:$0xff] %v652
      %677 = vst [vmem:[%s197 + $0x18] sm:$0xff] %v653
      %678 = vst [vmem:[%s197 + $0x20] sm:$0xff] %v654
      %679 = vst [vmem:[%s197 + $0x28] sm:$0xff] %v655
      %680 = vst [vmem:[%s197 + $0x30] sm:$0xff] %v656
      %681 = vst [vmem:[%s197 + $0x38] sm:$0xff] %v657
      %682 = vst [vmem:[%s197 + $0x40] sm:$0xff] %v658
      %683 = vst [vmem:[%s197 + $0x48] sm:$0xff] %v659
      %684 = vst [vmem:[%s197 + $0x50] sm:$0xff] %v660
      %685 = vst [vmem:[%s197 + $0x58] sm:$0xff] %v661
      %686 = vst [vmem:[%s197 + $0x60] sm:$0xff] %v662
      %687 = vst [vmem:[%s197 + $0x68] sm:$0xff] %v663
      %688 = vst [vmem:[%s197 + $0x70] sm:$0xff] %v664
      %689 = vst [vmem:[%s197 + $0x78] sm:$0xff] %v665
      %690 = vst [vmem:[%s197 + $0x80] sm:$0xff] %v666
      %691 = vst [vmem:[%s197 + $0x88] sm:$0xff] %v667
      %692 = vst [vmem:[%s197 + $0x90] sm:$0xff] %v668
      %693 = vst [vmem:[%s197 + $0x98] sm:$0xff] %v669
      %694 = vst [vmem:[%s197 + $0xa0] sm:$0xff] %v670
      %695 = vst [vmem:[%s197 + $0xa8] sm:$0xff] %v671
      %696 = vst [vmem:[%s197 + $0xb0] sm:$0xff] %v672
      %697 = vst [vmem:[%s197 + $0xb8] sm:$0xff] %v673
      %p698 = scmp.lt.s32.totalorder %s15, 1
      %s699 = scalar_select %p698, %s15, 1
      %s700 = smul.addr %s699, 24
      %s701 = smul.addr %s700, 8
      %s702 = scalar_lea.vmem %s4, %s701
      // Predicated region
      $region37: #{inception_c_forward.7} parent=35 // pred_check
        %p703 = pneg %p122
      $region38: #{inception_c_forward.7} parent=35 // pred_check_branch
        %705 = sbr.rel (%p703) target = $region40
      $region39: #{inception_c_forward.7} parent=35 // pred_region
        _
      $region40: #{inception_c_forward.7} parent=35 // pred_fallthru
        _
    $region36: #{inception_c_forward.7} parent=5 // pred_fallthru
      _
    %p706 = scmp.le.s32.totalorder 2, %s10
    // Predicated region
    $region41: #{inception_c_forward.7} parent=5 // pred_check
      %p707 = pneg %p706
    $region42: #{inception_c_forward.7} parent=5 // pred_check_branch
      %709 = sbr.rel (%p707) target = $region44
    $region43: #{inception_c_forward.7} parent=5 // pred_region
      %s710 = ssub.s32 %s10, 2
      // Predicated region
      $region45: #{inception_c_forward.7} parent=43 // pred_check
        %p711 = pneg %p128
      $region46: #{inception_c_forward.7} parent=43 // pred_check_branch
        %713 = sbr.rel (%p711) target = $region48
      $region47: #{inception_c_forward.7} parent=43 // pred_region
        %p714 = scmp.lt.s32.totalorder %s16, 1
        %s715 = scalar_select %p714, %s16, 1
        %s716 = smul.addr %s715, 24
        %s717 = smul.addr %s716, 8
        %s718 = scalar_lea.vmem %s4, %s717
      $region48: #{inception_c_forward.7} parent=43 // pred_fallthru
        _
    $region44: #{inception_c_forward.7} parent=5 // pred_fallthru
      _
  $region6: #{inception_c_forward.7} parent=0 // loop_footer
    %s14 = sadd.s32 1, %s10
  $region7: #{inception_c_forward.7} parent=0 // loop_footer_branch
    %9 = sbr.rel target = $region3
  $region8: #{inception_c_forward.7} parent=0 // loop_exit
    _

// kernel: inception_c_forward.4
$region0: #{inception_c_forward.4}
  #allocation0 [shape = 'u32[]', space=smem, size = 0x4, offset = 0x4, fixed_abs, tag = 'smem constant byte address 0x4 - core index']
  #allocation1 [shape = 'u32[72,128]{1,0:T(1,128)}', space=vmem, size = 0x9000, scoped, tag = 'internal scratch']
  %s0 = inlined_call_operand.vmem [shape: f32[208,16], index: 0, kind: input, shape index: {}]
  %s1 = inlined_call_operand.vmem [shape: f32[208,1], index: 1, kind: input, shape index: {}]
  %s2 = inlined_call_operand.vmem [shape: f32[2,16,128], index: 2, kind: input, shape index: {}]
  %s3 = inlined_call_operand.vmem [shape: f32[2,16,128], index: 3, kind: output, shape index: {0}]
  %s4 = inlined_call_operand.vmem [shape: f32[2,192,128], index: 4, kind: output, shape index: {1}]
  %5 = xla_tuple %s3, %s4
  %s6 = sld [smem:[#allocation0]]
  $region53: #{inception_c_forward.4} parent=0
    _
  %s8 = ssub.s32 1, %s6
  %s9 = scalar_select 0, %s8, %s6
  loop: start=0, step=1, limit=4
  $region2: #{inception_c_forward.4} parent=0 // loop_pre_header
    _
  $region3: #{inception_c_forward.4} parent=0 // loop_header
    %s11 = sphi 0, %s15
    %p12 = scmp.ge.s32.totalorder %s11, 4
    %s18 = sphi 0, %s30
    %s19 = sphi 0, %s26
    %s20 = sphi 0, %s18
    %s21 = sphi 0, %s19
    %s22 = sphi 0, %s20
    %s23 = sphi 0, %s21
    %s31 = sphi 0, %s31
    %s33 = sphi 0, %s31
    %s34 = sphi 0, %s33
    %s48 = sphi 0, %s34
    %s52 = sphi 0, %s52
    %s54 = sphi 0, %s52
    %s55 = sphi 0, %s54
    %s69 = sphi 0, %s55
    %s77 = sphi 0, %s79
    %s80 = sphi 0, %s77
    %s81 = sphi 0, %s80
    %s97 = sphi 0, %s81
    %s105 = sphi 0, %s107
    %s108 = sphi 0, %s105
    %s109 = sphi 0, %s108
    %s125 = sphi 0, %s109
    %s133 = sphi 0, %s135
    %s136 = sphi 0, %s133
    %s137 = sphi 0, %s136
    %s153 = sphi 0, %s137
  $region4: #{inception_c_forward.4} parent=0 // loop_header_branch
    %14 = sbr.rel (%p12) target = $region8
  $region5: #{inception_c_forward.4} parent=0 // loop_body
    %s16 = ssub.s32 %s11, 1
    %s17 = ssub.s32 %s11, 2
    %s24 = sadd.s32 1, %s19
    %p25 = scmp.ge.s32.totalorder %s24, 1
    %s26 = scalar_select %p25, 0, %s24
    %s27 = sadd.s32 1, %s18
    %s28 = scalar_select %p25, %s27, %s18
    %p29 = scmp.ge.s32.totalorder %s28, 2
    %s30 = scalar_select %p29, 0, %s28
    %s32 = sadd.s32 %s31, 1
    %p35 = scmp.eq.s32.totalorder %s11, 1
    %p36 = scmp.ne.s32.totalorder %s31, %s33
    %p37 = scmp.eq.s32.totalorder %s11, 0
    %p38 = por %p36, %p37
    %p39 = scmp.ne.s32.totalorder %s31, %s33
    %p40 = scmp.eq.s32.totalorder %s16, 1
    %p41 = por %p39, %p40
    %p42 = scmp.ne.s32.totalorder %s33, %s34
    %p43 = scmp.eq.s32.totalorder %s16, 0
    %p44 = por %p42, %p43
    %p45 = scmp.ne.s32.totalorder %s33, %s34
    %p46 = scmp.eq.s32.totalorder %s17, 1
    %p47 = por %p45, %p46
    %p49 = scmp.ne.s32.totalorder %s34, %s48
    %p50 = scmp.eq.s32.totalorder %s17, 0
    %p51 = por %p49, %p50
    %s53 = sadd.s32 %s52, 1
    %p56 = scmp.eq.s32.totalorder %s11, 1
    %p57 = scmp.ne.s32.totalorder %s52, %s54
    %p58 = scmp.eq.s32.totalorder %s11, 0
    %p59 = por %p57, %p58
    %p60 = scmp.ne.s32.totalorder %s52, %s54
    %p61 = scmp.eq.s32.totalorder %s16, 1
    %p62 = por %p60, %p61
    %p63 = scmp.ne.s32.totalorder %s54, %s55
    %p64 = scmp.eq.s32.totalorder %s16, 0
    %p65 = por %p63, %p64
    %p66 = scmp.ne.s32.totalorder %s54, %s55
    %p67 = scmp.eq.s32.totalorder %s17, 1
    %p68 = por %p66, %p67
    %p70 = scmp.ne.s32.totalorder %s55, %s69
    %p71 = scmp.eq.s32.totalorder %s17, 0
    %p72 = por %p70, %p71
    %s73 = ssub.s32 %s18, %s30
    %s74 = ssub.s32 %s19, %s26
    %s75 = sor.u32 %s73, %s74
    %p76 = scmp.eq.s32.totalorder %s75, 0
    %s78 = sadd.s32 %s77, 1
    %s79 = scalar_select %p76, %s77, %s78
    %p82 = pneg %p76
    %p83 = scmp.eq.s32.totalorder %s11, 1
    %p84 = por %p82, %p83
    %p85 = scmp.ne.s32.totalorder %s77, %s80
    %p86 = scmp.eq.s32.totalorder %s11, 0
    %p87 = por %p85, %p86
    %p88 = scmp.ne.s32.totalorder %s77, %s80
    %p89 = scmp.eq.s32.totalorder %s16, 1
    %p90 = por %p88, %p89
    %p91 = scmp.ne.s32.totalorder %s80, %s81
    %p92 = scmp.eq.s32.totalorder %s16, 0
    %p93 = por %p91, %p92
    %p94 = scmp.ne.s32.totalorder %s80, %s81
    %p95 = scmp.eq.s32.totalorder %s17, 1
    %p96 = por %p94, %p95
    %p98 = scmp.ne.s32.totalorder %s81, %s97
    %p99 = scmp.eq.s32.totalorder %s17, 0
    %p100 = por %p98, %p99
    %s101 = ssub.s32 %s18, %s30
    %s102 = ssub.s32 %s19, %s26
    %s103 = sor.u32 %s101, %s102
    %p104 = scmp.eq.s32.totalorder %s103, 0
    %s106 = sadd.s32 %s105, 1
    %s107 = scalar_select %p104, %s105, %s106
    %p110 = pneg %p104
    %p111 = scmp.eq.s32.totalorder %s11, 1
    %p112 = por %p110, %p111
    %p113 = scmp.ne.s32.totalorder %s105, %s108
    %p114 = scmp.eq.s32.totalorder %s11, 0
    %p115 = por %p113, %p114
    %p116 = scmp.ne.s32.totalorder %s105, %s108
    %p117 = scmp.eq.s32.totalorder %s16, 1
    %p118 = por %p116, %p117
    %p119 = scmp.ne.s32.totalorder %s108, %s109
    %p120 = scmp.eq.s32.totalorder %s16, 0
    %p121 = por %p119, %p120
    %p122 = scmp.ne.s32.totalorder %s108, %s109
    %p123 = scmp.eq.s32.totalorder %s17, 1
    %p124 = por %p122, %p123
    %p126 = scmp.ne.s32.totalorder %s109, %s125
    %p127 = scmp.eq.s32.totalorder %s17, 0
    %p128 = por %p126, %p127
    %s129 = ssub.s32 %s18, %s30
    %s130 = ssub.s32 %s19, %s26
    %s131 = sor.u32 %s129, %s130
    %p132 = scmp.eq.s32.totalorder %s131, 0
    %s134 = sadd.s32 %s133, 1
    %s135 = scalar_select %p132, %s133, %s134
    %p138 = pneg %p132
    %p139 = scmp.eq.s32.totalorder %s11, 1
    %p140 = por %p138, %p139
    %p141 = scmp.ne.s32.totalorder %s133, %s136
    %p142 = scmp.eq.s32.totalorder %s11, 0
    %p143 = por %p141, %p142
    %p144 = scmp.ne.s32.totalorder %s133, %s136
    %p145 = scmp.eq.s32.totalorder %s16, 1
    %p146 = por %p144, %p145
    %p147 = scmp.ne.s32.totalorder %s136, %s137
    %p148 = scmp.eq.s32.totalorder %s16, 0
    %p149 = por %p147, %p148
    %p150 = scmp.ne.s32.totalorder %s136, %s137
    %p151 = scmp.eq.s32.totalorder %s17, 1
    %p152 = por %p150, %p151
    %p154 = scmp.ne.s32.totalorder %s137, %s153
    %p155 = scmp.eq.s32.totalorder %s17, 0
    %p156 = por %p154, %p155
    %p157 = scmp.le.s32.totalorder 1, %s11
    %p158 = scmp.lt.s32.totalorder %s11, 3
    %p159 = pnand %p157, %p158
    %p160 = pneg %p159
    // Predicated region
    $region9: #{inception_c_forward.4} parent=5 // pred_check
      _
    $region10: #{inception_c_forward.4} parent=5 // pred_check_branch
      %162 = sbr.rel (%p159) target = $region12
    $region11: #{inception_c_forward.4} parent=5 // pred_region
      %s163 = ssub.s32 %s11, 1
      // Predicated region
      $region13: #{inception_c_forward.4} parent=11 // pred_check
        %p164 = pneg %p44
      $region14: #{inception_c_forward.4} parent=11 // pred_check_branch
        %166 = sbr.rel (%p164) target = $region16
      $region15: #{inception_c_forward.4} parent=11 // pred_region
        _
      $region16: #{inception_c_forward.4} parent=11 // pred_fallthru
        _
      // Predicated region
      $region17: #{inception_c_forward.4} parent=11 // pred_check
        %p167 = pneg %p65
      $region18: #{inception_c_forward.4} parent=11 // pred_check_branch
        %169 = sbr.rel (%p167) target = $region20
      $region19: #{inception_c_forward.4} parent=11 // pred_region
        _
      $region20: #{inception_c_forward.4} parent=11 // pred_fallthru
        _
    $region12: #{inception_c_forward.4} parent=5 // pred_fallthru
      _
    %p170 = scmp.lt.s32.totalorder %s11, 2
    // Predicated region
    $region21: #{inception_c_forward.4} parent=5 // pred_check
      %p171 = pneg %p170
    $region22: #{inception_c_forward.4} parent=5 // pred_check_branch
      %173 = sbr.rel (%p171) target = $region24
    $region23: #{inception_c_forward.4} parent=5 // pred_region
      // Predicated region
      $region25: #{inception_c_forward.4} parent=23 // pred_check
        %p174 = pneg %p87
      $region26: #{inception_c_forward.4} parent=23 // pred_check_branch
        %176 = sbr.rel (%p174) target = $region28
      $region27: #{inception_c_forward.4} parent=23 // pred_region
        %p177 = scmp.lt.s32.totalorder %s18, 1
        %s178 = scalar_select %p177, %s18, 1
        %p179 = scmp.lt.s32.totalorder %s19, 0
        %s180 = scalar_select %p179, %s19, 0
        %s181 = smul.addr %s178, 2
        %s182 = sadd.s32 %s180, %s181
        %s183 = smul.addr %s182, 8
        %s184 = scalar_lea.vmem %s2, %s183
      $region28: #{inception_c_forward.4} parent=23 // pred_fallthru
        _
    $region24: #{inception_c_forward.4} parent=5 // pred_fallthru
      _
    %p185 = scmp.le.s32.totalorder 1, %s11
    %p186 = scmp.lt.s32.totalorder %s11, 3
    %p187 = pnand %p185, %p186
    %p188 = pneg %p187
    // Predicated region
    $region29: #{inception_c_forward.4} parent=5 // pred_check
      _
    $region30: #{inception_c_forward.4} parent=5 // pred_check_branch
      %190 = sbr.rel (%p187) target = $region32
    $region31: #{inception_c_forward.4} parent=5 // pred_region
      %s191 = ssub.s32 %s11, 1
      %p192 = pneg %p44
      %p193 = pneg %p41
      %p194 = pneg %p65
      %p195 = pneg %p62
      %p196 = scmp.lt.s32.totalorder %s20, 1
      %s197 = scalar_select %p196, %s20, 1
      %p198 = scmp.lt.s32.totalorder %s21, 0
      %s199 = scalar_select %p198, %s21, 0
      %s200 = smul.addr %s197, 2
      %s201 = sadd.s32 %s199, %s200
      %s202 = smul.addr %s201, 8
      %s203 = scalar_lea.vmem %s2, %s202
      %p204 = pneg %p93
      %p205 = pneg %p90
      %p206 = pneg %p121
      %p207 = pneg %p118
      %p208 = scmp.lt.s32.totalorder %s20, 1
      %s209 = scalar_select %p208, %s20, 1
      %p210 = scmp.lt.s32.totalorder %s21, 0
      %s211 = scalar_select %p210, %s21, 0
      %s212 = smul.addr %s209, 2
      %s213 = sadd.s32 %s211, %s212
      %s214 = smul.addr %s213, 8
      %s215 = scalar_lea.vmem %s3, %s214
      %p216 = pneg %p149
      %p217 = pneg %p146
      %p218 = scmp.lt.s32.totalorder %s20, 1
      %s219 = scalar_select %p218, %s20, 1
      %p220 = scmp.lt.s32.totalorder %s21, 0
      %s221 = scalar_select %p220, %s21, 0
      %s222 = smul.addr %s219, 24
      %s223 = sadd.s32 %s221, %s222
      %s224 = smul.addr %s223, 8
      %s225 = scalar_lea.vmem %s4, %s224
      %p226 = scmp.lt.s32.totalorder %s20, 1
      %s227 = scalar_select %p226, %s20, 1
      %p228 = scmp.lt.s32.totalorder %s21, 0
      %s229 = scalar_select %p228, %s21, 0
      %s230 = smul.addr %s227, 2
      %s231 = sadd.s32 %s229, %s230
      %s232 = smul.addr %s231, 8
      %s233 = scalar_lea.vmem %s2, %s232
      %p234 = scmp.lt.s32.totalorder %s20, 1
      %s235 = scalar_select %p234, %s20, 1
      %p236 = scmp.lt.s32.totalorder %s21, 0
      %s237 = scalar_select %p236, %s21, 0
      %s238 = smul.addr %s235, 2
      %s239 = sadd.s32 %s237, %s238
      %s240 = smul.addr %s239, 8
      %s241 = scalar_lea.vmem %s3, %s240
      %p242 = scmp.lt.s32.totalorder %s20, 1
      %s243 = scalar_select %p242, %s20, 1
      %p244 = scmp.lt.s32.totalorder %s21, 0
      %s245 = scalar_select %p244, %s21, 0
      %s246 = smul.addr %s243, 24
      %s247 = sadd.s32 %s245, %s246
      %s248 = smul.addr %s247, 8
      %s249 = scalar_lea.vmem %s4, %s248
      %v250 = vld [vmem:[%s0] sm:$0xff]
      %v251 = vld [vmem:[%s0 + $0x8] sm:$0xff]
      %v252 = vld [vmem:[%s0 + $0x10] sm:$0xff]
      %v253 = vld [vmem:[%s0 + $0x18] sm:$0xff]
      %v254 = vld [vmem:[%s0 + $0x20] sm:$0xff]
      %v255 = vld [vmem:[%s0 + $0x28] sm:$0xff]
      %v256 = vld [vmem:[%s0 + $0x30] sm:$0xff]
      %v257 = vld [vmem:[%s0 + $0x38] sm:$0xff]
      %v258 = vld [vmem:[%s0 + $0x40] sm:$0xff]
      %v259 = vld [vmem:[%s0 + $0x48] sm:$0xff]
      %v260 = vld [vmem:[%s0 + $0x50] sm:$0xff]
      %v261 = vld [vmem:[%s0 + $0x58] sm:$0xff]
      %v262 = vld [vmem:[%s0 + $0x60] sm:$0xff]
      %v263 = vld [vmem:[%s0 + $0x68] sm:$0xff]
      %v264 = vld [vmem:[%s0 + $0x70] sm:$0xff]
      %v265 = vld [vmem:[%s0 + $0x78] sm:$0xff]
      %v266 = vld [vmem:[%s0 + $0x80] sm:$0xff]
      %v267 = vld [vmem:[%s0 + $0x88] sm:$0xff]
      %v268 = vld [vmem:[%s0 + $0x90] sm:$0xff]
      %v269 = vld [vmem:[%s0 + $0x98] sm:$0xff]
      %v270 = vld [vmem:[%s0 + $0xa0] sm:$0xff]
      %v271 = vld [vmem:[%s0 + $0xa8] sm:$0xff]
      %v272 = vld [vmem:[%s0 + $0xb0] sm:$0xff]
      %v273 = vld [vmem:[%s0 + $0xb8] sm:$0xff]
      %v274 = vld [vmem:[%s0 + $0xc0] sm:$0xff]
      %v275 = vld [vmem:[%s0 + $0xc8] sm:$0xff]
      %v276 = vld [vmem:[%s233] sm:$0xff]
      %v277 = vld [vmem:[%s233 + $0x8] sm:$0xff]
      %v278 = vld [vmem:[%s1] sm:$0xff]
      %v279 = vld [vmem:[%s1 + $0x8] sm:$0xff]
      %v280 = vld [vmem:[%s1 + $0x10] sm:$0xff]
      %v281 = vld [vmem:[%s1 + $0x18] sm:$0xff]
      %v282 = vld [vmem:[%s1 + $0x20] sm:$0xff]
      %v283 = vld [vmem:[%s1 + $0x28] sm:$0xff]
      %v284 = vld [vmem:[%s1 + $0x30] sm:$0xff]
      %v285 = vld [vmem:[%s1 + $0x38] sm:$0xff]
      %v286 = vld [vmem:[%s1 + $0x40] sm:$0xff]
      %v287 = vld [vmem:[%s1 + $0x48] sm:$0xff]
      %v288 = vld [vmem:[%s1 + $0x50] sm:$0xff]
      %v289 = vld [vmem:[%s1 + $0x58] sm:$0xff]
      %v290 = vld [vmem:[%s1 + $0x60] sm:$0xff]
      %v291 = vld [vmem:[%s1 + $0x68] sm:$0xff]
      %v292 = vld [vmem:[%s1 + $0x70] sm:$0xff]
      %v293 = vld [vmem:[%s1 + $0x78] sm:$0xff]
      %v294 = vld [vmem:[%s1 + $0x80] sm:$0xff]
      %v295 = vld [vmem:[%s1 + $0x88] sm:$0xff]
      %v296 = vld [vmem:[%s1 + $0x90] sm:$0xff]
      %v297 = vld [vmem:[%s1 + $0x98] sm:$0xff]
      %v298 = vld [vmem:[%s1 + $0xa0] sm:$0xff]
      %v299 = vld [vmem:[%s1 + $0xa8] sm:$0xff]
      %v300 = vld [vmem:[%s1 + $0xb0] sm:$0xff]
      %v301 = vld [vmem:[%s1 + $0xb8] sm:$0xff]
      %v302 = vld [vmem:[%s1 + $0xc0] sm:$0xff]
      %v303 = vld [vmem:[%s1 + $0xc8] sm:$0xff]
      %305 = vset.pattern.permute.xlu0 0
      %306 = vperm.xlu0 %305, %v278
      %v307 = vpop.permute.xlu0 %306
      %310 = vset.pattern.permute.xlu0 0
      %311 = vperm.xlu0 %310, %v279
      %v312 = vpop.permute.xlu0 %311
      %315 = vset.pattern.permute.xlu0 0
      %316 = vperm.xlu0 %315, %v280
      %v317 = vpop.permute.xlu0 %316
      %320 = vset.pattern.permute.xlu0 0
      %321 = vperm.xlu0 %320, %v281
      %v322 = vpop.permute.xlu0 %321
      %325 = vset.pattern.permute.xlu0 0
      %326 = vperm.xlu0 %325, %v282
      %v327 = vpop.permute.xlu0 %326
      %330 = vset.pattern.permute.xlu0 0
      %331 = vperm.xlu0 %330, %v283
      %v332 = vpop.permute.xlu0 %331
      %335 = vset.pattern.permute.xlu0 0
      %336 = vperm.xlu0 %335, %v284
      %v337 = vpop.permute.xlu0 %336
      %340 = vset.pattern.permute.xlu0 0
      %341 = vperm.xlu0 %340, %v285
      %v342 = vpop.permute.xlu0 %341
      %345 = vset.pattern.permute.xlu0 0
      %346 = vperm.xlu0 %345, %v286
      %v347 = vpop.permute.xlu0 %346
      %350 = vset.pattern.permute.xlu0 0
      %351 = vperm.xlu0 %350, %v287
      %v352 = vpop.permute.xlu0 %351
      %355 = vset.pattern.permute.xlu0 0
      %356 = vperm.xlu0 %355, %v288
      %v357 = vpop.permute.xlu0 %356
      %360 = vset.pattern.permute.xlu0 0
      %361 = vperm.xlu0 %360, %v289
      %v362 = vpop.permute.xlu0 %361
      %365 = vset.pattern.permute.xlu0 0
      %366 = vperm.xlu0 %365, %v290
      %v367 = vpop.permute.xlu0 %366
      %370 = vset.pattern.permute.xlu0 0
      %371 = vperm.xlu0 %370, %v291
      %v372 = vpop.permute.xlu0 %371
      %375 = vset.pattern.permute.xlu0 0
      %376 = vperm.xlu0 %375, %v292
      %v377 = vpop.permute.xlu0 %376
      %380 = vset.pattern.permute.xlu0 0
      %381 = vperm.xlu0 %380, %v293
      %v382 = vpop.permute.xlu0 %381
      %385 = vset.pattern.permute.xlu0 0
      %386 = vperm.xlu0 %385, %v294
      %v387 = vpop.permute.xlu0 %386
      %390 = vset.pattern.permute.xlu0 0
      %391 = vperm.xlu0 %390, %v295
      %v392 = vpop.permute.xlu0 %391
      %395 = vset.pattern.permute.xlu0 0
      %396 = vperm.xlu0 %395, %v296
      %v397 = vpop.permute.xlu0 %396
      %400 = vset.pattern.permute.xlu0 0
      %401 = vperm.xlu0 %400, %v297
      %v402 = vpop.permute.xlu0 %401
      %405 = vset.pattern.permute.xlu0 0
      %406 = vperm.xlu0 %405, %v298
      %v407 = vpop.permute.xlu0 %406
      %410 = vset.pattern.permute.xlu0 0
      %411 = vperm.xlu0 %410, %v299
      %v412 = vpop.permute.xlu0 %411
      %415 = vset.pattern.permute.xlu0 0
      %416 = vperm.xlu0 %415, %v300
      %v417 = vpop.permute.xlu0 %416
      %420 = vset.pattern.permute.xlu0 0
      %421 = vperm.xlu0 %420, %v301
      %v422 = vpop.permute.xlu0 %421
      %425 = vset.pattern.permute.xlu0 0
      %426 = vperm.xlu0 %425, %v302
      %v427 = vpop.permute.xlu0 %426
      %430 = vset.pattern.permute.xlu0 0
      %431 = vperm.xlu0 %430, %v303
      %v432 = vpop.permute.xlu0 %431
      %vm434 = vcmask 130048
      %v436 = vsel %vm434, %v250, 0
      %v439 = vsel %vm434, %v251, 0
      %v442 = vsel %vm434, %v252, 0
      %v445 = vsel %vm434, %v253, 0
      %v448 = vsel %vm434, %v254, 0
      %v451 = vsel %vm434, %v255, 0
      %v454 = vsel %vm434, %v256, 0
      %v457 = vsel %vm434, %v257, 0
      %v460 = vsel %vm434, %v258, 0
      %v463 = vsel %vm434, %v259, 0
      %v466 = vsel %vm434, %v260, 0
      %v469 = vsel %vm434, %v261, 0
      %v472 = vsel %vm434, %v262, 0
      %v475 = vsel %vm434, %v263, 0
      %v478 = vsel %vm434, %v264, 0
      %v481 = vsel %vm434, %v265, 0
      %v484 = vsel %vm434, %v266, 0
      %v487 = vsel %vm434, %v267, 0
      %v490 = vsel %vm434, %v268, 0
      %v493 = vsel %vm434, %v269, 0
      %v496 = vsel %vm434, %v270, 0
      %v499 = vsel %vm434, %v271, 0
      %v502 = vsel %vm434, %v272, 0
      %v505 = vsel %vm434, %v273, 0
      %v508 = vsel %vm434, %v274, 0
      %v511 = vsel %vm434, %v275, 0
      %513 = vmatpush.msra.mxu0 0.0
      %514 = vmatpush.msra.mxu0 0.0
      %515 = vmatpush.msra.mxu0 0.0
      %516 = vmatpush.msra.mxu0 0.0
      %517 = vmatpush.msra.mxu0 0.0
      %518 = vmatpush.msra.mxu0 0.0
      %519 = vmatpush.msra.mxu0 0.0
      %520 = vmatpush.msra.mxu0 0.0
      %521 = vmatpush.msra.mxu0 0.0
      %522 = vmatpush.msra.mxu0 0.0
      %523 = vmatpush.msra.mxu0 0.0
      %524 = vmatpush.msra.mxu0 0.0
      %525 = vmatpush.msra.mxu0 0.0
      %526 = vmatpush.msra.mxu0 0.0
      %527 = vmatpush.msra.mxu0 %v277
      %528 = vmatpush.msra.mxu0 %v276
      %529 = vmatmul.f32.gmra.mxu0 %v436
      %v530 = vpop.f32.mrf.mxu0
      %v531 = vadd.f32 %v307, %v530
      %532 = vmatmul.f32.gmra.mxu0 %v439
      %v533 = vpop.f32.mrf.mxu0
      %v534 = vadd.f32 %v312, %v533
      %535 = vmatmul.f32.gmra.mxu0 %v442
      %v536 = vpop.f32.mrf.mxu0
      %v537 = vadd.f32 %v317, %v536
      %538 = vmatmul.f32.gmra.mxu0 %v445
      %v539 = vpop.f32.mrf.mxu0
      %v540 = vadd.f32 %v322, %v539
      %541 = vmatmul.f32.gmra.mxu0 %v448
      %v542 = vpop.f32.mrf.mxu0
      %v543 = vadd.f32 %v327, %v542
      %544 = vmatmul.f32.gmra.mxu0 %v451
      %v545 = vpop.f32.mrf.mxu0
      %v546 = vadd.f32 %v332, %v545
      %547 = vmatmul.f32.gmra.mxu0 %v454
      %v548 = vpop.f32.mrf.mxu0
      %v549 = vadd.f32 %v337, %v548
      %550 = vmatmul.f32.gmra.mxu0 %v457
      %v551 = vpop.f32.mrf.mxu0
      %v552 = vadd.f32 %v342, %v551
      %553 = vmatmul.f32.gmra.mxu0 %v460
      %v554 = vpop.f32.mrf.mxu0
      %v555 = vadd.f32 %v347, %v554
      %556 = vmatmul.f32.gmra.mxu0 %v463
      %v557 = vpop.f32.mrf.mxu0
      %v558 = vadd.f32 %v352, %v557
      %559 = vmatmul.f32.gmra.mxu0 %v466
      %v560 = vpop.f32.mrf.mxu0
      %v561 = vadd.f32 %v357, %v560
      %562 = vmatmul.f32.gmra.mxu0 %v469
      %v563 = vpop.f32.mrf.mxu0
      %v564 = vadd.f32 %v362, %v563
      %565 = vmatmul.f32.gmra.mxu0 %v472
      %v566 = vpop.f32.mrf.mxu0
      %v567 = vadd.f32 %v367, %v566
      %568 = vmatmul.f32.gmra.mxu0 %v475
      %v569 = vpop.f32.mrf.mxu0
      %v570 = vadd.f32 %v372, %v569
      %571 = vmatmul.f32.gmra.mxu0 %v478
      %v572 = vpop.f32.mrf.mxu0
      %v573 = vadd.f32 %v377, %v572
      %574 = vmatmul.f32.gmra.mxu0 %v481
      %v575 = vpop.f32.mrf.mxu0
      %v576 = vadd.f32 %v382, %v575
      %577 = vmatmul.f32.gmra.mxu0 %v484
      %v578 = vpop.f32.mrf.mxu0
      %v579 = vadd.f32 %v387, %v578
      %580 = vmatmul.f32.gmra.mxu0 %v487
      %v581 = vpop.f32.mrf.mxu0
      %v582 = vadd.f32 %v392, %v581
      %583 = vmatmul.f32.gmra.mxu0 %v490
      %v584 = vpop.f32.mrf.mxu0
      %v585 = vadd.f32 %v397, %v584
      %586 = vmatmul.f32.gmra.mxu0 %v493
      %v587 = vpop.f32.mrf.mxu0
      %v588 = vadd.f32 %v402, %v587
      %589 = vmatmul.f32.gmra.mxu0 %v496
      %v590 = vpop.f32.mrf.mxu0
      %v591 = vadd.f32 %v407, %v590
      %592 = vmatmul.f32.gmra.mxu0 %v499
      %v593 = vpop.f32.mrf.mxu0
      %v594 = vadd.f32 %v412, %v593
      %595 = vmatmul.f32.gmra.mxu0 %v502
      %v596 = vpop.f32.mrf.mxu0
      %v597 = vadd.f32 %v417, %v596
      %598 = vmatmul.f32.gmra.mxu0 %v505
      %v599 = vpop.f32.mrf.mxu0
      %v600 = vadd.f32 %v422, %v599
      %601 = vmatmul.f32.gmra.mxu0 %v508
      %v602 = vpop.f32.mrf.mxu0
      %v603 = vadd.f32 %v427, %v602
      %604 = vmatmul.f32.gmra.mxu0 %v511
      %v605 = vpop.f32.mrf.mxu0
      %v606 = vadd.f32 %v432, %v605
      %607 = vdwg.mxu0
      %v608 = vmax.f32 %v531, 0.0
      %v609 = vmax.f32 %v534, 0.0
      %v610 = vmax.f32 %v537, 0.0
      %v611 = vmax.f32 %v540, 0.0
      %v612 = vmax.f32 %v543, 0.0
      %v613 = vmax.f32 %v546, 0.0
      %v614 = vmax.f32 %v549, 0.0
      %v615 = vmax.f32 %v552, 0.0
      %v616 = vmax.f32 %v555, 0.0
      %v617 = vmax.f32 %v558, 0.0
      %v618 = vmax.f32 %v561, 0.0
      %v619 = vmax.f32 %v564, 0.0
      %v620 = vmax.f32 %v567, 0.0
      %v621 = vmax.f32 %v570, 0.0
      %v622 = vmax.f32 %v573, 0.0
      %v623 = vmax.f32 %v576, 0.0
      %v624 = vmax.f32 %v579, 0.0
      %v625 = vmax.f32 %v582, 0.0
      %v626 = vmax.f32 %v585, 0.0
      %v627 = vmax.f32 %v588, 0.0
      %v628 = vmax.f32 %v591, 0.0
      %v629 = vmax.f32 %v594, 0.0
      %v630 = vmax.f32 %v597, 0.0
      %v631 = vmax.f32 %v600, 0.0
      %v632 = vmax.f32 %v603, 0.0
      %v633 = vmax.f32 %v606, 0.0
      %634 = vst [vmem:[%s241] sm:$0xff] %v608
      %635 = vst [vmem:[%s241 + $0x8] sm:$0xff] %v609
      %636 = vst [vmem:[%s249] sm:$0xff] %v610
      %637 = vst [vmem:[%s249 + $0x8] sm:$0xff] %v611
      %638 = vst [vmem:[%s249 + $0x10] sm:$0xff] %v612
      %639 = vst [vmem:[%s249 + $0x18] sm:$0xff] %v613
      %640 = vst [vmem:[%s249 + $0x20] sm:$0xff] %v614
      %641 = vst [vmem:[%s249 + $0x28] sm:$0xff] %v615
      %642 = vst [vmem:[%s249 + $0x30] sm:$0xff] %v616
      %643 = vst [vmem:[%s249 + $0x38] sm:$0xff] %v617
      %644 = vst [vmem:[%s249 + $0x40] sm:$0xff] %v618
      %645 = vst [vmem:[%s249 + $0x48] sm:$0xff] %v619
      %646 = vst [vmem:[%s249 + $0x50] sm:$0xff] %v620
      %647 = vst [vmem:[%s249 + $0x58] sm:$0xff] %v621
      %648 = vst [vmem:[%s249 + $0x60] sm:$0xff] %v622
      %649 = vst [vmem:[%s249 + $0x68] sm:$0xff] %v623
      %650 = vst [vmem:[%s249 + $0x70] sm:$0xff] %v624
      %651 = vst [vmem:[%s249 + $0x78] sm:$0xff] %v625
      %652 = vst [vmem:[%s249 + $0x80] sm:$0xff] %v626
      %653 = vst [vmem:[%s249 + $0x88] sm:$0xff] %v627
      %654 = vst [vmem:[%s249 + $0x90] sm:$0xff] %v628
      %655 = vst [vmem:[%s249 + $0x98] sm:$0xff] %v629
      %656 = vst [vmem:[%s249 + $0xa0] sm:$0xff] %v630
      %657 = vst [vmem:[%s249 + $0xa8] sm:$0xff] %v631
      %658 = vst [vmem:[%s249 + $0xb0] sm:$0xff] %v632
      %659 = vst [vmem:[%s249 + $0xb8] sm:$0xff] %v633
      %p660 = scmp.lt.s32.totalorder %s20, 1
      %s661 = scalar_select %p660, %s20, 1
      %p662 = scmp.lt.s32.totalorder %s21, 0
      %s663 = scalar_select %p662, %s21, 0
      %s664 = smul.addr %s661, 2
      %s665 = sadd.s32 %s663, %s664
      %s666 = smul.addr %s665, 8
      %s667 = scalar_lea.vmem %s3, %s666
      %p668 = scmp.lt.s32.totalorder %s20, 1
      %s669 = scalar_select %p668, %s20, 1
      %p670 = scmp.lt.s32.totalorder %s21, 0
      %s671 = scalar_select %p670, %s21, 0
      %s672 = smul.addr %s669, 24
      %s673 = sadd.s32 %s671, %s672
      %s674 = smul.addr %s673, 8
      %s675 = scalar_lea.vmem %s4, %s674
      // Predicated region
      $region33: #{inception_c_forward.4} parent=31 // pred_check
        %p676 = pneg %p118
      $region34: #{inception_c_forward.4} parent=31 // pred_check_branch
        %678 = sbr.rel (%p676) target = $region36
      $region35: #{inception_c_forward.4} parent=31 // pred_region
        _
      $region36: #{inception_c_forward.4} parent=31 // pred_fallthru
        _
      // Predicated region
      $region37: #{inception_c_forward.4} parent=31 // pred_check
        %p679 = pneg %p146
      $region38: #{inception_c_forward.4} parent=31 // pred_check_branch
        %681 = sbr.rel (%p679) target = $region40
      $region39: #{inception_c_forward.4} parent=31 // pred_region
        _
      $region40: #{inception_c_forward.4} parent=31 // pred_fallthru
        _
    $region32: #{inception_c_forward.4} parent=5 // pred_fallthru
      _
    %p682 = scmp.le.s32.totalorder 2, %s11
    // Predicated region
    $region41: #{inception_c_forward.4} parent=5 // pred_check
      %p683 = pneg %p682
    $region42: #{inception_c_forward.4} parent=5 // pred_check_branch
      %685 = sbr.rel (%p683) target = $region44
    $region43: #{inception_c_forward.4} parent=5 // pred_region
      %s686 = ssub.s32 %s11, 2
      // Predicated region
      $region45: #{inception_c_forward.4} parent=43 // pred_check
        %p687 = pneg %p124
      $region46: #{inception_c_forward.4} parent=43 // pred_check_branch
        %689 = sbr.rel (%p687) target = $region48
      $region47: #{inception_c_forward.4} parent=43 // pred_region
        %p690 = scmp.lt.s32.totalorder %s22, 1
        %s691 = scalar_select %p690, %s22, 1
        %p692 = scmp.lt.s32.totalorder %s23, 0
        %s693 = scalar_select %p692, %s23, 0
        %s694 = smul.addr %s691, 2
        %s695 = sadd.s32 %s693, %s694
        %s696 = smul.addr %s695, 8
        %s697 = scalar_lea.vmem %s3, %s696
      $region48: #{inception_c_forward.4} parent=43 // pred_fallthru
        _
      // Predicated region
      $region49: #{inception_c_forward.4} parent=43 // pred_check
        %p698 = pneg %p152
      $region50: #{inception_c_forward.4} parent=43 // pred_check_branch
        %700 = sbr.rel (%p698) target = $region52
      $region51: #{inception_c_forward.4} parent=43 // pred_region
        %p701 = scmp.lt.s32.totalorder %s22, 1
        %s702 = scalar_select %p701, %s22, 1
        %p703 = scmp.lt.s32.totalorder %s23, 0
        %s704 = scalar_select %p703, %s23, 0
        %s705 = smul.addr %s702, 24
        %s706 = sadd.s32 %s704, %s705
        %s707 = smul.addr %s706, 8
        %s708 = scalar_lea.vmem %s4, %s707
      $region52: #{inception_c_forward.4} parent=43 // pred_fallthru
        _
    $region44: #{inception_c_forward.4} parent=5 // pred_fallthru
      _
  $region6: #{inception_c_forward.4} parent=0 // loop_footer
    %s15 = sadd.s32 1, %s11
  $region7: #{inception_c_forward.4} parent=0 // loop_footer_branch
    %10 = sbr.rel target = $region3
  $region8: #{inception_c_forward.4} parent=0 // loop_exit
    _

// kernel: inception_c_forward.6
$region0: #{inception_c_forward.6}
  #allocation0 [shape = 'u32[]', space=smem, size = 0x4, offset = 0x4, fixed_abs, tag = 'smem constant byte address 0x4 - core index']
  #allocation1 [shape = 'u32[72,128]{1,0:T(1,128)}', space=vmem, size = 0x9000, scoped, tag = 'internal scratch']
  #allocation2 [shape = 'f32[56,128]{1,0:T(8,128)}', space=vmem, size = 0x7000, scoped, tag = 'scratch operand']
  #allocation3 [shape = 'f32[8,128]{1,0:T(8,128)}', space=vmem, size = 0x1000, scoped, tag = 'scratch operand']
  %s0 = inlined_call_operand.vmem [shape: f32[7,128], index: 0, kind: input, shape index: {}]
  %s1 = inlined_call_operand.vmem [shape: f32[7,128], index: 1, kind: input, shape index: {}]
  %s2 = inlined_call_operand.vmem [shape: f32[8,56], index: 2, kind: input, shape index: {}]
  %s3 = inlined_call_operand.vmem [shape: f32[8,1], index: 3, kind: input, shape index: {}]
  %s4 = inlined_call_operand.vmem [shape: f32[8,56], index: 4, kind: input, shape index: {}]
  %s5 = inlined_call_operand.vmem [shape: f32[8,1], index: 5, kind: input, shape index: {}]
  %s6 = inlined_call_operand.vmem [shape: f32[8,56], index: 6, kind: input, shape index: {}]
  %s7 = inlined_call_operand.vmem [shape: f32[8,1], index: 7, kind: input, shape index: {}]
  %s8 = inlined_call_operand.vmem [shape: f32[192,56], index: 8, kind: input, shape index: {}]
  %s9 = inlined_call_operand.vmem [shape: f32[192,1], index: 9, kind: input, shape index: {}]
  %s10 = inlined_call_operand.vmem [shape: f32[2,16,128], index: 10, kind: input, shape index: {}]
  %s11 = inlined_call_operand.vmem [shape: f32[2,192,128], index: 11, kind: output, shape index: {}]
  %s12 = sld [smem:[#allocation0]]
  $region77: #{inception_c_forward.6} parent=0
    _
  %s14 = ssub.s32 1, %s12
  %s15 = scalar_select 0, %s14, %s12
  loop: start=0, step=1, limit=4
  $region2: #{inception_c_forward.6} parent=0 // loop_pre_header
    _
  $region3: #{inception_c_forward.6} parent=0 // loop_header
    %s17 = sphi 0, %s21
    %p18 = scmp.ge.s32.totalorder %s17, 4
    %s25 = sphi 0, %s25
    %s27 = sphi 0, %s25
    %s28 = sphi 0, %s27
    %s42 = sphi 0, %s28
    %s46 = sphi 0, %s46
    %s48 = sphi 0, %s46
    %s49 = sphi 0, %s48
    %s63 = sphi 0, %s49
    %s67 = sphi 0, %s67
    %s69 = sphi 0, %s67
    %s70 = sphi 0, %s69
    %s84 = sphi 0, %s70
    %s88 = sphi 0, %s88
    %s90 = sphi 0, %s88
    %s91 = sphi 0, %s90
    %s105 = sphi 0, %s91
    %s109 = sphi 0, %s109
    %s111 = sphi 0, %s109
    %s112 = sphi 0, %s111
    %s126 = sphi 0, %s112
    %s130 = sphi 0, %s130
    %s132 = sphi 0, %s130
    %s133 = sphi 0, %s132
    %s147 = sphi 0, %s133
    %s151 = sphi 0, %s151
    %s153 = sphi 0, %s151
    %s154 = sphi 0, %s153
    %s168 = sphi 0, %s154
    %s172 = sphi 0, %s172
    %s174 = sphi 0, %s172
    %s175 = sphi 0, %s174
    %s189 = sphi 0, %s175
    %s193 = sphi 0, %s193
    %s195 = sphi 0, %s193
    %s196 = sphi 0, %s195
    %s210 = sphi 0, %s196
    %s214 = sphi 0, %s214
    %s216 = sphi 0, %s214
    %s217 = sphi 0, %s216
    %s231 = sphi 0, %s217
    %s237 = sphi 0, %s239
    %s240 = sphi 0, %s237
    %s241 = sphi 0, %s240
    %s257 = sphi 0, %s241
    %s263 = sphi 0, %s265
    %s266 = sphi 0, %s263
    %s267 = sphi 0, %s266
    %s283 = sphi 0, %s267
  $region4: #{inception_c_forward.6} parent=0 // loop_header_branch
    %20 = sbr.rel (%p18) target = $region8
  $region5: #{inception_c_forward.6} parent=0 // loop_body
    %s22 = ssub.s32 %s17, 1
    %s23 = ssub.s32 %s17, 2
    %s24 = sadd.s32 %s17, 1
    %s26 = sadd.s32 %s25, 1
    %p29 = scmp.eq.s32.totalorder %s17, 1
    %p30 = scmp.ne.s32.totalorder %s25, %s27
    %p31 = scmp.eq.s32.totalorder %s17, 0
    %p32 = por %p30, %p31
    %p33 = scmp.ne.s32.totalorder %s25, %s27
    %p34 = scmp.eq.s32.totalorder %s22, 1
    %p35 = por %p33, %p34
    %p36 = scmp.ne.s32.totalorder %s27, %s28
    %p37 = scmp.eq.s32.totalorder %s22, 0
    %p38 = por %p36, %p37
    %p39 = scmp.ne.s32.totalorder %s27, %s28
    %p40 = scmp.eq.s32.totalorder %s23, 1
    %p41 = por %p39, %p40
    %p43 = scmp.ne.s32.totalorder %s28, %s42
    %p44 = scmp.eq.s32.totalorder %s23, 0
    %p45 = por %p43, %p44
    %s47 = sadd.s32 %s46, 1
    %p50 = scmp.eq.s32.totalorder %s17, 1
    %p51 = scmp.ne.s32.totalorder %s46, %s48
    %p52 = scmp.eq.s32.totalorder %s17, 0
    %p53 = por %p51, %p52
    %p54 = scmp.ne.s32.totalorder %s46, %s48
    %p55 = scmp.eq.s32.totalorder %s22, 1
    %p56 = por %p54, %p55
    %p57 = scmp.ne.s32.totalorder %s48, %s49
    %p58 = scmp.eq.s32.totalorder %s22, 0
    %p59 = por %p57, %p58
    %p60 = scmp.ne.s32.totalorder %s48, %s49
    %p61 = scmp.eq.s32.totalorder %s23, 1
    %p62 = por %p60, %p61
    %p64 = scmp.ne.s32.totalorder %s49, %s63
    %p65 = scmp.eq.s32.totalorder %s23, 0
    %p66 = por %p64, %p65
    %s68 = sadd.s32 %s67, 1
    %p71 = scmp.eq.s32.totalorder %s17, 1
    %p72 = scmp.ne.s32.totalorder %s67, %s69
    %p73 = scmp.eq.s32.totalorder %s17, 0
    %p74 = por %p72, %p73
    %p75 = scmp.ne.s32.totalorder %s67, %s69
    %p76 = scmp.eq.s32.totalorder %s22, 1
    %p77 = por %p75, %p76
    %p78 = scmp.ne.s32.totalorder %s69, %s70
    %p79 = scmp.eq.s32.totalorder %s22, 0
    %p80 = por %p78, %p79
    %p81 = scmp.ne.s32.totalorder %s69, %s70
    %p82 = scmp.eq.s32.totalorder %s23, 1
    %p83 = por %p81, %p82
    %p85 = scmp.ne.s32.totalorder %s70, %s84
    %p86 = scmp.eq.s32.totalorder %s23, 0
    %p87 = por %p85, %p86
    %s89 = sadd.s32 %s88, 1
    %p92 = scmp.eq.s32.totalorder %s17, 1
    %p93 = scmp.ne.s32.totalorder %s88, %s90
    %p94 = scmp.eq.s32.totalorder %s17, 0
    %p95 = por %p93, %p94
    %p96 = scmp.ne.s32.totalorder %s88, %s90
    %p97 = scmp.eq.s32.totalorder %s22, 1
    %p98 = por %p96, %p97
    %p99 = scmp.ne.s32.totalorder %s90, %s91
    %p100 = scmp.eq.s32.totalorder %s22, 0
    %p101 = por %p99, %p100
    %p102 = scmp.ne.s32.totalorder %s90, %s91
    %p103 = scmp.eq.s32.totalorder %s23, 1
    %p104 = por %p102, %p103
    %p106 = scmp.ne.s32.totalorder %s91, %s105
    %p107 = scmp.eq.s32.totalorder %s23, 0
    %p108 = por %p106, %p107
    %s110 = sadd.s32 %s109, 1
    %p113 = scmp.eq.s32.totalorder %s17, 1
    %p114 = scmp.ne.s32.totalorder %s109, %s111
    %p115 = scmp.eq.s32.totalorder %s17, 0
    %p116 = por %p114, %p115
    %p117 = scmp.ne.s32.totalorder %s109, %s111
    %p118 = scmp.eq.s32.totalorder %s22, 1
    %p119 = por %p117, %p118
    %p120 = scmp.ne.s32.totalorder %s111, %s112
    %p121 = scmp.eq.s32.totalorder %s22, 0
    %p122 = por %p120, %p121
    %p123 = scmp.ne.s32.totalorder %s111, %s112
    %p124 = scmp.eq.s32.totalorder %s23, 1
    %p125 = por %p123, %p124
    %p127 = scmp.ne.s32.totalorder %s112, %s126
    %p128 = scmp.eq.s32.totalorder %s23, 0
    %p129 = por %p127, %p128
    %s131 = sadd.s32 %s130, 1
    %p134 = scmp.eq.s32.totalorder %s17, 1
    %p135 = scmp.ne.s32.totalorder %s130, %s132
    %p136 = scmp.eq.s32.totalorder %s17, 0
    %p137 = por %p135, %p136
    %p138 = scmp.ne.s32.totalorder %s130, %s132
    %p139 = scmp.eq.s32.totalorder %s22, 1
    %p140 = por %p138, %p139
    %p141 = scmp.ne.s32.totalorder %s132, %s133
    %p142 = scmp.eq.s32.totalorder %s22, 0
    %p143 = por %p141, %p142
    %p144 = scmp.ne.s32.totalorder %s132, %s133
    %p145 = scmp.eq.s32.totalorder %s23, 1
    %p146 = por %p144, %p145
    %p148 = scmp.ne.s32.totalorder %s133, %s147
    %p149 = scmp.eq.s32.totalorder %s23, 0
    %p150 = por %p148, %p149
    %s152 = sadd.s32 %s151, 1
    %p155 = scmp.eq.s32.totalorder %s17, 1
    %p156 = scmp.ne.s32.totalorder %s151, %s153
    %p157 = scmp.eq.s32.totalorder %s17, 0
    %p158 = por %p156, %p157
    %p159 = scmp.ne.s32.totalorder %s151, %s153
    %p160 = scmp.eq.s32.totalorder %s22, 1
    %p161 = por %p159, %p160
    %p162 = scmp.ne.s32.totalorder %s153, %s154
    %p163 = scmp.eq.s32.totalorder %s22, 0
    %p164 = por %p162, %p163
    %p165 = scmp.ne.s32.totalorder %s153, %s154
    %p166 = scmp.eq.s32.totalorder %s23, 1
    %p167 = por %p165, %p166
    %p169 = scmp.ne.s32.totalorder %s154, %s168
    %p170 = scmp.eq.s32.totalorder %s23, 0
    %p171 = por %p169, %p170
    %s173 = sadd.s32 %s172, 1
    %p176 = scmp.eq.s32.totalorder %s17, 1
    %p177 = scmp.ne.s32.totalorder %s172, %s174
    %p178 = scmp.eq.s32.totalorder %s17, 0
    %p179 = por %p177, %p178
    %p180 = scmp.ne.s32.totalorder %s172, %s174
    %p181 = scmp.eq.s32.totalorder %s22, 1
    %p182 = por %p180, %p181
    %p183 = scmp.ne.s32.totalorder %s174, %s175
    %p184 = scmp.eq.s32.totalorder %s22, 0
    %p185 = por %p183, %p184
    %p186 = scmp.ne.s32.totalorder %s174, %s175
    %p187 = scmp.eq.s32.totalorder %s23, 1
    %p188 = por %p186, %p187
    %p190 = scmp.ne.s32.totalorder %s175, %s189
    %p191 = scmp.eq.s32.totalorder %s23, 0
    %p192 = por %p190, %p191
    %s194 = sadd.s32 %s193, 1
    %p197 = scmp.eq.s32.totalorder %s17, 1
    %p198 = scmp.ne.s32.totalorder %s193, %s195
    %p199 = scmp.eq.s32.totalorder %s17, 0
    %p200 = por %p198, %p199
    %p201 = scmp.ne.s32.totalorder %s193, %s195
    %p202 = scmp.eq.s32.totalorder %s22, 1
    %p203 = por %p201, %p202
    %p204 = scmp.ne.s32.totalorder %s195, %s196
    %p205 = scmp.eq.s32.totalorder %s22, 0
    %p206 = por %p204, %p205
    %p207 = scmp.ne.s32.totalorder %s195, %s196
    %p208 = scmp.eq.s32.totalorder %s23, 1
    %p209 = por %p207, %p208
    %p211 = scmp.ne.s32.totalorder %s196, %s210
    %p212 = scmp.eq.s32.totalorder %s23, 0
    %p213 = por %p211, %p212
    %s215 = sadd.s32 %s214, 1
    %p218 = scmp.eq.s32.totalorder %s17, 1
    %p219 = scmp.ne.s32.totalorder %s214, %s216
    %p220 = scmp.eq.s32.totalorder %s17, 0
    %p221 = por %p219, %p220
    %p222 = scmp.ne.s32.totalorder %s214, %s216
    %p223 = scmp.eq.s32.totalorder %s22, 1
    %p224 = por %p222, %p223
    %p225 = scmp.ne.s32.totalorder %s216, %s217
    %p226 = scmp.eq.s32.totalorder %s22, 0
    %p227 = por %p225, %p226
    %p228 = scmp.ne.s32.totalorder %s216, %s217
    %p229 = scmp.eq.s32.totalorder %s23, 1
    %p230 = por %p228, %p229
    %p232 = scmp.ne.s32.totalorder %s217, %s231
    %p233 = scmp.eq.s32.totalorder %s23, 0
    %p234 = por %p232, %p233
    %s235 = ssub.s32 %s17, %s24
    %p236 = scmp.eq.s32.totalorder %s235, 0
    %s238 = sadd.s32 %s237, 1
    %s239 = scalar_select %p236, %s237, %s238
    %p242 = pneg %p236
    %p243 = scmp.eq.s32.totalorder %s17, 1
    %p244 = por %p242, %p243
    %p245 = scmp.ne.s32.totalorder %s237, %s240
    %p246 = scmp.eq.s32.totalorder %s17, 0
    %p247 = por %p245, %p246
    %p248 = scmp.ne.s32.totalorder %s237, %s240
    %p249 = scmp.eq.s32.totalorder %s22, 1
    %p250 = por %p248, %p249
    %p251 = scmp.ne.s32.totalorder %s240, %s241
    %p252 = scmp.eq.s32.totalorder %s22, 0
    %p253 = por %p251, %p252
    %p254 = scmp.ne.s32.totalorder %s240, %s241
    %p255 = scmp.eq.s32.totalorder %s23, 1
    %p256 = por %p254, %p255
    %p258 = scmp.ne.s32.totalorder %s241, %s257
    %p259 = scmp.eq.s32.totalorder %s23, 0
    %p260 = por %p258, %p259
    %s261 = ssub.s32 %s17, %s24
    %p262 = scmp.eq.s32.totalorder %s261, 0
    %s264 = sadd.s32 %s263, 1
    %s265 = scalar_select %p262, %s263, %s264
    %p268 = pneg %p262
    %p269 = scmp.eq.s32.totalorder %s17, 1
    %p270 = por %p268, %p269
    %p271 = scmp.ne.s32.totalorder %s263, %s266
    %p272 = scmp.eq.s32.totalorder %s17, 0
    %p273 = por %p271, %p272
    %p274 = scmp.ne.s32.totalorder %s263, %s266
    %p275 = scmp.eq.s32.totalorder %s22, 1
    %p276 = por %p274, %p275
    %p277 = scmp.ne.s32.totalorder %s266, %s267
    %p278 = scmp.eq.s32.totalorder %s22, 0
    %p279 = por %p277, %p278
    %p280 = scmp.ne.s32.totalorder %s266, %s267
    %p281 = scmp.eq.s32.totalorder %s23, 1
    %p282 = por %p280, %p281
    %p284 = scmp.ne.s32.totalorder %s267, %s283
    %p285 = scmp.eq.s32.totalorder %s23, 0
    %p286 = por %p284, %p285
    %p287 = scmp.le.s32.totalorder 1, %s17
    %p288 = scmp.lt.s32.totalorder %s17, 3
    %p289 = pnand %p287, %p288
    %p290 = pneg %p289
    // Predicated region
    $region9: #{inception_c_forward.6} parent=5 // pred_check
      _
    $region10: #{inception_c_forward.6} parent=5 // pred_check_branch
      %292 = sbr.rel (%p289) target = $region12
    $region11: #{inception_c_forward.6} parent=5 // pred_region
      %s293 = ssub.s32 %s17, 1
      // Predicated region
      $region13: #{inception_c_forward.6} parent=11 // pred_check
        %p294 = pneg %p38
      $region14: #{inception_c_forward.6} parent=11 // pred_check_branch
        %296 = sbr.rel (%p294) target = $region16
      $region15: #{inception_c_forward.6} parent=11 // pred_region
        _
      $region16: #{inception_c_forward.6} parent=11 // pred_fallthru
        _
      // Predicated region
      $region17: #{inception_c_forward.6} parent=11 // pred_check
        %p297 = pneg %p59
      $region18: #{inception_c_forward.6} parent=11 // pred_check_branch
        %299 = sbr.rel (%p297) target = $region20
      $region19: #{inception_c_forward.6} parent=11 // pred_region
        _
      $region20: #{inception_c_forward.6} parent=11 // pred_fallthru
        _
      // Predicated region
      $region21: #{inception_c_forward.6} parent=11 // pred_check
        %p300 = pneg %p80
      $region22: #{inception_c_forward.6} parent=11 // pred_check_branch
        %302 = sbr.rel (%p300) target = $region24
      $region23: #{inception_c_forward.6} parent=11 // pred_region
        _
      $region24: #{inception_c_forward.6} parent=11 // pred_fallthru
        _
      // Predicated region
      $region25: #{inception_c_forward.6} parent=11 // pred_check
        %p303 = pneg %p101
      $region26: #{inception_c_forward.6} parent=11 // pred_check_branch
        %305 = sbr.rel (%p303) target = $region28
      $region27: #{inception_c_forward.6} parent=11 // pred_region
        _
      $region28: #{inception_c_forward.6} parent=11 // pred_fallthru
        _
      // Predicated region
      $region29: #{inception_c_forward.6} parent=11 // pred_check
        %p306 = pneg %p122
      $region30: #{inception_c_forward.6} parent=11 // pred_check_branch
        %308 = sbr.rel (%p306) target = $region32
      $region31: #{inception_c_forward.6} parent=11 // pred_region
        _
      $region32: #{inception_c_forward.6} parent=11 // pred_fallthru
        _
      // Predicated region
      $region33: #{inception_c_forward.6} parent=11 // pred_check
        %p309 = pneg %p143
      $region34: #{inception_c_forward.6} parent=11 // pred_check_branch
        %311 = sbr.rel (%p309) target = $region36
      $region35: #{inception_c_forward.6} parent=11 // pred_region
        _
      $region36: #{inception_c_forward.6} parent=11 // pred_fallthru
        _
      // Predicated region
      $region37: #{inception_c_forward.6} parent=11 // pred_check
        %p312 = pneg %p164
      $region38: #{inception_c_forward.6} parent=11 // pred_check_branch
        %314 = sbr.rel (%p312) target = $region40
      $region39: #{inception_c_forward.6} parent=11 // pred_region
        _
      $region40: #{inception_c_forward.6} parent=11 // pred_fallthru
        _
      // Predicated region
      $region41: #{inception_c_forward.6} parent=11 // pred_check
        %p315 = pneg %p185
      $region42: #{inception_c_forward.6} parent=11 // pred_check_branch
        %317 = sbr.rel (%p315) target = $region44
      $region43: #{inception_c_forward.6} parent=11 // pred_region
        _
      $region44: #{inception_c_forward.6} parent=11 // pred_fallthru
        _
      // Predicated region
      $region45: #{inception_c_forward.6} parent=11 // pred_check
        %p318 = pneg %p206
      $region46: #{inception_c_forward.6} parent=11 // pred_check_branch
        %320 = sbr.rel (%p318) target = $region48
      $region47: #{inception_c_forward.6} parent=11 // pred_region
        _
      $region48: #{inception_c_forward.6} parent=11 // pred_fallthru
        _
      // Predicated region
      $region49: #{inception_c_forward.6} parent=11 // pred_check
        %p321 = pneg %p227
      $region50: #{inception_c_forward.6} parent=11 // pred_check_branch
        %323 = sbr.rel (%p321) target = $region52
      $region51: #{inception_c_forward.6} parent=11 // pred_region
        _
      $region52: #{inception_c_forward.6} parent=11 // pred_fallthru
        _
    $region12: #{inception_c_forward.6} parent=5 // pred_fallthru
      _
    %p324 = scmp.lt.s32.totalorder %s17, 2
    // Predicated region
    $region53: #{inception_c_forward.6} parent=5 // pred_check
      %p325 = pneg %p324
    $region54: #{inception_c_forward.6} parent=5 // pred_check_branch
      %327 = sbr.rel (%p325) target = $region56
    $region55: #{inception_c_forward.6} parent=5 // pred_region
      // Predicated region
      $region57: #{inception_c_forward.6} parent=55 // pred_check
        %p328 = pneg %p247
      $region58: #{inception_c_forward.6} parent=55 // pred_check_branch
        %330 = sbr.rel (%p328) target = $region60
      $region59: #{inception_c_forward.6} parent=55 // pred_region
        %p331 = scmp.lt.s32.totalorder %s17, 1
        %s332 = scalar_select %p331, %s17, 1
        %s333 = smul.addr %s332, 2
        %s334 = sadd.s32 1, %s333
        %s335 = smul.addr %s334, 8
        %s336 = scalar_lea.vmem %s10, %s335
      $region60: #{inception_c_forward.6} parent=55 // pred_fallthru
        _
    $region56: #{inception_c_forward.6} parent=5 // pred_fallthru
      _
    %p337 = scmp.le.s32.totalorder 1, %s17
    %p338 = scmp.lt.s32.totalorder %s17, 3
    %p339 = pnand %p337, %p338
    %p340 = pneg %p339
    // Predicated region
    $region61: #{inception_c_forward.6} parent=5 // pred_check
      _
    $region62: #{inception_c_forward.6} parent=5 // pred_check_branch
      %342 = sbr.rel (%p339) target = $region64
    $region63: #{inception_c_forward.6} parent=5 // pred_region
      %s343 = ssub.s32 %s17, 1
      %p344 = pneg %p38
      %p345 = pneg %p35
      %p346 = pneg %p59
      %p347 = pneg %p56
      %p348 = pneg %p80
      %p349 = pneg %p77
      %p350 = pneg %p101
      %p351 = pneg %p98
      %p352 = pneg %p122
      %p353 = pneg %p119
      %p354 = pneg %p143
      %p355 = pneg %p140
      %p356 = pneg %p164
      %p357 = pneg %p161
      %p358 = pneg %p185
      %p359 = pneg %p182
      %p360 = pneg %p206
      %p361 = pneg %p203
      %p362 = pneg %p227
      %p363 = pneg %p224
      %p364 = scmp.lt.s32.totalorder %s22, 1
      %s365 = scalar_select %p364, %s22, 1
      %s366 = smul.addr %s365, 2
      %s367 = sadd.s32 1, %s366
      %s368 = smul.addr %s367, 8
      %s369 = scalar_lea.vmem %s10, %s368
      %p370 = pneg %p253
      %p371 = pneg %p250
      %p372 = pneg %p279
      %p373 = pneg %p276
      %p374 = scmp.lt.s32.totalorder %s22, 1
      %s375 = scalar_select %p374, %s22, 1
      %s376 = smul.addr %s375, 24
      %s377 = smul.addr %s376, 8
      %s378 = scalar_lea.vmem %s11, %s377
      %p379 = scmp.lt.s32.totalorder %s22, 1
      %s380 = scalar_select %p379, %s22, 1
      %s381 = smul.addr %s380, 2
      %s382 = sadd.s32 1, %s381
      %s383 = smul.addr %s382, 8
      %s384 = scalar_lea.vmem %s10, %s383
      %p385 = scmp.lt.s32.totalorder %s22, 1
      %s386 = scalar_select %p385, %s22, 1
      %s387 = smul.addr %s386, 24
      %s388 = smul.addr %s387, 8
      %s389 = scalar_lea.vmem %s11, %s388
      %v390 = vld [vmem:[%s384] sm:$0xff]
      %391 = vst [vmem:[#allocation3] sm:$0xff] %v390
      %v392 = vld [vmem:[#allocation3] sm:$0xff]
      %393 = vrot.lane.b32.xlu0 %v392, 24
      %v394 = vpop.permute.xlu0 %393
      %v395 = vld [vmem:[%s1] sm:$0x1]
      %v396 = vperm.slane %v395, 0
      %v397 = vmul.f32 %v394, %v396
      %398 = vst [vmem:[#allocation2] sm:$0xff] %v397
      %v399 = vld [vmem:[#allocation3] sm:$0xff]
      %400 = vrot.lane.b32.xlu0 %v399, 16
      %v401 = vpop.permute.xlu0 %400
      %v402 = vld [vmem:[%s1 + $0x1] sm:$0x1]
      %v403 = vperm.slane %v402, 0
      %v404 = vmul.f32 %v401, %v403
      %405 = vst [vmem:[#allocation2 + $0x8] sm:$0xff] %v404
      %v406 = vld [vmem:[#allocation3] sm:$0xff]
      %407 = vrot.lane.b32.xlu0 %v406, 8
      %v408 = vpop.permute.xlu0 %407
      %v409 = vld [vmem:[%s1 + $0x2] sm:$0x1]
      %v410 = vperm.slane %v409, 0
      %v411 = vmul.f32 %v408, %v410
      %412 = vst [vmem:[#allocation2 + $0x10] sm:$0xff] %v411
      %v413 = vld [vmem:[#allocation3] sm:$0xff]
      %v414 = vld [vmem:[%s1 + $0x3] sm:$0x1]
      %v415 = vperm.slane %v414, 0
      %v416 = vmul.f32 %v413, %v415
      %417 = vst [vmem:[#allocation2 + $0x18] sm:$0xff] %v416
      %v418 = vld [vmem:[#allocation3] sm:$0xff]
      %419 = vrot.lane.b32.xlu0 %v418, 120
      %v420 = vpop.permute.xlu0 %419
      %v421 = vld [vmem:[%s1 + $0x4] sm:$0x1]
      %v422 = vperm.slane %v421, 0
      %v423 = vmul.f32 %v420, %v422
      %424 = vst [vmem:[#allocation2 + $0x20] sm:$0xff] %v423
      %v425 = vld [vmem:[#allocation3] sm:$0xff]
      %426 = vrot.lane.b32.xlu0 %v425, 112
      %v427 = vpop.permute.xlu0 %426
      %v428 = vld [vmem:[%s1 + $0x5] sm:$0x1]
      %v429 = vperm.slane %v428, 0
      %v430 = vmul.f32 %v427, %v429
      %431 = vst [vmem:[#allocation2 + $0x28] sm:$0xff] %v430
      %v432 = vld [vmem:[#allocation3] sm:$0xff]
      %433 = vrot.lane.b32.xlu0 %v432, 104
      %v434 = vpop.permute.xlu0 %433
      %v435 = vld [vmem:[%s1 + $0x6] sm:$0x1]
      %v436 = vperm.slane %v435, 0
      %v437 = vmul.f32 %v434, %v436
      %438 = vst [vmem:[#allocation2 + $0x30] sm:$0xff] %v437
      %v439 = vld [vmem:[%s2] sm:$0xff]
      %v440 = vld [vmem:[#allocation2] sm:$0xff]
      %v441 = vld [vmem:[#allocation2 + $0x8] sm:$0xff]
      %v442 = vld [vmem:[#allocation2 + $0x10] sm:$0xff]
      %v443 = vld [vmem:[#allocation2 + $0x18] sm:$0xff]
      %v444 = vld [vmem:[#allocation2 + $0x20] sm:$0xff]
      %v445 = vld [vmem:[#allocation2 + $0x28] sm:$0xff]
      %v446 = vld [vmem:[#allocation2 + $0x30] sm:$0xff]
      %v447 = vld [vmem:[%s3] sm:$0xff]
      %449 = vset.pattern.permute.xlu0 0
      %450 = vperm.xlu0 %449, %v447
      %v451 = vpop.permute.xlu0 %450
      %vm453 = vcmask 457728
      %v455 = vsel %vm453, %v439, 0
      %457 = vmatpush.msra.mxu0 0.0
      %458 = vmatpush.msra.mxu0 0.0
      %459 = vmatpush.msra.mxu0 0.0
      %460 = vmatpush.msra.mxu0 0.0
      %461 = vmatpush.msra.mxu0 0.0
      %462 = vmatpush.msra.mxu0 0.0
      %463 = vmatpush.msra.mxu0 0.0
      %464 = vmatpush.msra.mxu0 0.0
      %465 = vmatpush.msra.mxu0 0.0
      %466 = vmatpush.msra.mxu0 %v446
      %467 = vmatpush.msra.mxu0 %v445
      %468 = vmatpush.msra.mxu0 %v444
      %469 = vmatpush.msra.mxu0 %v443
      %470 = vmatpush.msra.mxu0 %v442
      %471 = vmatpush.msra.mxu0 %v441
      %472 = vmatpush.msra.mxu0 %v440
      %473 = vmatmul.f32.gmra.mxu0 %v455
      %v474 = vpop.f32.mrf.mxu0
      %v475 = vadd.f32 %v451, %v474
      %476 = vdwg.mxu0
      %v477 = vmax.f32 %v475, 0.0
      %478 = vst [vmem:[#allocation3] sm:$0xff] %v477
      %v479 = vld [vmem:[#allocation3] sm:$0xff]
      %480 = vrot.lane.b32.xlu0 %v479, 3
      %v481 = vpop.permute.xlu0 %480
      %v482 = vld [vmem:[%s0] sm:$0x1]
      %v483 = vperm.slane %v482, 0
      %v484 = vmul.f32 %v481, %v483
      %485 = vst [vmem:[#allocation2] sm:$0xff] %v484
      %v486 = vld [vmem:[#allocation3] sm:$0xff]
      %487 = vrot.lane.b32.xlu0 %v486, 2
      %v488 = vpop.permute.xlu0 %487
      %v489 = vld [vmem:[%s0 + $0x1] sm:$0x1]
      %v490 = vperm.slane %v489, 0
      %v491 = vmul.f32 %v488, %v490
      %492 = vst [vmem:[#allocation2 + $0x8] sm:$0xff] %v491
      %v493 = vld [vmem:[#allocation3] sm:$0xff]
      %494 = vrot.lane.b32.xlu0 %v493, 1
      %v495 = vpop.permute.xlu0 %494
      %v496 = vld [vmem:[%s0 + $0x2] sm:$0x1]
      %v497 = vperm.slane %v496, 0
      %v498 = vmul.f32 %v495, %v497
      %499 = vst [vmem:[#allocation2 + $0x10] sm:$0xff] %v498
      %v500 = vld [vmem:[#allocation3] sm:$0xff]
      %v501 = vld [vmem:[%s0 + $0x3] sm:$0x1]
      %v502 = vperm.slane %v501, 0
      %v503 = vmul.f32 %v500, %v502
      %504 = vst [vmem:[#allocation2 + $0x18] sm:$0xff] %v503
      %v505 = vld [vmem:[#allocation3] sm:$0xff]
      %506 = vrot.lane.b32.xlu0 %v505, 127
      %v507 = vpop.permute.xlu0 %506
      %v508 = vld [vmem:[%s0 + $0x4] sm:$0x1]
      %v509 = vperm.slane %v508, 0
      %v510 = vmul.f32 %v507, %v509
      %511 = vst [vmem:[#allocation2 + $0x20] sm:$0xff] %v510
      %v512 = vld [vmem:[#allocation3] sm:$0xff]
      %513 = vrot.lane.b32.xlu0 %v512, 126
      %v514 = vpop.permute.xlu0 %513
      %v515 = vld [vmem:[%s0 + $0x5] sm:$0x1]
      %v516 = vperm.slane %v515, 0
      %v517 = vmul.f32 %v514, %v516
      %518 = vst [vmem:[#allocation2 + $0x28] sm:$0xff] %v517
      %v519 = vld [vmem:[#allocation3] sm:$0xff]
      %520 = vrot.lane.b32.xlu0 %v519, 125
      %v521 = vpop.permute.xlu0 %520
      %v522 = vld [vmem:[%s0 + $0x6] sm:$0x1]
      %v523 = vperm.slane %v522, 0
      %v524 = vmul.f32 %v521, %v523
      %525 = vst [vmem:[#allocation2 + $0x30] sm:$0xff] %v524
      %v526 = vld [vmem:[%s4] sm:$0xff]
      %v527 = vld [vmem:[#allocation2] sm:$0xff]
      %v528 = vld [vmem:[#allocation2 + $0x8] sm:$0xff]
      %v529 = vld [vmem:[#allocation2 + $0x10] sm:$0xff]
      %v530 = vld [vmem:[#allocation2 + $0x18] sm:$0xff]
      %v531 = vld [vmem:[#allocation2 + $0x20] sm:$0xff]
      %v532 = vld [vmem:[#allocation2 + $0x28] sm:$0xff]
      %v533 = vld [vmem:[#allocation2 + $0x30] sm:$0xff]
      %v534 = vld [vmem:[%s5] sm:$0xff]
      %536 = vset.pattern.permute.xlu0 0
      %537 = vperm.xlu0 %536, %v534
      %v538 = vpop.permute.xlu0 %537
      %v541 = vsel %vm453, %v526, 0
      %543 = vmatpush.msra.mxu0 0.0
      %544 = vmatpush.msra.mxu0 0.0
      %545 = vmatpush.msra.mxu0 0.0
      %546 = vmatpush.msra.mxu0 0.0
      %547 = vmatpush.msra.mxu0 0.0
      %548 = vmatpush.msra.mxu0 0.0
      %549 = vmatpush.msra.mxu0 0.0
      %550 = vmatpush.msra.mxu0 0.0
      %551 = vmatpush.msra.mxu0 0.0
      %552 = vmatpush.msra.mxu0 %v533
      %553 = vmatpush.msra.mxu0 %v532
      %554 = vmatpush.msra.mxu0 %v531
      %555 = vmatpush.msra.mxu0 %v530
      %556 = vmatpush.msra.mxu0 %v529
      %557 = vmatpush.msra.mxu0 %v528
      %558 = vmatpush.msra.mxu0 %v527
      %559 = vmatmul.f32.gmra.mxu0 %v541
      %v560 = vpop.f32.mrf.mxu0
      %v561 = vadd.f32 %v538, %v560
      %562 = vdwg.mxu0
      %v563 = vmax.f32 %v561, 0.0
      %564 = vst [vmem:[#allocation3] sm:$0xff] %v563
      %v565 = vld [vmem:[#allocation3] sm:$0xff]
      %566 = vrot.lane.b32.xlu0 %v565, 24
      %v567 = vpop.permute.xlu0 %566
      %v568 = vld [vmem:[%s1] sm:$0x1]
      %v569 = vperm.slane %v568, 0
      %v570 = vmul.f32 %v567, %v569
      %571 = vst [vmem:[#allocation2] sm:$0xff] %v570
      %v572 = vld [vmem:[#allocation3] sm:$0xff]
      %573 = vrot.lane.b32.xlu0 %v572, 16
      %v574 = vpop.permute.xlu0 %573
      %v575 = vld [vmem:[%s1 + $0x1] sm:$0x1]
      %v576 = vperm.slane %v575, 0
      %v577 = vmul.f32 %v574, %v576
      %578 = vst [vmem:[#allocation2 + $0x8] sm:$0xff] %v577
      %v579 = vld [vmem:[#allocation3] sm:$0xff]
      %580 = vrot.lane.b32.xlu0 %v579, 8
      %v581 = vpop.permute.xlu0 %580
      %v582 = vld [vmem:[%s1 + $0x2] sm:$0x1]
      %v583 = vperm.slane %v582, 0
      %v584 = vmul.f32 %v581, %v583
      %585 = vst [vmem:[#allocation2 + $0x10] sm:$0xff] %v584
      %v586 = vld [vmem:[#allocation3] sm:$0xff]
      %v587 = vld [vmem:[%s1 + $0x3] sm:$0x1]
      %v588 = vperm.slane %v587, 0
      %v589 = vmul.f32 %v586, %v588
      %590 = vst [vmem:[#allocation2 + $0x18] sm:$0xff] %v589
      %v591 = vld [vmem:[#allocation3] sm:$0xff]
      %592 = vrot.lane.b32.xlu0 %v591, 120
      %v593 = vpop.permute.xlu0 %592
      %v594 = vld [vmem:[%s1 + $0x4] sm:$0x1]
      %v595 = vperm.slane %v594, 0
      %v596 = vmul.f32 %v593, %v595
      %597 = vst [vmem:[#allocation2 + $0x20] sm:$0xff] %v596
      %v598 = vld [vmem:[#allocation3] sm:$0xff]
      %599 = vrot.lane.b32.xlu0 %v598, 112
      %v600 = vpop.permute.xlu0 %599
      %v601 = vld [vmem:[%s1 + $0x5] sm:$0x1]
      %v602 = vperm.slane %v601, 0
      %v603 = vmul.f32 %v600, %v602
      %604 = vst [vmem:[#allocation2 + $0x28] sm:$0xff] %v603
      %v605 = vld [vmem:[#allocation3] sm:$0xff]
      %606 = vrot.lane.b32.xlu0 %v605, 104
      %v607 = vpop.permute.xlu0 %606
      %v608 = vld [vmem:[%s1 + $0x6] sm:$0x1]
      %v609 = vperm.slane %v608, 0
      %v610 = vmul.f32 %v607, %v609
      %611 = vst [vmem:[#allocation2 + $0x30] sm:$0xff] %v610
      %v612 = vld [vmem:[%s6] sm:$0xff]
      %v613 = vld [vmem:[#allocation2] sm:$0xff]
      %v614 = vld [vmem:[#allocation2 + $0x8] sm:$0xff]
      %v615 = vld [vmem:[#allocation2 + $0x10] sm:$0xff]
      %v616 = vld [vmem:[#allocation2 + $0x18] sm:$0xff]
      %v617 = vld [vmem:[#allocation2 + $0x20] sm:$0xff]
      %v618 = vld [vmem:[#allocation2 + $0x28] sm:$0xff]
      %v619 = vld [vmem:[#allocation2 + $0x30] sm:$0xff]
      %v620 = vld [vmem:[%s7] sm:$0xff]
      %622 = vset.pattern.permute.xlu0 0
      %623 = vperm.xlu0 %622, %v620
      %v624 = vpop.permute.xlu0 %623
      %v627 = vsel %vm453, %v612, 0
      %629 = vmatpush.msra.mxu0 0.0
      %630 = vmatpush.msra.mxu0 0.0
      %631 = vmatpush.msra.mxu0 0.0
      %632 = vmatpush.msra.mxu0 0.0
      %633 = vmatpush.msra.mxu0 0.0
      %634 = vmatpush.msra.mxu0 0.0
      %635 = vmatpush.msra.mxu0 0.0
      %636 = vmatpush.msra.mxu0 0.0
      %637 = vmatpush.msra.mxu0 0.0
      %638 = vmatpush.msra.mxu0 %v619
      %639 = vmatpush.msra.mxu0 %v618
      %640 = vmatpush.msra.mxu0 %v617
      %641 = vmatpush.msra.mxu0 %v616
      %642 = vmatpush.msra.mxu0 %v615
      %643 = vmatpush.msra.mxu0 %v614
      %644 = vmatpush.msra.mxu0 %v613
      %645 = vmatmul.f32.gmra.mxu0 %v627
      %v646 = vpop.f32.mrf.mxu0
      %v647 = vadd.f32 %v624, %v646
      %648 = vdwg.mxu0
      %v649 = vmax.f32 %v647, 0.0
      %650 = vst [vmem:[#allocation3] sm:$0xff] %v649
      %v651 = vld [vmem:[#allocation3] sm:$0xff]
      %652 = vrot.lane.b32.xlu0 %v651, 3
      %v653 = vpop.permute.xlu0 %652
      %v654 = vld [vmem:[%s0] sm:$0x1]
      %v655 = vperm.slane %v654, 0
      %v656 = vmul.f32 %v653, %v655
      %657 = vst [vmem:[#allocation2] sm:$0xff] %v656
      %v658 = vld [vmem:[#allocation3] sm:$0xff]
      %659 = vrot.lane.b32.xlu0 %v658, 2
      %v660 = vpop.permute.xlu0 %659
      %v661 = vld [vmem:[%s0 + $0x1] sm:$0x1]
      %v662 = vperm.slane %v661, 0
      %v663 = vmul.f32 %v660, %v662
      %664 = vst [vmem:[#allocation2 + $0x8] sm:$0xff] %v663
      %v665 = vld [vmem:[#allocation3] sm:$0xff]
      %666 = vrot.lane.b32.xlu0 %v665, 1
      %v667 = vpop.permute.xlu0 %666
      %v668 = vld [vmem:[%s0 + $0x2] sm:$0x1]
      %v669 = vperm.slane %v668, 0
      %v670 = vmul.f32 %v667, %v669
      %671 = vst [vmem:[#allocation2 + $0x10] sm:$0xff] %v670
      %v672 = vld [vmem:[#allocation3] sm:$0xff]
      %v673 = vld [vmem:[%s0 + $0x3] sm:$0x1]
      %v674 = vperm.slane %v673, 0
      %v675 = vmul.f32 %v672, %v674
      %676 = vst [vmem:[#allocation2 + $0x18] sm:$0xff] %v675
      %v677 = vld [vmem:[#allocation3] sm:$0xff]
      %678 = vrot.lane.b32.xlu0 %v677, 127
      %v679 = vpop.permute.xlu0 %678
      %v680 = vld [vmem:[%s0 + $0x4] sm:$0x1]
      %v681 = vperm.slane %v680, 0
      %v682 = vmul.f32 %v679, %v681
      %683 = vst [vmem:[#allocation2 + $0x20] sm:$0xff] %v682
      %v684 = vld [vmem:[#allocation3] sm:$0xff]
      %685 = vrot.lane.b32.xlu0 %v684, 126
      %v686 = vpop.permute.xlu0 %685
      %v687 = vld [vmem:[%s0 + $0x5] sm:$0x1]
      %v688 = vperm.slane %v687, 0
      %v689 = vmul.f32 %v686, %v688
      %690 = vst [vmem:[#allocation2 + $0x28] sm:$0xff] %v689
      %v691 = vld [vmem:[#allocation3] sm:$0xff]
      %692 = vrot.lane.b32.xlu0 %v691, 125
      %v693 = vpop.permute.xlu0 %692
      %v694 = vld [vmem:[%s0 + $0x6] sm:$0x1]
      %v695 = vperm.slane %v694, 0
      %v696 = vmul.f32 %v693, %v695
      %697 = vst [vmem:[#allocation2 + $0x30] sm:$0xff] %v696
      %v698 = vld [vmem:[%s8] sm:$0xff]
      %v699 = vld [vmem:[%s8 + $0x8] sm:$0xff]
      %v700 = vld [vmem:[%s8 + $0x10] sm:$0xff]
      %v701 = vld [vmem:[%s8 + $0x18] sm:$0xff]
      %v702 = vld [vmem:[%s8 + $0x20] sm:$0xff]
      %v703 = vld [vmem:[%s8 + $0x28] sm:$0xff]
      %v704 = vld [vmem:[%s8 + $0x30] sm:$0xff]
      %v705 = vld [vmem:[%s8 + $0x38] sm:$0xff]
      %v706 = vld [vmem:[%s8 + $0x40] sm:$0xff]
      %v707 = vld [vmem:[%s8 + $0x48] sm:$0xff]
      %v708 = vld [vmem:[%s8 + $0x50] sm:$0xff]
      %v709 = vld [vmem:[%s8 + $0x58] sm:$0xff]
      %v710 = vld [vmem:[%s8 + $0x60] sm:$0xff]
      %v711 = vld [vmem:[%s8 + $0x68] sm:$0xff]
      %v712 = vld [vmem:[%s8 + $0x70] sm:$0xff]
      %v713 = vld [vmem:[%s8 + $0x78] sm:$0xff]
      %v714 = vld [vmem:[%s8 + $0x80] sm:$0xff]
      %v715 = vld [vmem:[%s8 + $0x88] sm:$0xff]
      %v716 = vld [vmem:[%s8 + $0x90] sm:$0xff]
      %v717 = vld [vmem:[%s8 + $0x98] sm:$0xff]
      %v718 = vld [vmem:[%s8 + $0xa0] sm:$0xff]
      %v719 = vld [vmem:[%s8 + $0xa8] sm:$0xff]
      %v720 = vld [vmem:[%s8 + $0xb0] sm:$0xff]
      %v721 = vld [vmem:[%s8 + $0xb8] sm:$0xff]
      %v722 = vld [vmem:[#allocation2] sm:$0xff]
      %v723 = vld [vmem:[#allocation2 + $0x8] sm:$0xff]
      %v724 = vld [vmem:[#allocation2 + $0x10] sm:$0xff]
      %v725 = vld [vmem:[#allocation2 + $0x18] sm:$0xff]
      %v726 = vld [vmem:[#allocation2 + $0x20] sm:$0xff]
      %v727 = vld [vmem:[#allocation2 + $0x28] sm:$0xff]
      %v728 = vld [vmem:[#allocation2 + $0x30] sm:$0xff]
      %v729 = vld [vmem:[%s9] sm:$0xff]
      %v730 = vld [vmem:[%s9 + $0x8] sm:$0xff]
      %v731 = vld [vmem:[%s9 + $0x10] sm:$0xff]
      %v732 = vld [vmem:[%s9 + $0x18] sm:$0xff]
      %v733 = vld [vmem:[%s9 + $0x20] sm:$0xff]
      %v734 = vld [vmem:[%s9 + $0x28] sm:$0xff]
      %v735 = vld [vmem:[%s9 + $0x30] sm:$0xff]
      %v736 = vld [vmem:[%s9 + $0x38] sm:$0xff]
      %v737 = vld [vmem:[%s9 + $0x40] sm:$0xff]
      %v738 = vld [vmem:[%s9 + $0x48] sm:$0xff]
      %v739 = vld [vmem:[%s9 + $0x50] sm:$0xff]
      %v740 = vld [vmem:[%s9 + $0x58] sm:$0xff]
      %v741 = vld [vmem:[%s9 + $0x60] sm:$0xff]
      %v742 = vld [vmem:[%s9 + $0x68] sm:$0xff]
      %v743 = vld [vmem:[%s9 + $0x70] sm:$0xff]
      %v744 = vld [vmem:[%s9 + $0x78] sm:$0xff]
      %v745 = vld [vmem:[%s9 + $0x80] sm:$0xff]
      %v746 = vld [vmem:[%s9 + $0x88] sm:$0xff]
      %v747 = vld [vmem:[%s9 + $0x90] sm:$0xff]
      %v748 = vld [vmem:[%s9 + $0x98] sm:$0xff]
      %v749 = vld [vmem:[%s9 + $0xa0] sm:$0xff]
      %v750 = vld [vmem:[%s9 + $0xa8] sm:$0xff]
      %v751 = vld [vmem:[%s9 + $0xb0] sm:$0xff]
      %v752 = vld [vmem:[%s9 + $0xb8] sm:$0xff]
      %754 = vset.pattern.permute.xlu0 0
      %755 = vperm.xlu0 %754, %v729
      %v756 = vpop.permute.xlu0 %755
      %759 = vset.pattern.permute.xlu0 0
      %760 = vperm.xlu0 %759, %v730
      %v761 = vpop.permute.xlu0 %760
      %764 = vset.pattern.permute.xlu0 0
      %765 = vperm.xlu0 %764, %v731
      %v766 = vpop.permute.xlu0 %765
      %769 = vset.pattern.permute.xlu0 0
      %770 = vperm.xlu0 %769, %v732
      %v771 = vpop.permute.xlu0 %770
      %774 = vset.pattern.permute.xlu0 0
      %775 = vperm.xlu0 %774, %v733
      %v776 = vpop.permute.xlu0 %775
      %779 = vset.pattern.permute.xlu0 0
      %780 = vperm.xlu0 %779, %v734
      %v781 = vpop.permute.xlu0 %780
      %784 = vset.pattern.permute.xlu0 0
      %785 = vperm.xlu0 %784, %v735
      %v786 = vpop.permute.xlu0 %785
      %789 = vset.pattern.permute.xlu0 0
      %790 = vperm.xlu0 %789, %v736
      %v791 = vpop.permute.xlu0 %790
      %794 = vset.pattern.permute.xlu0 0
      %795 = vperm.xlu0 %794, %v737
      %v796 = vpop.permute.xlu0 %795
      %799 = vset.pattern.permute.xlu0 0
      %800 = vperm.xlu0 %799, %v738
      %v801 = vpop.permute.xlu0 %800
      %804 = vset.pattern.permute.xlu0 0
      %805 = vperm.xlu0 %804, %v739
      %v806 = vpop.permute.xlu0 %805
      %809 = vset.pattern.permute.xlu0 0
      %810 = vperm.xlu0 %809, %v740
      %v811 = vpop.permute.xlu0 %810
      %814 = vset.pattern.permute.xlu0 0
      %815 = vperm.xlu0 %814, %v741
      %v816 = vpop.permute.xlu0 %815
      %819 = vset.pattern.permute.xlu0 0
      %820 = vperm.xlu0 %819, %v742
      %v821 = vpop.permute.xlu0 %820
      %824 = vset.pattern.permute.xlu0 0
      %825 = vperm.xlu0 %824, %v743
      %v826 = vpop.permute.xlu0 %825
      %829 = vset.pattern.permute.xlu0 0
      %830 = vperm.xlu0 %829, %v744
      %v831 = vpop.permute.xlu0 %830
      %834 = vset.pattern.permute.xlu0 0
      %835 = vperm.xlu0 %834, %v745
      %v836 = vpop.permute.xlu0 %835
      %839 = vset.pattern.permute.xlu0 0
      %840 = vperm.xlu0 %839, %v746
      %v841 = vpop.permute.xlu0 %840
      %844 = vset.pattern.permute.xlu0 0
      %845 = vperm.xlu0 %844, %v747
      %v846 = vpop.permute.xlu0 %845
      %849 = vset.pattern.permute.xlu0 0
      %850 = vperm.xlu0 %849, %v748
      %v851 = vpop.permute.xlu0 %850
      %854 = vset.pattern.permute.xlu0 0
      %855 = vperm.xlu0 %854, %v749
      %v856 = vpop.permute.xlu0 %855
      %859 = vset.pattern.permute.xlu0 0
      %860 = vperm.xlu0 %859, %v750
      %v861 = vpop.permute.xlu0 %860
      %864 = vset.pattern.permute.xlu0 0
      %865 = vperm.xlu0 %864, %v751
      %v866 = vpop.permute.xlu0 %865
      %869 = vset.pattern.permute.xlu0 0
      %870 = vperm.xlu0 %869, %v752
      %v871 = vpop.permute.xlu0 %870
      %v874 = vsel %vm453, %v698, 0
      %v877 = vsel %vm453, %v699, 0
      %v880 = vsel %vm453, %v700, 0
      %v883 = vsel %vm453, %v701, 0
      %v886 = vsel %vm453, %v702, 0
      %v889 = vsel %vm453, %v703, 0
      %v892 = vsel %vm453, %v704, 0
      %v895 = vsel %vm453, %v705, 0
      %v898 = vsel %vm453, %v706, 0
      %v901 = vsel %vm453, %v707, 0
      %v904 = vsel %vm453, %v708, 0
      %v907 = vsel %vm453, %v709, 0
      %v910 = vsel %vm453, %v710, 0
      %v913 = vsel %vm453, %v711, 0
      %v916 = vsel %vm453, %v712, 0
      %v919 = vsel %vm453, %v713, 0
      %v922 = vsel %vm453, %v714, 0
      %v925 = vsel %vm453, %v715, 0
      %v928 = vsel %vm453, %v716, 0
      %v931 = vsel %vm453, %v717, 0
      %v934 = vsel %vm453, %v718, 0
      %v937 = vsel %vm453, %v719, 0
      %v940 = vsel %vm453, %v720, 0
      %v943 = vsel %vm453, %v721, 0
      %945 = vmatpush.msra.mxu0 0.0
      %946 = vmatpush.msra.mxu0 0.0
      %947 = vmatpush.msra.mxu0 0.0
      %948 = vmatpush.msra.mxu0 0.0
      %949 = vmatpush.msra.mxu0 0.0
      %950 = vmatpush.msra.mxu0 0.0
      %951 = vmatpush.msra.mxu0 0.0
      %952 = vmatpush.msra.mxu0 0.0
      %953 = vmatpush.msra.mxu0 0.0
      %954 = vmatpush.msra.mxu0 %v728
      %955 = vmatpush.msra.mxu0 %v727
      %956 = vmatpush.msra.mxu0 %v726
      %957 = vmatpush.msra.mxu0 %v725
      %958 = vmatpush.msra.mxu0 %v724
      %959 = vmatpush.msra.mxu0 %v723
      %960 = vmatpush.msra.mxu0 %v722
      %961 = vmatmul.f32.gmra.mxu0 %v874
      %v962 = vpop.f32.mrf.mxu0
      %v963 = vadd.f32 %v756, %v962
      %964 = vmatmul.f32.gmra.mxu0 %v877
      %v965 = vpop.f32.mrf.mxu0
      %v966 = vadd.f32 %v761, %v965
      %967 = vmatmul.f32.gmra.mxu0 %v880
      %v968 = vpop.f32.mrf.mxu0
      %v969 = vadd.f32 %v766, %v968
      %970 = vmatmul.f32.gmra.mxu0 %v883
      %v971 = vpop.f32.mrf.mxu0
      %v972 = vadd.f32 %v771, %v971
      %973 = vmatmul.f32.gmra.mxu0 %v886
      %v974 = vpop.f32.mrf.mxu0
      %v975 = vadd.f32 %v776, %v974
      %976 = vmatmul.f32.gmra.mxu0 %v889
      %v977 = vpop.f32.mrf.mxu0
      %v978 = vadd.f32 %v781, %v977
      %979 = vmatmul.f32.gmra.mxu0 %v892
      %v980 = vpop.f32.mrf.mxu0
      %v981 = vadd.f32 %v786, %v980
      %982 = vmatmul.f32.gmra.mxu0 %v895
      %v983 = vpop.f32.mrf.mxu0
      %v984 = vadd.f32 %v791, %v983
      %985 = vmatmul.f32.gmra.mxu0 %v898
      %v986 = vpop.f32.mrf.mxu0
      %v987 = vadd.f32 %v796, %v986
      %988 = vmatmul.f32.gmra.mxu0 %v901
      %v989 = vpop.f32.mrf.mxu0
      %v990 = vadd.f32 %v801, %v989
      %991 = vmatmul.f32.gmra.mxu0 %v904
      %v992 = vpop.f32.mrf.mxu0
      %v993 = vadd.f32 %v806, %v992
      %994 = vmatmul.f32.gmra.mxu0 %v907
      %v995 = vpop.f32.mrf.mxu0
      %v996 = vadd.f32 %v811, %v995
      %997 = vmatmul.f32.gmra.mxu0 %v910
      %v998 = vpop.f32.mrf.mxu0
      %v999 = vadd.f32 %v816, %v998
      %1000 = vmatmul.f32.gmra.mxu0 %v913
      %v1001 = vpop.f32.mrf.mxu0
      %v1002 = vadd.f32 %v821, %v1001
      %1003 = vmatmul.f32.gmra.mxu0 %v916
      %v1004 = vpop.f32.mrf.mxu0
      %v1005 = vadd.f32 %v826, %v1004
      %1006 = vmatmul.f32.gmra.mxu0 %v919
      %v1007 = vpop.f32.mrf.mxu0
      %v1008 = vadd.f32 %v831, %v1007
      %1009 = vmatmul.f32.gmra.mxu0 %v922
      %v1010 = vpop.f32.mrf.mxu0
      %v1011 = vadd.f32 %v836, %v1010
      %1012 = vmatmul.f32.gmra.mxu0 %v925
      %v1013 = vpop.f32.mrf.mxu0
      %v1014 = vadd.f32 %v841, %v1013
      %1015 = vmatmul.f32.gmra.mxu0 %v928
      %v1016 = vpop.f32.mrf.mxu0
      %v1017 = vadd.f32 %v846, %v1016
      %1018 = vmatmul.f32.gmra.mxu0 %v931
      %v1019 = vpop.f32.mrf.mxu0
      %v1020 = vadd.f32 %v851, %v1019
      %1021 = vmatmul.f32.gmra.mxu0 %v934
      %v1022 = vpop.f32.mrf.mxu0
      %v1023 = vadd.f32 %v856, %v1022
      %1024 = vmatmul.f32.gmra.mxu0 %v937
      %v1025 = vpop.f32.mrf.mxu0
      %v1026 = vadd.f32 %v861, %v1025
      %1027 = vmatmul.f32.gmra.mxu0 %v940
      %v1028 = vpop.f32.mrf.mxu0
      %v1029 = vadd.f32 %v866, %v1028
      %1030 = vmatmul.f32.gmra.mxu0 %v943
      %v1031 = vpop.f32.mrf.mxu0
      %v1032 = vadd.f32 %v871, %v1031
      %1033 = vdwg.mxu0
      %v1034 = vmax.f32 %v963, 0.0
      %v1035 = vmax.f32 %v966, 0.0
      %v1036 = vmax.f32 %v969, 0.0
      %v1037 = vmax.f32 %v972, 0.0
      %v1038 = vmax.f32 %v975, 0.0
      %v1039 = vmax.f32 %v978, 0.0
      %v1040 = vmax.f32 %v981, 0.0
      %v1041 = vmax.f32 %v984, 0.0
      %v1042 = vmax.f32 %v987, 0.0
      %v1043 = vmax.f32 %v990, 0.0
      %v1044 = vmax.f32 %v993, 0.0
      %v1045 = vmax.f32 %v996, 0.0
      %v1046 = vmax.f32 %v999, 0.0
      %v1047 = vmax.f32 %v1002, 0.0
      %v1048 = vmax.f32 %v1005, 0.0
      %v1049 = vmax.f32 %v1008, 0.0
      %v1050 = vmax.f32 %v1011, 0.0
      %v1051 = vmax.f32 %v1014, 0.0
      %v1052 = vmax.f32 %v1017, 0.0
      %v1053 = vmax.f32 %v1020, 0.0
      %v1054 = vmax.f32 %v1023, 0.0
      %v1055 = vmax.f32 %v1026, 0.0
      %v1056 = vmax.f32 %v1029, 0.0
      %v1057 = vmax.f32 %v1032, 0.0
      %1058 = vst [vmem:[%s389] sm:$0xff] %v1034
      %1059 = vst [vmem:[%s389 + $0x8] sm:$0xff] %v1035
      %1060 = vst [vmem:[%s389 + $0x10] sm:$0xff] %v1036
      %1061 = vst [vmem:[%s389 + $0x18] sm:$0xff] %v1037
      %1062 = vst [vmem:[%s389 + $0x20] sm:$0xff] %v1038
      %1063 = vst [vmem:[%s389 + $0x28] sm:$0xff] %v1039
      %1064 = vst [vmem:[%s389 + $0x30] sm:$0xff] %v1040
      %1065 = vst [vmem:[%s389 + $0x38] sm:$0xff] %v1041
      %1066 = vst [vmem:[%s389 + $0x40] sm:$0xff] %v1042
      %1067 = vst [vmem:[%s389 + $0x48] sm:$0xff] %v1043
      %1068 = vst [vmem:[%s389 + $0x50] sm:$0xff] %v1044
      %1069 = vst [vmem:[%s389 + $0x58] sm:$0xff] %v1045
      %1070 = vst [vmem:[%s389 + $0x60] sm:$0xff] %v1046
      %1071 = vst [vmem:[%s389 + $0x68] sm:$0xff] %v1047
      %1072 = vst [vmem:[%s389 + $0x70] sm:$0xff] %v1048
      %1073 = vst [vmem:[%s389 + $0x78] sm:$0xff] %v1049
      %1074 = vst [vmem:[%s389 + $0x80] sm:$0xff] %v1050
      %1075 = vst [vmem:[%s389 + $0x88] sm:$0xff] %v1051
      %1076 = vst [vmem:[%s389 + $0x90] sm:$0xff] %v1052
      %1077 = vst [vmem:[%s389 + $0x98] sm:$0xff] %v1053
      %1078 = vst [vmem:[%s389 + $0xa0] sm:$0xff] %v1054
      %1079 = vst [vmem:[%s389 + $0xa8] sm:$0xff] %v1055
      %1080 = vst [vmem:[%s389 + $0xb0] sm:$0xff] %v1056
      %1081 = vst [vmem:[%s389 + $0xb8] sm:$0xff] %v1057
      %p1082 = scmp.lt.s32.totalorder %s22, 1
      %s1083 = scalar_select %p1082, %s22, 1
      %s1084 = smul.addr %s1083, 24
      %s1085 = smul.addr %s1084, 8
      %s1086 = scalar_lea.vmem %s11, %s1085
      // Predicated region
      $region65: #{inception_c_forward.6} parent=63 // pred_check
        %p1087 = pneg %p276
      $region66: #{inception_c_forward.6} parent=63 // pred_check_branch
        %1089 = sbr.rel (%p1087) target = $region68
      $region67: #{inception_c_forward.6} parent=63 // pred_region
        _
      $region68: #{inception_c_forward.6} parent=63 // pred_fallthru
        _
    $region64: #{inception_c_forward.6} parent=5 // pred_fallthru
      _
    %p1090 = scmp.le.s32.totalorder 2, %s17
    // Predicated region
    $region69: #{inception_c_forward.6} parent=5 // pred_check
      %p1091 = pneg %p1090
    $region70: #{inception_c_forward.6} parent=5 // pred_check_branch
      %1093 = sbr.rel (%p1091) target = $region72
    $region71: #{inception_c_forward.6} parent=5 // pred_region
      %s1094 = ssub.s32 %s17, 2
      // Predicated region
      $region73: #{inception_c_forward.6} parent=71 // pred_check
        %p1095 = pneg %p282
      $region74: #{inception_c_forward.6} parent=71 // pred_check_branch
        %1097 = sbr.rel (%p1095) target = $region76
      $region75: #{inception_c_forward.6} parent=71 // pred_region
        %p1098 = scmp.lt.s32.totalorder %s23, 1
        %s1099 = scalar_select %p1098, %s23, 1
        %s1100 = smul.addr %s1099, 24
        %s1101 = smul.addr %s1100, 8
        %s1102 = scalar_lea.vmem %s11, %s1101
      $region76: #{inception_c_forward.6} parent=71 // pred_fallthru
        _
    $region72: #{inception_c_forward.6} parent=5 // pred_fallthru
      _
  $region6: #{inception_c_forward.6} parent=0 // loop_footer
    %s21 = sadd.s32 1, %s17
  $region7: #{inception_c_forward.6} parent=0 // loop_footer_branch
    %16 = sbr.rel target = $region3
  $region8: #{inception_c_forward.6} parent=0 // loop_exit
    _

</llo_original>
